<compile_context>
chip_gen: v7x
topology: tpu7x:2x2x1
jax: 0.10.0
libtpu: 0.0.40
codegen_flags: <defaults>
</compile_context>

<pallas_src>
import functools

import jax
import jax.numpy as jnp
from jax.experimental import pallas as pl
from jax.experimental.pallas import tpu as pltpu

BN_EPS = 1e-5


def _round_up(v, m):
    return ((v + m - 1) // m) * m


def _vmem_budget_bytes():
    """Generation-aware usable-VMEM budget (roughly half of physical, capped)."""
    try:
        cap = int(pltpu.get_tpu_info().vmem_capacity_bytes)
    except Exception:
        cap = 64 * 1024 * 1024  # conservative default: v7x per-core VMEM
    return max(16 * 1024 * 1024, min(cap // 2, 64 * 1024 * 1024))


# ---------------------------------------------------------------------------
# Kernels
# ---------------------------------------------------------------------------
def phi_bn_resident_kernel(x_ref,
                           w1_ref, b1_ref, g1_ref, be1_ref,
                           w2_ref, b2_ref, g2_ref, be2_ref,
                           w3_ref, b3_ref,
                           o_ref):
    """Whole-batch-in-VMEM single pass: L1 -> BN1 -> L2 -> BN2 -> L3 -> tanh."""
    batch = x_ref.shape[0]
    inv_b = 1.0 / float(batch)

    def bn_train(h, g_ref, be_ref):
        mean = jnp.sum(h, axis=0, keepdims=True) * inv_b
        var = jnp.maximum(jnp.sum(h * h, axis=0, keepdims=True) * inv_b - mean * mean, 0.0)
        scale = jax.lax.rsqrt(var + BN_EPS) * g_ref[...]
        return h * scale + (be_ref[...] - mean * scale)

    h1 = jnp.dot(x_ref[...], w1_ref[...], preferred_element_type=jnp.float32)
    h1 = jnp.maximum(h1 + b1_ref[...], 0.0)
    h1n = bn_train(h1, g1_ref, be1_ref).astype(jnp.bfloat16)

    h2 = jnp.dot(h1n, w2_ref[...], preferred_element_type=jnp.float32)
    h2 = jnp.maximum(h2 + b2_ref[...], 0.0)
    h2n = bn_train(h2, g2_ref, be2_ref).astype(jnp.bfloat16)

    h3 = jnp.dot(h2n, w3_ref[...], preferred_element_type=jnp.float32)
    o_ref[...] = jnp.tanh(h3 + b3_ref[...]).astype(o_ref.dtype)


def phi_bn_tiled_kernel(batch, n_pad,
                        x_ref,
                        w1_ref, b1_ref, g1_ref, be1_ref,
                        w2_ref, b2_ref, g2_ref, be2_ref,
                        w3_ref, b3_ref,
                        o_ref,
                        s1, q1, s2, q2, sc1, sh1, sc2, sh2):
    """Large-B fallback: 3 sequential sweeps over batch tiles for global BN stats."""
    p = pl.program_id(0)          # phase: 0 = layer-1 stats, 1 = layer-2 stats, 2 = output
    i = pl.program_id(1)          # batch tile (unused directly; drives the BlockSpecs)
    del i
    inv_b = 1.0 / float(batch)

    @pl.when((p == 0) & (pl.program_id(1) == 0))
    def _init_stats():
        s1[...] = jnp.zeros_like(s1)
        q1[...] = jnp.zeros_like(q1)
        s2[...] = jnp.zeros_like(s2)
        q2[...] = jnp.zeros_like(q2)

    # Layer 1 (recomputed each phase; weights stay resident, cheap vs spilling h1).
    h1 = jnp.dot(x_ref[...], w1_ref[...], preferred_element_type=jnp.float32)
    h1 = jnp.maximum(h1 + b1_ref[...], 0.0)

    @pl.when(p == 0)
    def _accum_stats1():
        s1[...] += jnp.sum(h1, axis=0, keepdims=True)
        q1[...] += jnp.sum(h1 * h1, axis=0, keepdims=True)

    @pl.when((p == 1) & (pl.program_id(1) == 0))
    def _finalize_bn1():
        s = s1[...]
        q = q1[...]
        if n_pad:  # exact pad-row correction: zero-padded rows contribute relu(b1)
            c1 = jnp.maximum(b1_ref[...], 0.0)
            s = s - float(n_pad) * c1
            q = q - float(n_pad) * (c1 * c1)
        mean = s * inv_b
        var = jnp.maximum(q * inv_b - mean * mean, 0.0)
        scale = jax.lax.rsqrt(var + BN_EPS) * g1_ref[...]
        sc1[...] = scale
        sh1[...] = be1_ref[...] - mean * scale

    @pl.when(p == 1)
    def _accum_stats2():
        h1n = (h1 * sc1[...] + sh1[...]).astype(jnp.bfloat16)
        h2 = jnp.dot(h1n, w2_ref[...], preferred_element_type=jnp.float32)
        h2 = jnp.maximum(h2 + b2_ref[...], 0.0)
        s2[...] += jnp.sum(h2, axis=0, keepdims=True)
        q2[...] += jnp.sum(h2 * h2, axis=0, keepdims=True)

    @pl.when((p == 2) & (pl.program_id(1) == 0))
    def _finalize_bn2():
        s = s2[...]
        q = q2[...]
        if n_pad:  # pad rows propagate to a constant layer-2 vector; subtract it exactly
            c1 = jnp.maximum(b1_ref[...], 0.0)
            c1n = (c1 * sc1[...] + sh1[...]).astype(jnp.bfloat16)
            c2 = jnp.dot(c1n, w2_ref[...], preferred_element_type=jnp.float32)
            c2 = jnp.maximum(c2 + b2_ref[...], 0.0)
            s = s - float(n_pad) * c2
            q = q - float(n_pad) * (c2 * c2)
        mean = s * inv_b
        var = jnp.maximum(q * inv_b - mean * mean, 0.0)
        scale = jax.lax.rsqrt(var + BN_EPS) * g2_ref[...]
        sc2[...] = scale
        sh2[...] = be2_ref[...] - mean * scale

    @pl.when(p == 2)
    def _write_output():
        h1n = (h1 * sc1[...] + sh1[...]).astype(jnp.bfloat16)
        h2 = jnp.dot(h1n, w2_ref[...], preferred_element_type=jnp.float32)
        h2 = jnp.maximum(h2 + b2_ref[...], 0.0)
        h2n = (h2 * sc2[...] + sh2[...]).astype(jnp.bfloat16)
        h3 = jnp.dot(h2n, w3_ref[...], preferred_element_type=jnp.float32)
        o_ref[...] = jnp.tanh(h3 + b3_ref[...]).astype(o_ref.dtype)


def phi_nobn_kernel(x_ref, w1_ref, b1_ref, w2_ref, b2_ref, w3_ref, b3_ref, o_ref):
    # batch == 1: the PyTorch module skips BatchNorm entirely.
    h = jnp.dot(x_ref[...], w1_ref[...], preferred_element_type=jnp.float32)
    h = jnp.maximum(h + b1_ref[...], 0.0)
    h = jnp.dot(h.astype(jnp.bfloat16), w2_ref[...], preferred_element_type=jnp.float32)
    h = jnp.maximum(h + b2_ref[...], 0.0)
    h = jnp.dot(h.astype(jnp.bfloat16), w3_ref[...], preferred_element_type=jnp.float32)
    o_ref[...] = jnp.tanh(h + b3_ref[...]).astype(o_ref.dtype)


# ---------------------------------------------------------------------------
# Wrapper
# ---------------------------------------------------------------------------
def phi_forward(x, params, *, block_b=1024, out_dtype=jnp.float32, force_tiled=False):
    """x: [B, x_dim] float32.  params: see init_phi_params (weights laid out [in, out])."""
    B, x_dim = x.shape
    h1_dim = params["w1"].shape[1]
    h2_dim = params["w2"].shape[1]
    d_out = params["w3"].shape[1]
    apply_bn = B > 1              # mirrors `if x.size(0) > 1` in the PyTorch forward

    # bf16 MXU operands; zero-pad the first-layer K dim to a lane-dense multiple of 128.
    k_pad = _round_up(x_dim, 128)
    x_p = x.astype(jnp.bfloat16)
    w1 = params["w1"].astype(jnp.bfloat16)
    if k_pad != x_dim:
        x_p = jnp.pad(x_p, ((0, 0), (0, k_pad - x_dim)))
        w1 = jnp.pad(w1, ((0, k_pad - x_dim), (0, 0)))
    w2 = params["w2"].astype(jnp.bfloat16)
    w3 = params["w3"].astype(jnp.bfloat16)
    b1, b2, b3 = params["b1"], params["b2"], params["b3"]
    g1, be1, g2, be2 = params["g1"], params["be1"], params["g2"], params["be2"]

    budget = _vmem_budget_bytes()
    vmem_spec = pl.BlockSpec(memory_space=pltpu.MemorySpace.VMEM)

    if not apply_bn:
        return pl.pallas_call(
            phi_nobn_kernel,
            out_shape=jax.ShapeDtypeStruct((B, d_out), out_dtype),
            in_specs=[vmem_spec] * 7,
            out_specs=vmem_spec,
            compiler_params=pltpu.CompilerParams(
                vmem_limit_bytes=min(budget, 32 * 1024 * 1024)),
        )(x_p, w1, b1, w2, b2, w3, b3)

    # ---- Resident single-pass fast path (whole batch in VMEM) -------------
    out_isz = jnp.dtype(out_dtype).itemsize
    weight_bytes = 2 * (k_pad * h1_dim + h1_dim * h2_dim + h2_dim * d_out) \
        + 4 * 8 * max(h1_dim, h2_dim, d_out)
    # Conservative per-row peak: x(bf16) + h (f32 value + f32 temp + bf16) per hidden
    # layer + output.
    per_row = k_pad * 2 + 10 * h1_dim + 10 * h2_dim + out_isz * d_out
    resident_bytes = B * per_row + weight_bytes + (2 << 20)

    if (not force_tiled) and resident_bytes <= budget:
        return pl.pallas_call(
            phi_bn_resident_kernel,
            out_shape=jax.ShapeDtypeStruct((B, d_out), out_dtype),
            in_specs=[vmem_spec] * 11,
            out_specs=vmem_spec,
            compiler_params=pltpu.CompilerParams(vmem_limit_bytes=budget),
        )(x_p, w1, b1, g1, be1, w2, b2, g2, be2, w3, b3)

    # ---- Tiled 3-phase fallback (very large B) -----------------------------
    # Batch tile: multiple of 256 rows (MXU height on v6e/v7x), large to amortize the
    # ~0.35 us per-grid-step overhead and keep DMAs big.
    tb = _round_up(min(block_b, _round_up(B, 256)), 256)
    nt = pl.cdiv(B, tb)
    b_padded = nt * tb
    n_pad = b_padded - B
    if n_pad:
        x_p = jnp.pad(x_p, ((0, n_pad), (0, 0)))

    full = lambda arr: pl.BlockSpec(arr.shape, lambda p, i: (0, 0))
    in_specs = [
        pl.BlockSpec((tb, k_pad), lambda p, i: (i, 0)),     # x: streamed per batch tile
        full(w1), full(b1), full(g1), full(be1),
        full(w2), full(b2), full(g2), full(be2),
        full(w3), full(b3),
    ]
    # Output is only written in phase 2; park the block on index 0 for earlier phases so
    # the stats-only sweeps cause no spurious HBM writebacks.
    out_specs = pl.BlockSpec((tb, d_out), lambda p, i: ((p // 2) * i, 0))

    out = pl.pallas_call(
        functools.partial(phi_bn_tiled_kernel, B, n_pad),
        out_shape=jax.ShapeDtypeStruct((b_padded, d_out), out_dtype),
        grid_spec=pltpu.PrefetchScalarGridSpec(
            num_scalar_prefetch=0,
            grid=(3, nt),
            in_specs=in_specs,
            out_specs=out_specs,
            scratch_shapes=[
                pltpu.VMEM((1, h1_dim), jnp.float32),   # sum   of h1
                pltpu.VMEM((1, h1_dim), jnp.float32),   # sumsq of h1
                pltpu.VMEM((1, h2_dim), jnp.float32),   # sum   of h2
                pltpu.VMEM((1, h2_dim), jnp.float32),   # sumsq of h2
                pltpu.VMEM((1, h1_dim), jnp.float32),   # BN1 scale
                pltpu.VMEM((1, h1_dim), jnp.float32),   # BN1 shift
                pltpu.VMEM((1, h2_dim), jnp.float32),   # BN2 scale
                pltpu.VMEM((1, h2_dim), jnp.float32),   # BN2 shift
            ],
        ),
        compiler_params=pltpu.CompilerParams(
            # Both axes 'arbitrary': BN statistics accumulate sequentially across batch
            # tiles, so neither axis can be megacore-parallel.
            dimension_semantics=("arbitrary", "arbitrary"),
            vmem_limit_bytes=min(budget, 32 * 1024 * 1024),
        ),
    )(x_p, w1, b1, g1, be1, w2, b2, g2, be2, w3, b3)

    return out[:B] if n_pad else out


# ---------------------------------------------------------------------------
# Params + pure-JAX reference
# ---------------------------------------------------------------------------
def init_phi_params(key, x_dim, network_dims=(256, 256, 256)):
    """Synthetic params with the same shapes as the nn.Module.

    nn.Linear stores weight as [out, in]; here weights are pre-transposed to [in, out]
    so the kernels run plain row-major MXU matmuls.
    """
    dims = [x_dim] + list(network_dims)
    keys = jax.random.split(key, 10)
    p = {}
    for i in range(3):
        w = jax.random.normal(keys[2 * i], (dims[i], dims[i + 1]), jnp.float32) / jnp.sqrt(dims[i])
        b = 0.01 * jax.random.normal(keys[2 * i + 1], (1, dims[i + 1]), jnp.float32)
        p[f"w{i + 1}"] = w
        p[f"b{i + 1}"] = b
    # BatchNorm affine params (only the first two layers' BN is ever applied).
    p["g1"] = 1.0 + 0.05 * jax.random.normal(keys[6], (1, dims[1]), jnp.float32)
    p["be1"] = 0.05 * jax.random.normal(keys[7], (1, dims[1]), jnp.float32)
    p["g2"] = 1.0 + 0.05 * jax.random.normal(keys[8], (1, dims[2]), jnp.float32)
    p["be2"] = 0.05 * jax.random.normal(keys[9], (1, dims[2]), jnp.float32)
    return p


def _bn_train_ref(h, gamma, beta):
    batch = h.shape[0]
    mean = jnp.sum(h, axis=0, keepdims=True) / batch
    var = jnp.maximum(jnp.sum(h * h, axis=0, keepdims=True) / batch - mean * mean, 0.0)
    scale = jax.lax.rsqrt(var + BN_EPS) * gamma
    return h * scale + (beta - mean * scale)


def phi_reference(x, params, apply_bn):
    """Pure-JAX reference using the same bf16-matmul / f32-accumulate recipe."""
    h = jnp.dot(x.astype(jnp.bfloat16), params["w1"].astype(jnp.bfloat16),
                preferred_element_type=jnp.float32) + params["b1"]
    h = jnp.maximum(h, 0.0)
    if apply_bn:
        h = _bn_train_ref(h, params["g1"], params["be1"])
    h = jnp.dot(h.astype(jnp.bfloat16), params["w2"].astype(jnp.bfloat16),
                preferred_element_type=jnp.float32) + params["b2"]
    h = jnp.maximum(h, 0.0)
    if apply_bn:
        h = _bn_train_ref(h, params["g2"], params["be2"])
    h = jnp.dot(h.astype(jnp.bfloat16), params["w3"].astype(jnp.bfloat16),
                preferred_element_type=jnp.float32) + params["b3"]
    return jnp.tanh(h)


if __name__ == "__main__":
    key = jax.random.PRNGKey(0)
    kx, kp, kx2 = jax.random.split(key, 3)

    X_DIM = 32
    NETWORK_DIMS = (256, 256, 256)   # matches the nn.Module default
    params = init_phi_params(kp, X_DIM, NETWORK_DIMS)

    # Case 1: typical batch -> VMEM-resident single-pass BN fast path.
    B = 512
    x = jax.random.normal(kx, (B, X_DIM), jnp.float32)
    out = jax.block_until_ready(phi_forward(x, params))
    ref = phi_reference(x, params, apply_bn=True)
    assert out.shape == (B, NETWORK_DIMS[-1])
    assert jnp.allclose(out, ref, atol=5e-3, rtol=5e-3), "mismatch vs reference (resident BN)"

    # Case 2: force the large-B tiled fallback (2 batch tiles, no padding).
    out_t = jax.block_until_ready(phi_forward(x, params, block_b=256, force_tiled=True))
    assert out_t.shape == (B, NETWORK_DIMS[-1])
    assert jnp.allclose(out_t, ref, atol=5e-3, rtol=5e-3), "mismatch vs reference (tiled BN)"

    # Case 3: ragged batch on the tiled fallback -> exercises the analytic pad correction.
    B2 = 200
    x2 = jax.random.normal(kx2, (B2, X_DIM), jnp.float32)
    out2 = jax.block_until_ready(phi_forward(x2, params, block_b=256, force_tiled=True))
    ref2 = phi_reference(x2, params, apply_bn=True)
    assert out2.shape == (B2, NETWORK_DIMS[-1])
    assert jnp.allclose(out2, ref2, atol=5e-3, rtol=5e-3), "mismatch vs reference (ragged tiled)"

    # Case 4: batch of 1 -> PyTorch skips BatchNorm; simple no-BN kernel.
    x3 = x[:1]
    out3 = jax.block_until_ready(phi_forward(x3, params))
    ref3 = phi_reference(x3, params, apply_bn=False)
    assert out3.shape == (1, NETWORK_DIMS[-1])
    assert jnp.allclose(out3, ref3, atol=5e-3, rtol=5e-3), "mismatch vs reference (no BN)"

    print("KERNEL_OK")
</pallas_src>

<mosaic_0001>
module attributes {stable_mosaic.version = 11 : i64} {
  func.func @phi_bn_resident_kernel(%arg0: memref<512x128xbf16, #tpu.memory_space<vmem>>, %arg1: memref<128x256xbf16, #tpu.memory_space<vmem>>, %arg2: memref<1x256xf32, #tpu.memory_space<vmem>>, %arg3: memref<1x256xf32, #tpu.memory_space<vmem>>, %arg4: memref<1x256xf32, #tpu.memory_space<vmem>>, %arg5: memref<256x256xbf16, #tpu.memory_space<vmem>>, %arg6: memref<1x256xf32, #tpu.memory_space<vmem>>, %arg7: memref<1x256xf32, #tpu.memory_space<vmem>>, %arg8: memref<1x256xf32, #tpu.memory_space<vmem>>, %arg9: memref<256x256xbf16, #tpu.memory_space<vmem>>, %arg10: memref<1x256xf32, #tpu.memory_space<vmem>>, %arg11: memref<512x256xf32, #tpu.memory_space<vmem>>) attributes {dimension_semantics = [], scalar_prefetch = 0 : i64, scratch_operands = 0 : i64, tpu.core_type = #tpu.core_type<tc>} {
    %c0 = arith.constant 0 : index
    %c0_0 = arith.constant 0 : index
    %0 = vector.load %arg0[%c0, %c0_0] : memref<512x128xbf16, #tpu.memory_space<vmem>>, vector<512x128xbf16>
    %c0_1 = arith.constant 0 : index
    %c0_2 = arith.constant 0 : index
    %1 = vector.load %arg1[%c0_1, %c0_2] : memref<128x256xbf16, #tpu.memory_space<vmem>>, vector<128x256xbf16>
    %cst = arith.constant dense<0.000000e+00> : vector<512x256xf32>
    %2 = tpu.matmul %0, %1, %cst {dimension_numbers = #tpu.dot_dimension_numbers<[1], [0], [0], [1], [0, 0, 1, 1], [], []>} : vector<512x128xbf16>, vector<128x256xbf16>, vector<512x256xf32> -> vector<512x256xf32>
    %c0_3 = arith.constant 0 : index
    %c0_4 = arith.constant 0 : index
    %3 = vector.load %arg2[%c0_3, %c0_4] : memref<1x256xf32, #tpu.memory_space<vmem>>, vector<1x256xf32>
    %4 = vector.broadcast %3 : vector<1x256xf32> to vector<512x256xf32>
    %5 = arith.addf %2, %4 : vector<512x256xf32>
    %cst_5 = arith.constant 0.000000e+00 : f32
    %6 = vector.broadcast %cst_5 : f32 to vector<512x256xf32>
    %7 = arith.maximumf %5, %6 : vector<512x256xf32>
    %cst_6 = arith.constant dense<0.000000e+00> : vector<256xf32>
    %8 = vector.multi_reduction <add>, %7, %cst_6 [0] : vector<512x256xf32> to vector<256xf32>
    %9 = vector.shape_cast %8 : vector<256xf32> to vector<1x256xf32>
    %cst_7 = arith.constant 0.001953125 : f32
    %10 = vector.broadcast %cst_7 : f32 to vector<1x256xf32>
    %11 = arith.mulf %9, %10 : vector<1x256xf32>
    %12 = arith.mulf %7, %7 : vector<512x256xf32>
    %cst_8 = arith.constant dense<0.000000e+00> : vector<256xf32>
    %13 = vector.multi_reduction <add>, %12, %cst_8 [0] : vector<512x256xf32> to vector<256xf32>
    %14 = vector.shape_cast %13 : vector<256xf32> to vector<1x256xf32>
    %cst_9 = arith.constant 0.001953125 : f32
    %15 = vector.broadcast %cst_9 : f32 to vector<1x256xf32>
    %16 = arith.mulf %14, %15 : vector<1x256xf32>
    %17 = arith.mulf %11, %11 : vector<1x256xf32>
    %18 = arith.subf %16, %17 : vector<1x256xf32>
    %cst_10 = arith.constant 0.000000e+00 : f32
    %19 = vector.broadcast %cst_10 : f32 to vector<1x256xf32>
    %20 = arith.maximumf %18, %19 : vector<1x256xf32>
    %cst_11 = arith.constant 9.99999974E-6 : f32
    %21 = vector.broadcast %cst_11 : f32 to vector<1x256xf32>
    %22 = arith.addf %20, %21 : vector<1x256xf32>
    %23 = math.rsqrt %22 : vector<1x256xf32>
    %c0_12 = arith.constant 0 : index
    %c0_13 = arith.constant 0 : index
    %24 = vector.load %arg3[%c0_12, %c0_13] : memref<1x256xf32, #tpu.memory_space<vmem>>, vector<1x256xf32>
    %25 = arith.mulf %23, %24 : vector<1x256xf32>
    %26 = vector.broadcast %25 : vector<1x256xf32> to vector<512x256xf32>
    %27 = arith.mulf %7, %26 : vector<512x256xf32>
    %c0_14 = arith.constant 0 : index
    %c0_15 = arith.constant 0 : index
    %28 = vector.load %arg4[%c0_14, %c0_15] : memref<1x256xf32, #tpu.memory_space<vmem>>, vector<1x256xf32>
    %29 = arith.mulf %11, %25 : vector<1x256xf32>
    %30 = arith.subf %28, %29 : vector<1x256xf32>
    %31 = vector.broadcast %30 : vector<1x256xf32> to vector<512x256xf32>
    %32 = arith.addf %27, %31 : vector<512x256xf32>
    %33 = arith.truncf %32 : vector<512x256xf32> to vector<512x256xbf16>
    %c0_16 = arith.constant 0 : index
    %c0_17 = arith.constant 0 : index
    %34 = vector.load %arg5[%c0_16, %c0_17] : memref<256x256xbf16, #tpu.memory_space<vmem>>, vector<256x256xbf16>
    %cst_18 = arith.constant dense<0.000000e+00> : vector<512x256xf32>
    %35 = tpu.matmul %33, %34, %cst_18 {dimension_numbers = #tpu.dot_dimension_numbers<[1], [0], [0], [1], [0, 0, 1, 1], [], []>} : vector<512x256xbf16>, vector<256x256xbf16>, vector<512x256xf32> -> vector<512x256xf32>
    %c0_19 = arith.constant 0 : index
    %c0_20 = arith.constant 0 : index
    %36 = vector.load %arg6[%c0_19, %c0_20] : memref<1x256xf32, #tpu.memory_space<vmem>>, vector<1x256xf32>
    %37 = vector.broadcast %36 : vector<1x256xf32> to vector<512x256xf32>
    %38 = arith.addf %35, %37 : vector<512x256xf32>
    %cst_21 = arith.constant 0.000000e+00 : f32
    %39 = vector.broadcast %cst_21 : f32 to vector<512x256xf32>
    %40 = arith.maximumf %38, %39 : vector<512x256xf32>
    %cst_22 = arith.constant dense<0.000000e+00> : vector<256xf32>
    %41 = vector.multi_reduction <add>, %40, %cst_22 [0] : vector<512x256xf32> to vector<256xf32>
    %42 = vector.shape_cast %41 : vector<256xf32> to vector<1x256xf32>
    %cst_23 = arith.constant 0.001953125 : f32
    %43 = vector.broadcast %cst_23 : f32 to vector<1x256xf32>
    %44 = arith.mulf %42, %43 : vector<1x256xf32>
    %45 = arith.mulf %40, %40 : vector<512x256xf32>
    %cst_24 = arith.constant dense<0.000000e+00> : vector<256xf32>
    %46 = vector.multi_reduction <add>, %45, %cst_24 [0] : vector<512x256xf32> to vector<256xf32>
    %47 = vector.shape_cast %46 : vector<256xf32> to vector<1x256xf32>
    %cst_25 = arith.constant 0.001953125 : f32
    %48 = vector.broadcast %cst_25 : f32 to vector<1x256xf32>
    %49 = arith.mulf %47, %48 : vector<1x256xf32>
    %50 = arith.mulf %44, %44 : vector<1x256xf32>
    %51 = arith.subf %49, %50 : vector<1x256xf32>
    %cst_26 = arith.constant 0.000000e+00 : f32
    %52 = vector.broadcast %cst_26 : f32 to vector<1x256xf32>
    %53 = arith.maximumf %51, %52 : vector<1x256xf32>
    %cst_27 = arith.constant 9.99999974E-6 : f32
    %54 = vector.broadcast %cst_27 : f32 to vector<1x256xf32>
    %55 = arith.addf %53, %54 : vector<1x256xf32>
    %56 = math.rsqrt %55 : vector<1x256xf32>
    %c0_28 = arith.constant 0 : index
    %c0_29 = arith.constant 0 : index
    %57 = vector.load %arg7[%c0_28, %c0_29] : memref<1x256xf32, #tpu.memory_space<vmem>>, vector<1x256xf32>
    %58 = arith.mulf %56, %57 : vector<1x256xf32>
    %59 = vector.broadcast %58 : vector<1x256xf32> to vector<512x256xf32>
    %60 = arith.mulf %40, %59 : vector<512x256xf32>
    %c0_30 = arith.constant 0 : index
    %c0_31 = arith.constant 0 : index
    %61 = vector.load %arg8[%c0_30, %c0_31] : memref<1x256xf32, #tpu.memory_space<vmem>>, vector<1x256xf32>
    %62 = arith.mulf %44, %58 : vector<1x256xf32>
    %63 = arith.subf %61, %62 : vector<1x256xf32>
    %64 = vector.broadcast %63 : vector<1x256xf32> to vector<512x256xf32>
    %65 = arith.addf %60, %64 : vector<512x256xf32>
    %66 = arith.truncf %65 : vector<512x256xf32> to vector<512x256xbf16>
    %c0_32 = arith.constant 0 : index
    %c0_33 = arith.constant 0 : index
    %67 = vector.load %arg9[%c0_32, %c0_33] : memref<256x256xbf16, #tpu.memory_space<vmem>>, vector<256x256xbf16>
    %cst_34 = arith.constant dense<0.000000e+00> : vector<512x256xf32>
    %68 = tpu.matmul %66, %67, %cst_34 {dimension_numbers = #tpu.dot_dimension_numbers<[1], [0], [0], [1], [0, 0, 1, 1], [], []>} : vector<512x256xbf16>, vector<256x256xbf16>, vector<512x256xf32> -> vector<512x256xf32>
    %c0_35 = arith.constant 0 : index
    %c0_36 = arith.constant 0 : index
    %69 = vector.load %arg10[%c0_35, %c0_36] : memref<1x256xf32, #tpu.memory_space<vmem>>, vector<1x256xf32>
    %70 = vector.broadcast %69 : vector<1x256xf32> to vector<512x256xf32>
    %71 = arith.addf %68, %70 : vector<512x256xf32>
    %72 = math.tanh %71 : vector<512x256xf32>
    %c0_37 = arith.constant 0 : index
    %c0_38 = arith.constant 0 : index
    %73 = vector.load %arg11[%c0_37, %c0_38] : memref<512x256xf32, #tpu.memory_space<vmem>>, vector<512x256xf32>
    tpu.vector_store %arg11[%c0_37, %c0_38], %72 {strides = array<i32>} : memref<512x256xf32, #tpu.memory_space<vmem>>, vector<512x256xf32>,
    return
  }
}

</mosaic_0001>

<llo_original>
// kernel: tpu_custom_call.1
$region0: #{tpu_custom_call.1}
  #allocation0 [shape = 'u32[]', space=smem, size = 0x4, offset = 0x4, fixed_abs, tag = 'smem constant byte address 0x4 - core index']
  #allocation1 [shape = 'u32[144,128]{1,0:T(1,128)}', space=vmem, size = 0x12000, scoped, tag = 'internal scratch']
  %s0 = inlined_call_operand.hbm [shape: bf16[512,128], index: 0, kind: input, shape index: {}]
  %s1 = inlined_call_operand.hbm [shape: bf16[128,256], index: 1, kind: input, shape index: {}]
  %s2 = inlined_call_operand.vmem [shape: f32[1,256], index: 2, kind: input, shape index: {}]
  %s3 = inlined_call_operand.vmem [shape: f32[1,256], index: 3, kind: input, shape index: {}]
  %s4 = inlined_call_operand.vmem [shape: f32[1,256], index: 4, kind: input, shape index: {}]
  %s5 = inlined_call_operand.hbm [shape: bf16[256,256], index: 5, kind: input, shape index: {}]
  %s6 = inlined_call_operand.vmem [shape: f32[1,256], index: 6, kind: input, shape index: {}]
  %s7 = inlined_call_operand.vmem [shape: f32[1,256], index: 7, kind: input, shape index: {}]
  %s8 = inlined_call_operand.vmem [shape: f32[1,256], index: 8, kind: input, shape index: {}]
  %s9 = inlined_call_operand.hbm [shape: bf16[256,256], index: 9, kind: input, shape index: {}]
  %s10 = inlined_call_operand.vmem [shape: f32[1,256], index: 10, kind: input, shape index: {}]
  %s11 = inlined_call_operand.hbm [shape: f32[512,256], index: 11, kind: output, shape index: {}]
  %s12 = sld [smem:[#allocation0]]
  $region70: #{tpu_custom_call.1} parent=0
    _
  %s14 = ssub.s32 1, %s12
  %s15 = scalar_select 0, %s14, %s12
  $region1: #{tpu_custom_call.1} parent=0
    #allocation2 [shape = 'u8[131072]{0}', space=vmem, size = 0x20000, scoped, tag = 'input window, operand 0, single buffered']
    #allocation3 [shape = 's32[1]{0}', space=sflag, size = 0x4, scoped, tag = 'scoped memory for tpu_custom_call.1']
    #allocation4 [shape = 's32[1]{0}', space=sflag, size = 0x4, scoped, tag = 'scoped memory for tpu_custom_call.1']
    #allocation5 [shape = 'u8[65536]{0}', space=vmem, size = 0x10000, scoped, tag = 'input window, operand 1, single buffered']
    #allocation6 [shape = 's32[1]{0}', space=sflag, size = 0x4, scoped, tag = 'scoped memory for tpu_custom_call.1']
    #allocation7 [shape = 'u8[131072]{0}', space=vmem, size = 0x20000, scoped, tag = 'input window, operand 5, single buffered']
    #allocation8 [shape = 'u8[131072]{0}', space=vmem, size = 0x20000, scoped, tag = 'input window, operand 9, single buffered']
    #allocation9 [shape = 's32[1]{0}', space=sflag, size = 0x4, scoped, tag = 'scoped memory for tpu_custom_call.1']
    #allocation10 [shape = 'u8[524288]{0}', space=vmem, size = 0x80000, scoped, tag = 'output window, operand 0, single buffered']
    %16 = vsyncpa [#allocation3], 0
    %17 = vsyncpa [#allocation6], 0
    %18 = vsyncpa [#allocation9], 0
    %19 = vsyncpa [#allocation4], 0
    // Predicated region
    $region2: #{tpu_custom_call.1} parent=1 // pred_check
      _
    $region3: #{tpu_custom_call.1} parent=1 // pred_check_branch
      %21 = sbr.rel (0) target = $region5
    $region4: #{tpu_custom_call.1} parent=1 // pred_region
      %s23 = ssub.s32 4096, 4096
      %24 = vsyncadd [#allocation3], %s23
      %s25 = sshll.u32 [#allocation2], 4
      %s26 = int_to_ptr.vmem [resolvable:$true] %s25
      %31 = dma.hbm_to_vmem [thread:$0]  %s0, 4096, %s26, [#allocation3], 64, 64, 4
    $region5: #{tpu_custom_call.1} parent=1 // pred_fallthru
      _
    // Predicated region
    $region6: #{tpu_custom_call.1} parent=1 // pred_check
      _
    $region7: #{tpu_custom_call.1} parent=1 // pred_check_branch
      %33 = sbr.rel (0) target = $region9
    $region8: #{tpu_custom_call.1} parent=1 // pred_region
      %s35 = ssub.s32 2048, 2048
      %36 = vsyncadd [#allocation6], %s35
      %s37 = sshll.u32 [#allocation5], 4
      %s38 = int_to_ptr.vmem [resolvable:$true] %s37
      %43 = dma.hbm_to_vmem [thread:$0]  %s1, 2048, %s38, [#allocation6], 128, 128, 8
    $region9: #{tpu_custom_call.1} parent=1 // pred_fallthru
      _
    // Predicated region
    $region10: #{tpu_custom_call.1} parent=1 // pred_check
      _
    $region11: #{tpu_custom_call.1} parent=1 // pred_check_branch
      %45 = sbr.rel (0) target = $region13
    $region12: #{tpu_custom_call.1} parent=1 // pred_region
      _
    $region13: #{tpu_custom_call.1} parent=1 // pred_fallthru
      _
    // Predicated region
    $region14: #{tpu_custom_call.1} parent=1 // pred_check
      _
    $region15: #{tpu_custom_call.1} parent=1 // pred_check_branch
      %47 = sbr.rel (0) target = $region17
    $region16: #{tpu_custom_call.1} parent=1 // pred_region
      _
    $region17: #{tpu_custom_call.1} parent=1 // pred_fallthru
      _
    // Predicated region
    $region18: #{tpu_custom_call.1} parent=1 // pred_check
      _
    $region19: #{tpu_custom_call.1} parent=1 // pred_check_branch
      %49 = sbr.rel (0) target = $region21
    $region20: #{tpu_custom_call.1} parent=1 // pred_region
      _
    $region21: #{tpu_custom_call.1} parent=1 // pred_fallthru
      _
    // Predicated region
    $region22: #{tpu_custom_call.1} parent=1 // pred_check
      _
    $region23: #{tpu_custom_call.1} parent=1 // pred_check_branch
      %51 = sbr.rel (0) target = $region25
    $region24: #{tpu_custom_call.1} parent=1 // pred_region
      %s53 = ssub.s32 4096, 4096
      %54 = vsyncadd [#allocation6], %s53
      %s55 = sshll.u32 [#allocation7], 4
      %s56 = int_to_ptr.vmem [resolvable:$true] %s55
      %61 = dma.hbm_to_vmem [thread:$0]  %s5, 4096, %s56, [#allocation6], 128, 128, 8
    $region25: #{tpu_custom_call.1} parent=1 // pred_fallthru
      _
    // Predicated region
    $region26: #{tpu_custom_call.1} parent=1 // pred_check
      _
    $region27: #{tpu_custom_call.1} parent=1 // pred_check_branch
      %63 = sbr.rel (0) target = $region29
    $region28: #{tpu_custom_call.1} parent=1 // pred_region
      _
    $region29: #{tpu_custom_call.1} parent=1 // pred_fallthru
      _
    // Predicated region
    $region30: #{tpu_custom_call.1} parent=1 // pred_check
      _
    $region31: #{tpu_custom_call.1} parent=1 // pred_check_branch
      %65 = sbr.rel (0) target = $region33
    $region32: #{tpu_custom_call.1} parent=1 // pred_region
      _
    $region33: #{tpu_custom_call.1} parent=1 // pred_fallthru
      _
    // Predicated region
    $region34: #{tpu_custom_call.1} parent=1 // pred_check
      _
    $region35: #{tpu_custom_call.1} parent=1 // pred_check_branch
      %67 = sbr.rel (0) target = $region37
    $region36: #{tpu_custom_call.1} parent=1 // pred_region
      _
    $region37: #{tpu_custom_call.1} parent=1 // pred_fallthru
      _
    // Predicated region
    $region38: #{tpu_custom_call.1} parent=1 // pred_check
      _
    $region39: #{tpu_custom_call.1} parent=1 // pred_check_branch
      %69 = sbr.rel (0) target = $region41
    $region40: #{tpu_custom_call.1} parent=1 // pred_region
      %s71 = ssub.s32 4096, 4096
      %72 = vsyncadd [#allocation9], %s71
      %s73 = sshll.u32 [#allocation8], 4
      %s74 = int_to_ptr.vmem [resolvable:$true] %s73
      %79 = dma.hbm_to_vmem [thread:$0]  %s9, 4096, %s74, [#allocation9], 128, 128, 8
    $region41: #{tpu_custom_call.1} parent=1 // pred_fallthru
      _
    // Predicated region
    $region42: #{tpu_custom_call.1} parent=1 // pred_check
      _
    $region43: #{tpu_custom_call.1} parent=1 // pred_check_branch
      %81 = sbr.rel (0) target = $region45
    $region44: #{tpu_custom_call.1} parent=1 // pred_region
      _
    $region45: #{tpu_custom_call.1} parent=1 // pred_fallthru
      _
    // Predicated region
    $region46: #{tpu_custom_call.1} parent=1 // pred_check
      _
    $region47: #{tpu_custom_call.1} parent=1 // pred_check_branch
      %83 = sbr.rel (0) target = $region49
    $region48: #{tpu_custom_call.1} parent=1 // pred_region
      %84 = dma.done [#allocation3], 4096
    $region49: #{tpu_custom_call.1} parent=1 // pred_fallthru
      _
    // Predicated region
    $region50: #{tpu_custom_call.1} parent=1 // pred_check
      _
    $region51: #{tpu_custom_call.1} parent=1 // pred_check_branch
      %86 = sbr.rel (0) target = $region53
    $region52: #{tpu_custom_call.1} parent=1 // pred_region
      %87 = dma.done [#allocation6], 2048
    $region53: #{tpu_custom_call.1} parent=1 // pred_fallthru
      _
    // Predicated region
    $region54: #{tpu_custom_call.1} parent=1 // pred_check
      _
    $region55: #{tpu_custom_call.1} parent=1 // pred_check_branch
      %89 = sbr.rel (0) target = $region57
    $region56: #{tpu_custom_call.1} parent=1 // pred_region
      %90 = dma.done [#allocation6], 4096
    $region57: #{tpu_custom_call.1} parent=1 // pred_fallthru
      _
    // Predicated region
    $region58: #{tpu_custom_call.1} parent=1 // pred_check
      _
    $region59: #{tpu_custom_call.1} parent=1 // pred_check_branch
      %92 = sbr.rel (0) target = $region61
    $region60: #{tpu_custom_call.1} parent=1 // pred_region
      %93 = dma.done [#allocation9], 4096
    $region61: #{tpu_custom_call.1} parent=1 // pred_fallthru
      _
    %v95 = vld [vmem:[#allocation2] sm:$0xf]
    %v96 = vld [vmem:[#allocation2 + $0x4] sm:$0xf]
    %v97 = vld [vmem:[#allocation2 + $0x8] sm:$0xf]
    %v98 = vld [vmem:[#allocation2 + $0xc] sm:$0xf]
    %v99 = vld [vmem:[#allocation2 + $0x10] sm:$0xf]
    %v100 = vld [vmem:[#allocation2 + $0x14] sm:$0xf]
    %v101 = vld [vmem:[#allocation2 + $0x18] sm:$0xf]
    %v102 = vld [vmem:[#allocation2 + $0x1c] sm:$0xf]
    %v103 = vld [vmem:[#allocation2 + $0x20] sm:$0xf]
    %v104 = vld [vmem:[#allocation2 + $0x24] sm:$0xf]
    %v105 = vld [vmem:[#allocation2 + $0x28] sm:$0xf]
    %v106 = vld [vmem:[#allocation2 + $0x2c] sm:$0xf]
    %v107 = vld [vmem:[#allocation2 + $0x30] sm:$0xf]
    %v108 = vld [vmem:[#allocation2 + $0x34] sm:$0xf]
    %v109 = vld [vmem:[#allocation2 + $0x38] sm:$0xf]
    %v110 = vld [vmem:[#allocation2 + $0x3c] sm:$0xf]
    %v111 = vld [vmem:[#allocation2 + $0x40] sm:$0xf]
    %v112 = vld [vmem:[#allocation2 + $0x44] sm:$0xf]
    %v113 = vld [vmem:[#allocation2 + $0x48] sm:$0xf]
    %v114 = vld [vmem:[#allocation2 + $0x4c] sm:$0xf]
    %v115 = vld [vmem:[#allocation2 + $0x50] sm:$0xf]
    %v116 = vld [vmem:[#allocation2 + $0x54] sm:$0xf]
    %v117 = vld [vmem:[#allocation2 + $0x58] sm:$0xf]
    %v118 = vld [vmem:[#allocation2 + $0x5c] sm:$0xf]
    %v119 = vld [vmem:[#allocation2 + $0x60] sm:$0xf]
    %v120 = vld [vmem:[#allocation2 + $0x64] sm:$0xf]
    %v121 = vld [vmem:[#allocation2 + $0x68] sm:$0xf]
    %v122 = vld [vmem:[#allocation2 + $0x6c] sm:$0xf]
    %v123 = vld [vmem:[#allocation2 + $0x70] sm:$0xf]
    %v124 = vld [vmem:[#allocation2 + $0x74] sm:$0xf]
    %v125 = vld [vmem:[#allocation2 + $0x78] sm:$0xf]
    %v126 = vld [vmem:[#allocation2 + $0x7c] sm:$0xf]
    %v127 = vld [vmem:[#allocation2 + $0x80] sm:$0xf]
    %v128 = vld [vmem:[#allocation2 + $0x84] sm:$0xf]
    %v129 = vld [vmem:[#allocation2 + $0x88] sm:$0xf]
    %v130 = vld [vmem:[#allocation2 + $0x8c] sm:$0xf]
    %v131 = vld [vmem:[#allocation2 + $0x90] sm:$0xf]
    %v132 = vld [vmem:[#allocation2 + $0x94] sm:$0xf]
    %v133 = vld [vmem:[#allocation2 + $0x98] sm:$0xf]
    %v134 = vld [vmem:[#allocation2 + $0x9c] sm:$0xf]
    %v135 = vld [vmem:[#allocation2 + $0xa0] sm:$0xf]
    %v136 = vld [vmem:[#allocation2 + $0xa4] sm:$0xf]
    %v137 = vld [vmem:[#allocation2 + $0xa8] sm:$0xf]
    %v138 = vld [vmem:[#allocation2 + $0xac] sm:$0xf]
    %v139 = vld [vmem:[#allocation2 + $0xb0] sm:$0xf]
    %v140 = vld [vmem:[#allocation2 + $0xb4] sm:$0xf]
    %v141 = vld [vmem:[#allocation2 + $0xb8] sm:$0xf]
    %v142 = vld [vmem:[#allocation2 + $0xbc] sm:$0xf]
    %v143 = vld [vmem:[#allocation2 + $0xc0] sm:$0xf]
    %v144 = vld [vmem:[#allocation2 + $0xc4] sm:$0xf]
    %v145 = vld [vmem:[#allocation2 + $0xc8] sm:$0xf]
    %v146 = vld [vmem:[#allocation2 + $0xcc] sm:$0xf]
    %v147 = vld [vmem:[#allocation2 + $0xd0] sm:$0xf]
    %v148 = vld [vmem:[#allocation2 + $0xd4] sm:$0xf]
    %v149 = vld [vmem:[#allocation2 + $0xd8] sm:$0xf]
    %v150 = vld [vmem:[#allocation2 + $0xdc] sm:$0xf]
    %v151 = vld [vmem:[#allocation2 + $0xe0] sm:$0xf]
    %v152 = vld [vmem:[#allocation2 + $0xe4] sm:$0xf]
    %v153 = vld [vmem:[#allocation2 + $0xe8] sm:$0xf]
    %v154 = vld [vmem:[#allocation2 + $0xec] sm:$0xf]
    %v155 = vld [vmem:[#allocation2 + $0xf0] sm:$0xf]
    %v156 = vld [vmem:[#allocation2 + $0xf4] sm:$0xf]
    %v157 = vld [vmem:[#allocation2 + $0xf8] sm:$0xf]
    %v158 = vld [vmem:[#allocation2 + $0xfc] sm:$0xf]
    %v159 = vld [vmem:[#allocation5] sm:$0xff]
    %v160 = vld [vmem:[#allocation5 + $0x8] sm:$0xff]
    %v161 = vld [vmem:[#allocation5 + $0x10] sm:$0xff]
    %v162 = vld [vmem:[#allocation5 + $0x18] sm:$0xff]
    %v163 = vld [vmem:[#allocation5 + $0x20] sm:$0xff]
    %v164 = vld [vmem:[#allocation5 + $0x28] sm:$0xff]
    %v165 = vld [vmem:[#allocation5 + $0x30] sm:$0xff]
    %v166 = vld [vmem:[#allocation5 + $0x38] sm:$0xff]
    %v167 = vld [vmem:[#allocation5 + $0x40] sm:$0xff]
    %v168 = vld [vmem:[#allocation5 + $0x48] sm:$0xff]
    %v169 = vld [vmem:[#allocation5 + $0x50] sm:$0xff]
    %v170 = vld [vmem:[#allocation5 + $0x58] sm:$0xff]
    %v171 = vld [vmem:[#allocation5 + $0x60] sm:$0xff]
    %v172 = vld [vmem:[#allocation5 + $0x68] sm:$0xff]
    %v173 = vld [vmem:[#allocation5 + $0x70] sm:$0xff]
    %v174 = vld [vmem:[#allocation5 + $0x78] sm:$0xff]
    %v175 = vld [vmem:[%s2] sm:$0x3]
    %v177 = vlaneseq
    %v178 = vshrl.u32 %v177, 7
    %v179 = vsub.s32 0, %v178
    %v180 = vrot.slane %v175, %v179
    %v181 = vlaneseq
    %v182 = vshrl.u32 %v181, 7
    %v183 = vsub.s32 1, %v182
    %v184 = vrot.slane %v175, %v183
    %v251 = vunpack.c.l.b16 %v95
    %v252 = vunpack.c.l.b16 %v96
    %v253 = vunpack.c.l.b16 %v97
    %v254 = vunpack.c.l.b16 %v98
    %v255 = vunpack.c.l.b16 %v99
    %v256 = vunpack.c.l.b16 %v100
    %v257 = vunpack.c.l.b16 %v101
    %v258 = vunpack.c.l.b16 %v102
    %v259 = vunpack.c.l.b16 %v103
    %v260 = vunpack.c.l.b16 %v104
    %v261 = vunpack.c.l.b16 %v105
    %v262 = vunpack.c.l.b16 %v106
    %v263 = vunpack.c.l.b16 %v107
    %v264 = vunpack.c.l.b16 %v108
    %v265 = vunpack.c.l.b16 %v109
    %v266 = vunpack.c.l.b16 %v110
    %v267 = vunpack.c.l.b16 %v111
    %v268 = vunpack.c.l.b16 %v112
    %v269 = vunpack.c.l.b16 %v113
    %v270 = vunpack.c.l.b16 %v114
    %v271 = vunpack.c.l.b16 %v115
    %v272 = vunpack.c.l.b16 %v116
    %v273 = vunpack.c.l.b16 %v117
    %v274 = vunpack.c.l.b16 %v118
    %v275 = vunpack.c.l.b16 %v119
    %v276 = vunpack.c.l.b16 %v120
    %v277 = vunpack.c.l.b16 %v121
    %v278 = vunpack.c.l.b16 %v122
    %v279 = vunpack.c.l.b16 %v123
    %v280 = vunpack.c.l.b16 %v124
    %v281 = vunpack.c.l.b16 %v125
    %v282 = vunpack.c.l.b16 %v126
    %v283 = vunpack.c.l.b16 %v127
    %v284 = vunpack.c.l.b16 %v128
    %v285 = vunpack.c.l.b16 %v129
    %v286 = vunpack.c.l.b16 %v130
    %v287 = vunpack.c.l.b16 %v131
    %v288 = vunpack.c.l.b16 %v132
    %v289 = vunpack.c.l.b16 %v133
    %v290 = vunpack.c.l.b16 %v134
    %v291 = vunpack.c.l.b16 %v135
    %v292 = vunpack.c.l.b16 %v136
    %v293 = vunpack.c.l.b16 %v137
    %v294 = vunpack.c.l.b16 %v138
    %v295 = vunpack.c.l.b16 %v139
    %v296 = vunpack.c.l.b16 %v140
    %v297 = vunpack.c.l.b16 %v141
    %v298 = vunpack.c.l.b16 %v142
    %v299 = vunpack.c.l.b16 %v143
    %v300 = vunpack.c.l.b16 %v144
    %v301 = vunpack.c.l.b16 %v145
    %v302 = vunpack.c.l.b16 %v146
    %v303 = vunpack.c.l.b16 %v147
    %v304 = vunpack.c.l.b16 %v148
    %v305 = vunpack.c.l.b16 %v149
    %v306 = vunpack.c.l.b16 %v150
    %v307 = vunpack.c.l.b16 %v151
    %v308 = vunpack.c.l.b16 %v152
    %v309 = vunpack.c.l.b16 %v153
    %v310 = vunpack.c.l.b16 %v154
    %v311 = vunpack.c.l.b16 %v155
    %v312 = vunpack.c.l.b16 %v156
    %v313 = vunpack.c.l.b16 %v157
    %v314 = vunpack.c.l.b16 %v158
    %v315 = vpack.c.b16 %v252, %v251
    %v316 = vpack.c.b16 %v254, %v253
    %v317 = vpack.c.b16 %v256, %v255
    %v318 = vpack.c.b16 %v258, %v257
    %v319 = vpack.c.b16 %v260, %v259
    %v320 = vpack.c.b16 %v262, %v261
    %v321 = vpack.c.b16 %v264, %v263
    %v322 = vpack.c.b16 %v266, %v265
    %v323 = vpack.c.b16 %v268, %v267
    %v324 = vpack.c.b16 %v270, %v269
    %v325 = vpack.c.b16 %v272, %v271
    %v326 = vpack.c.b16 %v274, %v273
    %v327 = vpack.c.b16 %v276, %v275
    %v328 = vpack.c.b16 %v278, %v277
    %v329 = vpack.c.b16 %v280, %v279
    %v330 = vpack.c.b16 %v282, %v281
    %v331 = vpack.c.b16 %v284, %v283
    %v332 = vpack.c.b16 %v286, %v285
    %v333 = vpack.c.b16 %v288, %v287
    %v334 = vpack.c.b16 %v290, %v289
    %v335 = vpack.c.b16 %v292, %v291
    %v336 = vpack.c.b16 %v294, %v293
    %v337 = vpack.c.b16 %v296, %v295
    %v338 = vpack.c.b16 %v298, %v297
    %v339 = vpack.c.b16 %v300, %v299
    %v340 = vpack.c.b16 %v302, %v301
    %v341 = vpack.c.b16 %v304, %v303
    %v342 = vpack.c.b16 %v306, %v305
    %v343 = vpack.c.b16 %v308, %v307
    %v344 = vpack.c.b16 %v310, %v309
    %v345 = vpack.c.b16 %v312, %v311
    %v346 = vpack.c.b16 %v314, %v313
    %v395 = vunpack.c.l.b16 %v159
    %v396 = vunpack.c.h.b16 %v159
    %v397 = vunpack.c.l.b16 %v160
    %v398 = vunpack.c.h.b16 %v160
    %v399 = vunpack.c.l.b16 %v161
    %v400 = vunpack.c.h.b16 %v161
    %v401 = vunpack.c.l.b16 %v162
    %v402 = vunpack.c.h.b16 %v162
    %v403 = vunpack.c.l.b16 %v163
    %v404 = vunpack.c.h.b16 %v163
    %v405 = vunpack.c.l.b16 %v164
    %v406 = vunpack.c.h.b16 %v164
    %v407 = vunpack.c.l.b16 %v165
    %v408 = vunpack.c.h.b16 %v165
    %v409 = vunpack.c.l.b16 %v166
    %v410 = vunpack.c.h.b16 %v166
    %v411 = vunpack.c.l.b16 %v167
    %v412 = vunpack.c.h.b16 %v167
    %v413 = vunpack.c.l.b16 %v168
    %v414 = vunpack.c.h.b16 %v168
    %v415 = vunpack.c.l.b16 %v169
    %v416 = vunpack.c.h.b16 %v169
    %v417 = vunpack.c.l.b16 %v170
    %v418 = vunpack.c.h.b16 %v170
    %v419 = vunpack.c.l.b16 %v171
    %v420 = vunpack.c.h.b16 %v171
    %v421 = vunpack.c.l.b16 %v172
    %v422 = vunpack.c.h.b16 %v172
    %v423 = vunpack.c.l.b16 %v173
    %v424 = vunpack.c.h.b16 %v173
    %v425 = vunpack.c.l.b16 %v174
    %v426 = vunpack.c.h.b16 %v174
    %v427 = vpack.c.b16 %v397, %v395
    %v428 = vpack.c.b16 %v398, %v396
    %v429 = vpack.c.b16 %v401, %v399
    %v430 = vpack.c.b16 %v402, %v400
    %v431 = vpack.c.b16 %v405, %v403
    %v432 = vpack.c.b16 %v406, %v404
    %v433 = vpack.c.b16 %v409, %v407
    %v434 = vpack.c.b16 %v410, %v408
    %v435 = vpack.c.b16 %v413, %v411
    %v436 = vpack.c.b16 %v414, %v412
    %v437 = vpack.c.b16 %v417, %v415
    %v438 = vpack.c.b16 %v418, %v416
    %v439 = vpack.c.b16 %v421, %v419
    %v440 = vpack.c.b16 %v422, %v420
    %v441 = vpack.c.b16 %v425, %v423
    %v442 = vpack.c.b16 %v426, %v424
    %459 = vmatprep.subr.bf16.mxu0 %v428
    %460 = vmatpush1.bf16.msra.mxu0 %v427
    %461 = vmatprep.subr.bf16.mxu0 %v430
    %462 = vmatpush1.bf16.msra.mxu0 %v429
    %463 = vmatprep.subr.bf16.mxu0 %v432
    %464 = vmatpush1.bf16.msra.mxu0 %v431
    %465 = vmatprep.subr.bf16.mxu0 %v434
    %466 = vmatpush1.bf16.msra.mxu0 %v433
    %467 = vmatprep.subr.bf16.mxu0 %v436
    %468 = vmatpush1.bf16.msra.mxu0 %v435
    %469 = vmatprep.subr.bf16.mxu0 %v438
    %470 = vmatpush1.bf16.msra.mxu0 %v437
    %471 = vmatprep.subr.bf16.mxu0 %v440
    %472 = vmatpush1.bf16.msra.mxu0 %v439
    %473 = vmatprep.subr.bf16.mxu0 %v442
    %474 = vmatpush1.bf16.msra.mxu0 %v441
    %475 = vmatprep.subr.bf16.mxu0 0
    %476 = vmatpush1.bf16.msra.mxu0 0
    %477 = vmatprep.subr.bf16.mxu0 0
    %478 = vmatpush1.bf16.msra.mxu0 0
    %479 = vmatprep.subr.bf16.mxu0 0
    %480 = vmatpush1.bf16.msra.mxu0 0
    %481 = vmatprep.subr.bf16.mxu0 0
    %482 = vmatpush1.bf16.msra.mxu0 0
    %483 = vmatprep.subr.bf16.mxu0 0
    %484 = vmatpush1.bf16.msra.mxu0 0
    %485 = vmatprep.subr.bf16.mxu0 0
    %486 = vmatpush1.bf16.msra.mxu0 0
    %487 = vmatprep.subr.bf16.mxu0 0
    %488 = vmatpush1.bf16.msra.mxu0 0
    %489 = vmatprep.subr.bf16.mxu0 0
    %490 = vmatpush1.bf16.msra.mxu0 0
    %491 = vmatprep.mubr.bf16.mxu0 0
    %492 = vmatmul.mubr.bf16.gmra.mrb[0].mxu0 %v315
    %v493 = vpop.f32.mrb[0].mxu0
    %v494 = vadd.f32 %v180, %v493
    %v495 = vpop.f32.mrb[0].mxu0
    %v496 = vadd.f32 %v184, %v495
    %v497 = vpop.f32.mrb[0].mxu0
    %v498 = vadd.f32 %v180, %v497
    %v499 = vpop.f32.mrb[0].mxu0
    %v500 = vadd.f32 %v184, %v499
    %501 = vmatprep.mubr.bf16.mxu0 0
    %502 = vmatmul.mubr.bf16.gmra.mrb[0].mxu0 %v316
    %v503 = vpop.f32.mrb[0].mxu0
    %v504 = vadd.f32 %v180, %v503
    %v505 = vpop.f32.mrb[0].mxu0
    %v506 = vadd.f32 %v184, %v505
    %v507 = vpop.f32.mrb[0].mxu0
    %v508 = vadd.f32 %v180, %v507
    %v509 = vpop.f32.mrb[0].mxu0
    %v510 = vadd.f32 %v184, %v509
    %511 = vmatprep.mubr.bf16.mxu0 0
    %512 = vmatmul.mubr.bf16.gmra.mrb[0].mxu0 %v317
    %v513 = vpop.f32.mrb[0].mxu0
    %v514 = vadd.f32 %v180, %v513
    %v515 = vpop.f32.mrb[0].mxu0
    %v516 = vadd.f32 %v184, %v515
    %v517 = vpop.f32.mrb[0].mxu0
    %v518 = vadd.f32 %v180, %v517
    %v519 = vpop.f32.mrb[0].mxu0
    %v520 = vadd.f32 %v184, %v519
    %521 = vmatprep.mubr.bf16.mxu0 0
    %522 = vmatmul.mubr.bf16.gmra.mrb[0].mxu0 %v318
    %v523 = vpop.f32.mrb[0].mxu0
    %v524 = vadd.f32 %v180, %v523
    %v525 = vpop.f32.mrb[0].mxu0
    %v526 = vadd.f32 %v184, %v525
    %v527 = vpop.f32.mrb[0].mxu0
    %v528 = vadd.f32 %v180, %v527
    %v529 = vpop.f32.mrb[0].mxu0
    %v530 = vadd.f32 %v184, %v529
    %531 = vmatprep.mubr.bf16.mxu0 0
    %532 = vmatmul.mubr.bf16.gmra.mrb[0].mxu0 %v319
    %v533 = vpop.f32.mrb[0].mxu0
    %v534 = vadd.f32 %v180, %v533
    %v535 = vpop.f32.mrb[0].mxu0
    %v536 = vadd.f32 %v184, %v535
    %v537 = vpop.f32.mrb[0].mxu0
    %v538 = vadd.f32 %v180, %v537
    %v539 = vpop.f32.mrb[0].mxu0
    %v540 = vadd.f32 %v184, %v539
    %541 = vmatprep.mubr.bf16.mxu0 0
    %542 = vmatmul.mubr.bf16.gmra.mrb[0].mxu0 %v320
    %v543 = vpop.f32.mrb[0].mxu0
    %v544 = vadd.f32 %v180, %v543
    %v545 = vpop.f32.mrb[0].mxu0
    %v546 = vadd.f32 %v184, %v545
    %v547 = vpop.f32.mrb[0].mxu0
    %v548 = vadd.f32 %v180, %v547
    %v549 = vpop.f32.mrb[0].mxu0
    %v550 = vadd.f32 %v184, %v549
    %551 = vmatprep.mubr.bf16.mxu0 0
    %552 = vmatmul.mubr.bf16.gmra.mrb[0].mxu0 %v321
    %v553 = vpop.f32.mrb[0].mxu0
    %v554 = vadd.f32 %v180, %v553
    %v555 = vpop.f32.mrb[0].mxu0
    %v556 = vadd.f32 %v184, %v555
    %v557 = vpop.f32.mrb[0].mxu0
    %v558 = vadd.f32 %v180, %v557
    %v559 = vpop.f32.mrb[0].mxu0
    %v560 = vadd.f32 %v184, %v559
    %561 = vmatprep.mubr.bf16.mxu0 0
    %562 = vmatmul.mubr.bf16.gmra.mrb[0].mxu0 %v322
    %v563 = vpop.f32.mrb[0].mxu0
    %v564 = vadd.f32 %v180, %v563
    %v565 = vpop.f32.mrb[0].mxu0
    %v566 = vadd.f32 %v184, %v565
    %v567 = vpop.f32.mrb[0].mxu0
    %v568 = vadd.f32 %v180, %v567
    %v569 = vpop.f32.mrb[0].mxu0
    %v570 = vadd.f32 %v184, %v569
    %571 = vmatprep.mubr.bf16.mxu0 0
    %572 = vmatmul.mubr.bf16.gmra.mrb[0].mxu0 %v323
    %v573 = vpop.f32.mrb[0].mxu0
    %v574 = vadd.f32 %v180, %v573
    %v575 = vpop.f32.mrb[0].mxu0
    %v576 = vadd.f32 %v184, %v575
    %v577 = vpop.f32.mrb[0].mxu0
    %v578 = vadd.f32 %v180, %v577
    %v579 = vpop.f32.mrb[0].mxu0
    %v580 = vadd.f32 %v184, %v579
    %581 = vmatprep.mubr.bf16.mxu0 0
    %582 = vmatmul.mubr.bf16.gmra.mrb[0].mxu0 %v324
    %v583 = vpop.f32.mrb[0].mxu0
    %v584 = vadd.f32 %v180, %v583
    %v585 = vpop.f32.mrb[0].mxu0
    %v586 = vadd.f32 %v184, %v585
    %v587 = vpop.f32.mrb[0].mxu0
    %v588 = vadd.f32 %v180, %v587
    %v589 = vpop.f32.mrb[0].mxu0
    %v590 = vadd.f32 %v184, %v589
    %591 = vmatprep.mubr.bf16.mxu0 0
    %592 = vmatmul.mubr.bf16.gmra.mrb[0].mxu0 %v325
    %v593 = vpop.f32.mrb[0].mxu0
    %v594 = vadd.f32 %v180, %v593
    %v595 = vpop.f32.mrb[0].mxu0
    %v596 = vadd.f32 %v184, %v595
    %v597 = vpop.f32.mrb[0].mxu0
    %v598 = vadd.f32 %v180, %v597
    %v599 = vpop.f32.mrb[0].mxu0
    %v600 = vadd.f32 %v184, %v599
    %601 = vmatprep.mubr.bf16.mxu0 0
    %602 = vmatmul.mubr.bf16.gmra.mrb[0].mxu0 %v326
    %v603 = vpop.f32.mrb[0].mxu0
    %v604 = vadd.f32 %v180, %v603
    %v605 = vpop.f32.mrb[0].mxu0
    %v606 = vadd.f32 %v184, %v605
    %v607 = vpop.f32.mrb[0].mxu0
    %v608 = vadd.f32 %v180, %v607
    %v609 = vpop.f32.mrb[0].mxu0
    %v610 = vadd.f32 %v184, %v609
    %611 = vmatprep.mubr.bf16.mxu0 0
    %612 = vmatmul.mubr.bf16.gmra.mrb[0].mxu0 %v327
    %v613 = vpop.f32.mrb[0].mxu0
    %v614 = vadd.f32 %v180, %v613
    %v615 = vpop.f32.mrb[0].mxu0
    %v616 = vadd.f32 %v184, %v615
    %v617 = vpop.f32.mrb[0].mxu0
    %v618 = vadd.f32 %v180, %v617
    %v619 = vpop.f32.mrb[0].mxu0
    %v620 = vadd.f32 %v184, %v619
    %621 = vmatprep.mubr.bf16.mxu0 0
    %622 = vmatmul.mubr.bf16.gmra.mrb[0].mxu0 %v328
    %v623 = vpop.f32.mrb[0].mxu0
    %v624 = vadd.f32 %v180, %v623
    %v625 = vpop.f32.mrb[0].mxu0
    %v626 = vadd.f32 %v184, %v625
    %v627 = vpop.f32.mrb[0].mxu0
    %v628 = vadd.f32 %v180, %v627
    %v629 = vpop.f32.mrb[0].mxu0
    %v630 = vadd.f32 %v184, %v629
    %631 = vmatprep.mubr.bf16.mxu0 0
    %632 = vmatmul.mubr.bf16.gmra.mrb[0].mxu0 %v329
    %v633 = vpop.f32.mrb[0].mxu0
    %v634 = vadd.f32 %v180, %v633
    %v635 = vpop.f32.mrb[0].mxu0
    %v636 = vadd.f32 %v184, %v635
    %v637 = vpop.f32.mrb[0].mxu0
    %v638 = vadd.f32 %v180, %v637
    %v639 = vpop.f32.mrb[0].mxu0
    %v640 = vadd.f32 %v184, %v639
    %641 = vmatprep.mubr.bf16.mxu0 0
    %642 = vmatmul.mubr.bf16.gmra.mrb[0].mxu0 %v330
    %v643 = vpop.f32.mrb[0].mxu0
    %v644 = vadd.f32 %v180, %v643
    %v645 = vpop.f32.mrb[0].mxu0
    %v646 = vadd.f32 %v184, %v645
    %v647 = vpop.f32.mrb[0].mxu0
    %v648 = vadd.f32 %v180, %v647
    %v649 = vpop.f32.mrb[0].mxu0
    %v650 = vadd.f32 %v184, %v649
    %651 = vmatprep.mubr.bf16.mxu0 0
    %652 = vmatmul.mubr.bf16.gmra.mrb[0].mxu0 %v331
    %v653 = vpop.f32.mrb[0].mxu0
    %v654 = vadd.f32 %v180, %v653
    %v655 = vpop.f32.mrb[0].mxu0
    %v656 = vadd.f32 %v184, %v655
    %v657 = vpop.f32.mrb[0].mxu0
    %v658 = vadd.f32 %v180, %v657
    %v659 = vpop.f32.mrb[0].mxu0
    %v660 = vadd.f32 %v184, %v659
    %661 = vmatprep.mubr.bf16.mxu0 0
    %662 = vmatmul.mubr.bf16.gmra.mrb[0].mxu0 %v332
    %v663 = vpop.f32.mrb[0].mxu0
    %v664 = vadd.f32 %v180, %v663
    %v665 = vpop.f32.mrb[0].mxu0
    %v666 = vadd.f32 %v184, %v665
    %v667 = vpop.f32.mrb[0].mxu0
    %v668 = vadd.f32 %v180, %v667
    %v669 = vpop.f32.mrb[0].mxu0
    %v670 = vadd.f32 %v184, %v669
    %671 = vmatprep.mubr.bf16.mxu0 0
    %672 = vmatmul.mubr.bf16.gmra.mrb[0].mxu0 %v333
    %v673 = vpop.f32.mrb[0].mxu0
    %v674 = vadd.f32 %v180, %v673
    %v675 = vpop.f32.mrb[0].mxu0
    %v676 = vadd.f32 %v184, %v675
    %v677 = vpop.f32.mrb[0].mxu0
    %v678 = vadd.f32 %v180, %v677
    %v679 = vpop.f32.mrb[0].mxu0
    %v680 = vadd.f32 %v184, %v679
    %681 = vmatprep.mubr.bf16.mxu0 0
    %682 = vmatmul.mubr.bf16.gmra.mrb[0].mxu0 %v334
    %v683 = vpop.f32.mrb[0].mxu0
    %v684 = vadd.f32 %v180, %v683
    %v685 = vpop.f32.mrb[0].mxu0
    %v686 = vadd.f32 %v184, %v685
    %v687 = vpop.f32.mrb[0].mxu0
    %v688 = vadd.f32 %v180, %v687
    %v689 = vpop.f32.mrb[0].mxu0
    %v690 = vadd.f32 %v184, %v689
    %691 = vmatprep.mubr.bf16.mxu0 0
    %692 = vmatmul.mubr.bf16.gmra.mrb[0].mxu0 %v335
    %v693 = vpop.f32.mrb[0].mxu0
    %v694 = vadd.f32 %v180, %v693
    %v695 = vpop.f32.mrb[0].mxu0
    %v696 = vadd.f32 %v184, %v695
    %v697 = vpop.f32.mrb[0].mxu0
    %v698 = vadd.f32 %v180, %v697
    %v699 = vpop.f32.mrb[0].mxu0
    %v700 = vadd.f32 %v184, %v699
    %701 = vmatprep.mubr.bf16.mxu0 0
    %702 = vmatmul.mubr.bf16.gmra.mrb[0].mxu0 %v336
    %v703 = vpop.f32.mrb[0].mxu0
    %v704 = vadd.f32 %v180, %v703
    %v705 = vpop.f32.mrb[0].mxu0
    %v706 = vadd.f32 %v184, %v705
    %v707 = vpop.f32.mrb[0].mxu0
    %v708 = vadd.f32 %v180, %v707
    %v709 = vpop.f32.mrb[0].mxu0
    %v710 = vadd.f32 %v184, %v709
    %711 = vmatprep.mubr.bf16.mxu0 0
    %712 = vmatmul.mubr.bf16.gmra.mrb[0].mxu0 %v337
    %v713 = vpop.f32.mrb[0].mxu0
    %v714 = vadd.f32 %v180, %v713
    %v715 = vpop.f32.mrb[0].mxu0
    %v716 = vadd.f32 %v184, %v715
    %v717 = vpop.f32.mrb[0].mxu0
    %v718 = vadd.f32 %v180, %v717
    %v719 = vpop.f32.mrb[0].mxu0
    %v720 = vadd.f32 %v184, %v719
    %721 = vmatprep.mubr.bf16.mxu0 0
    %722 = vmatmul.mubr.bf16.gmra.mrb[0].mxu0 %v338
    %v723 = vpop.f32.mrb[0].mxu0
    %v724 = vadd.f32 %v180, %v723
    %v725 = vpop.f32.mrb[0].mxu0
    %v726 = vadd.f32 %v184, %v725
    %v727 = vpop.f32.mrb[0].mxu0
    %v728 = vadd.f32 %v180, %v727
    %v729 = vpop.f32.mrb[0].mxu0
    %v730 = vadd.f32 %v184, %v729
    %731 = vmatprep.mubr.bf16.mxu0 0
    %732 = vmatmul.mubr.bf16.gmra.mrb[0].mxu0 %v339
    %v733 = vpop.f32.mrb[0].mxu0
    %v734 = vadd.f32 %v180, %v733
    %v735 = vpop.f32.mrb[0].mxu0
    %v736 = vadd.f32 %v184, %v735
    %v737 = vpop.f32.mrb[0].mxu0
    %v738 = vadd.f32 %v180, %v737
    %v739 = vpop.f32.mrb[0].mxu0
    %v740 = vadd.f32 %v184, %v739
    %741 = vmatprep.mubr.bf16.mxu0 0
    %742 = vmatmul.mubr.bf16.gmra.mrb[0].mxu0 %v340
    %v743 = vpop.f32.mrb[0].mxu0
    %v744 = vadd.f32 %v180, %v743
    %v745 = vpop.f32.mrb[0].mxu0
    %v746 = vadd.f32 %v184, %v745
    %v747 = vpop.f32.mrb[0].mxu0
    %v748 = vadd.f32 %v180, %v747
    %v749 = vpop.f32.mrb[0].mxu0
    %v750 = vadd.f32 %v184, %v749
    %751 = vmatprep.mubr.bf16.mxu0 0
    %752 = vmatmul.mubr.bf16.gmra.mrb[0].mxu0 %v341
    %v753 = vpop.f32.mrb[0].mxu0
    %v754 = vadd.f32 %v180, %v753
    %v755 = vpop.f32.mrb[0].mxu0
    %v756 = vadd.f32 %v184, %v755
    %v757 = vpop.f32.mrb[0].mxu0
    %v758 = vadd.f32 %v180, %v757
    %v759 = vpop.f32.mrb[0].mxu0
    %v760 = vadd.f32 %v184, %v759
    %761 = vmatprep.mubr.bf16.mxu0 0
    %762 = vmatmul.mubr.bf16.gmra.mrb[0].mxu0 %v342
    %v763 = vpop.f32.mrb[0].mxu0
    %v764 = vadd.f32 %v180, %v763
    %v765 = vpop.f32.mrb[0].mxu0
    %v766 = vadd.f32 %v184, %v765
    %v767 = vpop.f32.mrb[0].mxu0
    %v768 = vadd.f32 %v180, %v767
    %v769 = vpop.f32.mrb[0].mxu0
    %v770 = vadd.f32 %v184, %v769
    %771 = vmatprep.mubr.bf16.mxu0 0
    %772 = vmatmul.mubr.bf16.gmra.mrb[0].mxu0 %v343
    %v773 = vpop.f32.mrb[0].mxu0
    %v774 = vadd.f32 %v180, %v773
    %v775 = vpop.f32.mrb[0].mxu0
    %v776 = vadd.f32 %v184, %v775
    %v777 = vpop.f32.mrb[0].mxu0
    %v778 = vadd.f32 %v180, %v777
    %v779 = vpop.f32.mrb[0].mxu0
    %v780 = vadd.f32 %v184, %v779
    %781 = vmatprep.mubr.bf16.mxu0 0
    %782 = vmatmul.mubr.bf16.gmra.mrb[0].mxu0 %v344
    %v783 = vpop.f32.mrb[0].mxu0
    %v784 = vadd.f32 %v180, %v783
    %v785 = vpop.f32.mrb[0].mxu0
    %v786 = vadd.f32 %v184, %v785
    %v787 = vpop.f32.mrb[0].mxu0
    %v788 = vadd.f32 %v180, %v787
    %v789 = vpop.f32.mrb[0].mxu0
    %v790 = vadd.f32 %v184, %v789
    %791 = vmatprep.mubr.bf16.mxu0 0
    %792 = vmatmul.mubr.bf16.gmra.mrb[0].mxu0 %v345
    %v793 = vpop.f32.mrb[0].mxu0
    %v794 = vadd.f32 %v180, %v793
    %v795 = vpop.f32.mrb[0].mxu0
    %v796 = vadd.f32 %v184, %v795
    %v797 = vpop.f32.mrb[0].mxu0
    %v798 = vadd.f32 %v180, %v797
    %v799 = vpop.f32.mrb[0].mxu0
    %v800 = vadd.f32 %v184, %v799
    %801 = vmatprep.mubr.bf16.mxu0 0
    %802 = vmatmul.mubr.bf16.gmra.mrb[0].mxu0 %v346
    %v803 = vpop.f32.mrb[0].mxu0
    %v804 = vadd.f32 %v180, %v803
    %v805 = vpop.f32.mrb[0].mxu0
    %v806 = vadd.f32 %v184, %v805
    %v807 = vpop.f32.mrb[0].mxu0
    %v808 = vadd.f32 %v180, %v807
    %v809 = vpop.f32.mrb[0].mxu0
    %v810 = vadd.f32 %v184, %v809
    %811 = vdwg.mxu0
    %v812 = vmax.f32 %v494, 0.0
    %v813 = vmax.f32 %v496, 0.0
    %v814 = vmax.f32 %v498, 0.0
    %v815 = vmax.f32 %v500, 0.0
    %v816 = vmax.f32 %v504, 0.0
    %v817 = vmax.f32 %v506, 0.0
    %v818 = vmax.f32 %v508, 0.0
    %v819 = vmax.f32 %v510, 0.0
    %v820 = vmax.f32 %v514, 0.0
    %v821 = vmax.f32 %v516, 0.0
    %v822 = vmax.f32 %v518, 0.0
    %v823 = vmax.f32 %v520, 0.0
    %v824 = vmax.f32 %v524, 0.0
    %v825 = vmax.f32 %v526, 0.0
    %v826 = vmax.f32 %v528, 0.0
    %v827 = vmax.f32 %v530, 0.0
    %v828 = vmax.f32 %v534, 0.0
    %v829 = vmax.f32 %v536, 0.0
    %v830 = vmax.f32 %v538, 0.0
    %v831 = vmax.f32 %v540, 0.0
    %v832 = vmax.f32 %v544, 0.0
    %v833 = vmax.f32 %v546, 0.0
    %v834 = vmax.f32 %v548, 0.0
    %v835 = vmax.f32 %v550, 0.0
    %v836 = vmax.f32 %v554, 0.0
    %v837 = vmax.f32 %v556, 0.0
    %v838 = vmax.f32 %v558, 0.0
    %v839 = vmax.f32 %v560, 0.0
    %v840 = vmax.f32 %v564, 0.0
    %v841 = vmax.f32 %v566, 0.0
    %v842 = vmax.f32 %v568, 0.0
    %v843 = vmax.f32 %v570, 0.0
    %v844 = vmax.f32 %v574, 0.0
    %v845 = vmax.f32 %v576, 0.0
    %v846 = vmax.f32 %v578, 0.0
    %v847 = vmax.f32 %v580, 0.0
    %v848 = vmax.f32 %v584, 0.0
    %v849 = vmax.f32 %v586, 0.0
    %v850 = vmax.f32 %v588, 0.0
    %v851 = vmax.f32 %v590, 0.0
    %v852 = vmax.f32 %v594, 0.0
    %v853 = vmax.f32 %v596, 0.0
    %v854 = vmax.f32 %v598, 0.0
    %v855 = vmax.f32 %v600, 0.0
    %v856 = vmax.f32 %v604, 0.0
    %v857 = vmax.f32 %v606, 0.0
    %v858 = vmax.f32 %v608, 0.0
    %v859 = vmax.f32 %v610, 0.0
    %v860 = vmax.f32 %v614, 0.0
    %v861 = vmax.f32 %v616, 0.0
    %v862 = vmax.f32 %v618, 0.0
    %v863 = vmax.f32 %v620, 0.0
    %v864 = vmax.f32 %v624, 0.0
    %v865 = vmax.f32 %v626, 0.0
    %v866 = vmax.f32 %v628, 0.0
    %v867 = vmax.f32 %v630, 0.0
    %v868 = vmax.f32 %v634, 0.0
    %v869 = vmax.f32 %v636, 0.0
    %v870 = vmax.f32 %v638, 0.0
    %v871 = vmax.f32 %v640, 0.0
    %v872 = vmax.f32 %v644, 0.0
    %v873 = vmax.f32 %v646, 0.0
    %v874 = vmax.f32 %v648, 0.0
    %v875 = vmax.f32 %v650, 0.0
    %v876 = vmax.f32 %v654, 0.0
    %v877 = vmax.f32 %v656, 0.0
    %v878 = vmax.f32 %v658, 0.0
    %v879 = vmax.f32 %v660, 0.0
    %v880 = vmax.f32 %v664, 0.0
    %v881 = vmax.f32 %v666, 0.0
    %v882 = vmax.f32 %v668, 0.0
    %v883 = vmax.f32 %v670, 0.0
    %v884 = vmax.f32 %v674, 0.0
    %v885 = vmax.f32 %v676, 0.0
    %v886 = vmax.f32 %v678, 0.0
    %v887 = vmax.f32 %v680, 0.0
    %v888 = vmax.f32 %v684, 0.0
    %v889 = vmax.f32 %v686, 0.0
    %v890 = vmax.f32 %v688, 0.0
    %v891 = vmax.f32 %v690, 0.0
    %v892 = vmax.f32 %v694, 0.0
    %v893 = vmax.f32 %v696, 0.0
    %v894 = vmax.f32 %v698, 0.0
    %v895 = vmax.f32 %v700, 0.0
    %v896 = vmax.f32 %v704, 0.0
    %v897 = vmax.f32 %v706, 0.0
    %v898 = vmax.f32 %v708, 0.0
    %v899 = vmax.f32 %v710, 0.0
    %v900 = vmax.f32 %v714, 0.0
    %v901 = vmax.f32 %v716, 0.0
    %v902 = vmax.f32 %v718, 0.0
    %v903 = vmax.f32 %v720, 0.0
    %v904 = vmax.f32 %v724, 0.0
    %v905 = vmax.f32 %v726, 0.0
    %v906 = vmax.f32 %v728, 0.0
    %v907 = vmax.f32 %v730, 0.0
    %v908 = vmax.f32 %v734, 0.0
    %v909 = vmax.f32 %v736, 0.0
    %v910 = vmax.f32 %v738, 0.0
    %v911 = vmax.f32 %v740, 0.0
    %v912 = vmax.f32 %v744, 0.0
    %v913 = vmax.f32 %v746, 0.0
    %v914 = vmax.f32 %v748, 0.0
    %v915 = vmax.f32 %v750, 0.0
    %v916 = vmax.f32 %v754, 0.0
    %v917 = vmax.f32 %v756, 0.0
    %v918 = vmax.f32 %v758, 0.0
    %v919 = vmax.f32 %v760, 0.0
    %v920 = vmax.f32 %v764, 0.0
    %v921 = vmax.f32 %v766, 0.0
    %v922 = vmax.f32 %v768, 0.0
    %v923 = vmax.f32 %v770, 0.0
    %v924 = vmax.f32 %v774, 0.0
    %v925 = vmax.f32 %v776, 0.0
    %v926 = vmax.f32 %v778, 0.0
    %v927 = vmax.f32 %v780, 0.0
    %v928 = vmax.f32 %v784, 0.0
    %v929 = vmax.f32 %v786, 0.0
    %v930 = vmax.f32 %v788, 0.0
    %v931 = vmax.f32 %v790, 0.0
    %v932 = vmax.f32 %v794, 0.0
    %v933 = vmax.f32 %v796, 0.0
    %v934 = vmax.f32 %v798, 0.0
    %v935 = vmax.f32 %v800, 0.0
    %v936 = vmax.f32 %v804, 0.0
    %v937 = vmax.f32 %v806, 0.0
    %v938 = vmax.f32 %v808, 0.0
    %v939 = vmax.f32 %v810, 0.0
    %v940 = vadd.f32 %v812, %v814
    %v941 = vadd.f32 %v940, %v816
    %v942 = vadd.f32 %v941, %v818
    %v943 = vadd.f32 %v942, %v820
    %v944 = vadd.f32 %v943, %v822
    %v945 = vadd.f32 %v944, %v824
    %v946 = vadd.f32 %v945, %v826
    %v947 = vadd.f32 %v946, %v828
    %v948 = vadd.f32 %v947, %v830
    %v949 = vadd.f32 %v948, %v832
    %v950 = vadd.f32 %v949, %v834
    %v951 = vadd.f32 %v950, %v836
    %v952 = vadd.f32 %v951, %v838
    %v953 = vadd.f32 %v952, %v840
    %v954 = vadd.f32 %v953, %v842
    %v955 = vadd.f32 %v954, %v844
    %v956 = vadd.f32 %v955, %v846
    %v957 = vadd.f32 %v956, %v848
    %v958 = vadd.f32 %v957, %v850
    %v959 = vadd.f32 %v958, %v852
    %v960 = vadd.f32 %v959, %v854
    %v961 = vadd.f32 %v960, %v856
    %v962 = vadd.f32 %v961, %v858
    %v963 = vadd.f32 %v962, %v860
    %v964 = vadd.f32 %v963, %v862
    %v965 = vadd.f32 %v964, %v864
    %v966 = vadd.f32 %v965, %v866
    %v967 = vadd.f32 %v966, %v868
    %v968 = vadd.f32 %v967, %v870
    %v969 = vadd.f32 %v968, %v872
    %v970 = vadd.f32 %v969, %v874
    %v971 = vadd.f32 %v970, %v876
    %v972 = vadd.f32 %v971, %v878
    %v973 = vadd.f32 %v972, %v880
    %v974 = vadd.f32 %v973, %v882
    %v975 = vadd.f32 %v974, %v884
    %v976 = vadd.f32 %v975, %v886
    %v977 = vadd.f32 %v976, %v888
    %v978 = vadd.f32 %v977, %v890
    %v979 = vadd.f32 %v978, %v892
    %v980 = vadd.f32 %v979, %v894
    %v981 = vadd.f32 %v980, %v896
    %v982 = vadd.f32 %v981, %v898
    %v983 = vadd.f32 %v982, %v900
    %v984 = vadd.f32 %v983, %v902
    %v985 = vadd.f32 %v984, %v904
    %v986 = vadd.f32 %v985, %v906
    %v987 = vadd.f32 %v986, %v908
    %v988 = vadd.f32 %v987, %v910
    %v989 = vadd.f32 %v988, %v912
    %v990 = vadd.f32 %v989, %v914
    %v991 = vadd.f32 %v990, %v916
    %v992 = vadd.f32 %v991, %v918
    %v993 = vadd.f32 %v992, %v920
    %v994 = vadd.f32 %v993, %v922
    %v995 = vadd.f32 %v994, %v924
    %v996 = vadd.f32 %v995, %v926
    %v997 = vadd.f32 %v996, %v928
    %v998 = vadd.f32 %v997, %v930
    %v999 = vadd.f32 %v998, %v932
    %v1000 = vadd.f32 %v999, %v934
    %v1001 = vadd.f32 %v1000, %v936
    %v1002 = vadd.f32 %v1001, %v938
    %v1003 = vrot.slane %v1002, 4
    %v1004 = vadd.f32 %v1002, %v1003
    %v1005 = vrot.slane %v1004, 2
    %v1006 = vadd.f32 %v1004, %v1005
    %v1007 = vrot.slane %v1006, 1
    %v1008 = vadd.f32 %v1006, %v1007
    %v1009 = vadd.f32 %v813, %v815
    %v1010 = vadd.f32 %v1009, %v817
    %v1011 = vadd.f32 %v1010, %v819
    %v1012 = vadd.f32 %v1011, %v821
    %v1013 = vadd.f32 %v1012, %v823
    %v1014 = vadd.f32 %v1013, %v825
    %v1015 = vadd.f32 %v1014, %v827
    %v1016 = vadd.f32 %v1015, %v829
    %v1017 = vadd.f32 %v1016, %v831
    %v1018 = vadd.f32 %v1017, %v833
    %v1019 = vadd.f32 %v1018, %v835
    %v1020 = vadd.f32 %v1019, %v837
    %v1021 = vadd.f32 %v1020, %v839
    %v1022 = vadd.f32 %v1021, %v841
    %v1023 = vadd.f32 %v1022, %v843
    %v1024 = vadd.f32 %v1023, %v845
    %v1025 = vadd.f32 %v1024, %v847
    %v1026 = vadd.f32 %v1025, %v849
    %v1027 = vadd.f32 %v1026, %v851
    %v1028 = vadd.f32 %v1027, %v853
    %v1029 = vadd.f32 %v1028, %v855
    %v1030 = vadd.f32 %v1029, %v857
    %v1031 = vadd.f32 %v1030, %v859
    %v1032 = vadd.f32 %v1031, %v861
    %v1033 = vadd.f32 %v1032, %v863
    %v1034 = vadd.f32 %v1033, %v865
    %v1035 = vadd.f32 %v1034, %v867
    %v1036 = vadd.f32 %v1035, %v869
    %v1037 = vadd.f32 %v1036, %v871
    %v1038 = vadd.f32 %v1037, %v873
    %v1039 = vadd.f32 %v1038, %v875
    %v1040 = vadd.f32 %v1039, %v877
    %v1041 = vadd.f32 %v1040, %v879
    %v1042 = vadd.f32 %v1041, %v881
    %v1043 = vadd.f32 %v1042, %v883
    %v1044 = vadd.f32 %v1043, %v885
    %v1045 = vadd.f32 %v1044, %v887
    %v1046 = vadd.f32 %v1045, %v889
    %v1047 = vadd.f32 %v1046, %v891
    %v1048 = vadd.f32 %v1047, %v893
    %v1049 = vadd.f32 %v1048, %v895
    %v1050 = vadd.f32 %v1049, %v897
    %v1051 = vadd.f32 %v1050, %v899
    %v1052 = vadd.f32 %v1051, %v901
    %v1053 = vadd.f32 %v1052, %v903
    %v1054 = vadd.f32 %v1053, %v905
    %v1055 = vadd.f32 %v1054, %v907
    %v1056 = vadd.f32 %v1055, %v909
    %v1057 = vadd.f32 %v1056, %v911
    %v1058 = vadd.f32 %v1057, %v913
    %v1059 = vadd.f32 %v1058, %v915
    %v1060 = vadd.f32 %v1059, %v917
    %v1061 = vadd.f32 %v1060, %v919
    %v1062 = vadd.f32 %v1061, %v921
    %v1063 = vadd.f32 %v1062, %v923
    %v1064 = vadd.f32 %v1063, %v925
    %v1065 = vadd.f32 %v1064, %v927
    %v1066 = vadd.f32 %v1065, %v929
    %v1067 = vadd.f32 %v1066, %v931
    %v1068 = vadd.f32 %v1067, %v933
    %v1069 = vadd.f32 %v1068, %v935
    %v1070 = vadd.f32 %v1069, %v937
    %v1071 = vadd.f32 %v1070, %v939
    %v1072 = vrot.slane %v1071, 4
    %v1073 = vadd.f32 %v1071, %v1072
    %v1074 = vrot.slane %v1073, 2
    %v1075 = vadd.f32 %v1073, %v1074
    %v1076 = vrot.slane %v1075, 1
    %v1077 = vadd.f32 %v1075, %v1076
    %v1078 = vmul.f32 %v1008, 0.001953125
    %v1079 = vmul.f32 %v1077, 0.001953125
    %v1080 = vmul.f32 %v812, %v812
    %v1081 = vmul.f32 %v813, %v813
    %v1082 = vmul.f32 %v814, %v814
    %v1083 = vmul.f32 %v815, %v815
    %v1084 = vmul.f32 %v816, %v816
    %v1085 = vmul.f32 %v817, %v817
    %v1086 = vmul.f32 %v818, %v818
    %v1087 = vmul.f32 %v819, %v819
    %v1088 = vmul.f32 %v820, %v820
    %v1089 = vmul.f32 %v821, %v821
    %v1090 = vmul.f32 %v822, %v822
    %v1091 = vmul.f32 %v823, %v823
    %v1092 = vmul.f32 %v824, %v824
    %v1093 = vmul.f32 %v825, %v825
    %v1094 = vmul.f32 %v826, %v826
    %v1095 = vmul.f32 %v827, %v827
    %v1096 = vmul.f32 %v828, %v828
    %v1097 = vmul.f32 %v829, %v829
    %v1098 = vmul.f32 %v830, %v830
    %v1099 = vmul.f32 %v831, %v831
    %v1100 = vmul.f32 %v832, %v832
    %v1101 = vmul.f32 %v833, %v833
    %v1102 = vmul.f32 %v834, %v834
    %v1103 = vmul.f32 %v835, %v835
    %v1104 = vmul.f32 %v836, %v836
    %v1105 = vmul.f32 %v837, %v837
    %v1106 = vmul.f32 %v838, %v838
    %v1107 = vmul.f32 %v839, %v839
    %v1108 = vmul.f32 %v840, %v840
    %v1109 = vmul.f32 %v841, %v841
    %v1110 = vmul.f32 %v842, %v842
    %v1111 = vmul.f32 %v843, %v843
    %v1112 = vmul.f32 %v844, %v844
    %v1113 = vmul.f32 %v845, %v845
    %v1114 = vmul.f32 %v846, %v846
    %v1115 = vmul.f32 %v847, %v847
    %v1116 = vmul.f32 %v848, %v848
    %v1117 = vmul.f32 %v849, %v849
    %v1118 = vmul.f32 %v850, %v850
    %v1119 = vmul.f32 %v851, %v851
    %v1120 = vmul.f32 %v852, %v852
    %v1121 = vmul.f32 %v853, %v853
    %v1122 = vmul.f32 %v854, %v854
    %v1123 = vmul.f32 %v855, %v855
    %v1124 = vmul.f32 %v856, %v856
    %v1125 = vmul.f32 %v857, %v857
    %v1126 = vmul.f32 %v858, %v858
    %v1127 = vmul.f32 %v859, %v859
    %v1128 = vmul.f32 %v860, %v860
    %v1129 = vmul.f32 %v861, %v861
    %v1130 = vmul.f32 %v862, %v862
    %v1131 = vmul.f32 %v863, %v863
    %v1132 = vmul.f32 %v864, %v864
    %v1133 = vmul.f32 %v865, %v865
    %v1134 = vmul.f32 %v866, %v866
    %v1135 = vmul.f32 %v867, %v867
    %v1136 = vmul.f32 %v868, %v868
    %v1137 = vmul.f32 %v869, %v869
    %v1138 = vmul.f32 %v870, %v870
    %v1139 = vmul.f32 %v871, %v871
    %v1140 = vmul.f32 %v872, %v872
    %v1141 = vmul.f32 %v873, %v873
    %v1142 = vmul.f32 %v874, %v874
    %v1143 = vmul.f32 %v875, %v875
    %v1144 = vmul.f32 %v876, %v876
    %v1145 = vmul.f32 %v877, %v877
    %v1146 = vmul.f32 %v878, %v878
    %v1147 = vmul.f32 %v879, %v879
    %v1148 = vmul.f32 %v880, %v880
    %v1149 = vmul.f32 %v881, %v881
    %v1150 = vmul.f32 %v882, %v882
    %v1151 = vmul.f32 %v883, %v883
    %v1152 = vmul.f32 %v884, %v884
    %v1153 = vmul.f32 %v885, %v885
    %v1154 = vmul.f32 %v886, %v886
    %v1155 = vmul.f32 %v887, %v887
    %v1156 = vmul.f32 %v888, %v888
    %v1157 = vmul.f32 %v889, %v889
    %v1158 = vmul.f32 %v890, %v890
    %v1159 = vmul.f32 %v891, %v891
    %v1160 = vmul.f32 %v892, %v892
    %v1161 = vmul.f32 %v893, %v893
    %v1162 = vmul.f32 %v894, %v894
    %v1163 = vmul.f32 %v895, %v895
    %v1164 = vmul.f32 %v896, %v896
    %v1165 = vmul.f32 %v897, %v897
    %v1166 = vmul.f32 %v898, %v898
    %v1167 = vmul.f32 %v899, %v899
    %v1168 = vmul.f32 %v900, %v900
    %v1169 = vmul.f32 %v901, %v901
    %v1170 = vmul.f32 %v902, %v902
    %v1171 = vmul.f32 %v903, %v903
    %v1172 = vmul.f32 %v904, %v904
    %v1173 = vmul.f32 %v905, %v905
    %v1174 = vmul.f32 %v906, %v906
    %v1175 = vmul.f32 %v907, %v907
    %v1176 = vmul.f32 %v908, %v908
    %v1177 = vmul.f32 %v909, %v909
    %v1178 = vmul.f32 %v910, %v910
    %v1179 = vmul.f32 %v911, %v911
    %v1180 = vmul.f32 %v912, %v912
    %v1181 = vmul.f32 %v913, %v913
    %v1182 = vmul.f32 %v914, %v914
    %v1183 = vmul.f32 %v915, %v915
    %v1184 = vmul.f32 %v916, %v916
    %v1185 = vmul.f32 %v917, %v917
    %v1186 = vmul.f32 %v918, %v918
    %v1187 = vmul.f32 %v919, %v919
    %v1188 = vmul.f32 %v920, %v920
    %v1189 = vmul.f32 %v921, %v921
    %v1190 = vmul.f32 %v922, %v922
    %v1191 = vmul.f32 %v923, %v923
    %v1192 = vmul.f32 %v924, %v924
    %v1193 = vmul.f32 %v925, %v925
    %v1194 = vmul.f32 %v926, %v926
    %v1195 = vmul.f32 %v927, %v927
    %v1196 = vmul.f32 %v928, %v928
    %v1197 = vmul.f32 %v929, %v929
    %v1198 = vmul.f32 %v930, %v930
    %v1199 = vmul.f32 %v931, %v931
    %v1200 = vmul.f32 %v932, %v932
    %v1201 = vmul.f32 %v933, %v933
    %v1202 = vmul.f32 %v934, %v934
    %v1203 = vmul.f32 %v935, %v935
    %v1204 = vmul.f32 %v936, %v936
    %v1205 = vmul.f32 %v937, %v937
    %v1206 = vmul.f32 %v938, %v938
    %v1207 = vmul.f32 %v939, %v939
    %v1208 = vadd.f32 %v1080, %v1082
    %v1209 = vadd.f32 %v1208, %v1084
    %v1210 = vadd.f32 %v1209, %v1086
    %v1211 = vadd.f32 %v1210, %v1088
    %v1212 = vadd.f32 %v1211, %v1090
    %v1213 = vadd.f32 %v1212, %v1092
    %v1214 = vadd.f32 %v1213, %v1094
    %v1215 = vadd.f32 %v1214, %v1096
    %v1216 = vadd.f32 %v1215, %v1098
    %v1217 = vadd.f32 %v1216, %v1100
    %v1218 = vadd.f32 %v1217, %v1102
    %v1219 = vadd.f32 %v1218, %v1104
    %v1220 = vadd.f32 %v1219, %v1106
    %v1221 = vadd.f32 %v1220, %v1108
    %v1222 = vadd.f32 %v1221, %v1110
    %v1223 = vadd.f32 %v1222, %v1112
    %v1224 = vadd.f32 %v1223, %v1114
    %v1225 = vadd.f32 %v1224, %v1116
    %v1226 = vadd.f32 %v1225, %v1118
    %v1227 = vadd.f32 %v1226, %v1120
    %v1228 = vadd.f32 %v1227, %v1122
    %v1229 = vadd.f32 %v1228, %v1124
    %v1230 = vadd.f32 %v1229, %v1126
    %v1231 = vadd.f32 %v1230, %v1128
    %v1232 = vadd.f32 %v1231, %v1130
    %v1233 = vadd.f32 %v1232, %v1132
    %v1234 = vadd.f32 %v1233, %v1134
    %v1235 = vadd.f32 %v1234, %v1136
    %v1236 = vadd.f32 %v1235, %v1138
    %v1237 = vadd.f32 %v1236, %v1140
    %v1238 = vadd.f32 %v1237, %v1142
    %v1239 = vadd.f32 %v1238, %v1144
    %v1240 = vadd.f32 %v1239, %v1146
    %v1241 = vadd.f32 %v1240, %v1148
    %v1242 = vadd.f32 %v1241, %v1150
    %v1243 = vadd.f32 %v1242, %v1152
    %v1244 = vadd.f32 %v1243, %v1154
    %v1245 = vadd.f32 %v1244, %v1156
    %v1246 = vadd.f32 %v1245, %v1158
    %v1247 = vadd.f32 %v1246, %v1160
    %v1248 = vadd.f32 %v1247, %v1162
    %v1249 = vadd.f32 %v1248, %v1164
    %v1250 = vadd.f32 %v1249, %v1166
    %v1251 = vadd.f32 %v1250, %v1168
    %v1252 = vadd.f32 %v1251, %v1170
    %v1253 = vadd.f32 %v1252, %v1172
    %v1254 = vadd.f32 %v1253, %v1174
    %v1255 = vadd.f32 %v1254, %v1176
    %v1256 = vadd.f32 %v1255, %v1178
    %v1257 = vadd.f32 %v1256, %v1180
    %v1258 = vadd.f32 %v1257, %v1182
    %v1259 = vadd.f32 %v1258, %v1184
    %v1260 = vadd.f32 %v1259, %v1186
    %v1261 = vadd.f32 %v1260, %v1188
    %v1262 = vadd.f32 %v1261, %v1190
    %v1263 = vadd.f32 %v1262, %v1192
    %v1264 = vadd.f32 %v1263, %v1194
    %v1265 = vadd.f32 %v1264, %v1196
    %v1266 = vadd.f32 %v1265, %v1198
    %v1267 = vadd.f32 %v1266, %v1200
    %v1268 = vadd.f32 %v1267, %v1202
    %v1269 = vadd.f32 %v1268, %v1204
    %v1270 = vadd.f32 %v1269, %v1206
    %v1271 = vrot.slane %v1270, 4
    %v1272 = vadd.f32 %v1270, %v1271
    %v1273 = vrot.slane %v1272, 2
    %v1274 = vadd.f32 %v1272, %v1273
    %v1275 = vrot.slane %v1274, 1
    %v1276 = vadd.f32 %v1274, %v1275
    %v1277 = vadd.f32 %v1081, %v1083
    %v1278 = vadd.f32 %v1277, %v1085
    %v1279 = vadd.f32 %v1278, %v1087
    %v1280 = vadd.f32 %v1279, %v1089
    %v1281 = vadd.f32 %v1280, %v1091
    %v1282 = vadd.f32 %v1281, %v1093
    %v1283 = vadd.f32 %v1282, %v1095
    %v1284 = vadd.f32 %v1283, %v1097
    %v1285 = vadd.f32 %v1284, %v1099
    %v1286 = vadd.f32 %v1285, %v1101
    %v1287 = vadd.f32 %v1286, %v1103
    %v1288 = vadd.f32 %v1287, %v1105
    %v1289 = vadd.f32 %v1288, %v1107
    %v1290 = vadd.f32 %v1289, %v1109
    %v1291 = vadd.f32 %v1290, %v1111
    %v1292 = vadd.f32 %v1291, %v1113
    %v1293 = vadd.f32 %v1292, %v1115
    %v1294 = vadd.f32 %v1293, %v1117
    %v1295 = vadd.f32 %v1294, %v1119
    %v1296 = vadd.f32 %v1295, %v1121
    %v1297 = vadd.f32 %v1296, %v1123
    %v1298 = vadd.f32 %v1297, %v1125
    %v1299 = vadd.f32 %v1298, %v1127
    %v1300 = vadd.f32 %v1299, %v1129
    %v1301 = vadd.f32 %v1300, %v1131
    %v1302 = vadd.f32 %v1301, %v1133
    %v1303 = vadd.f32 %v1302, %v1135
    %v1304 = vadd.f32 %v1303, %v1137
    %v1305 = vadd.f32 %v1304, %v1139
    %v1306 = vadd.f32 %v1305, %v1141
    %v1307 = vadd.f32 %v1306, %v1143
    %v1308 = vadd.f32 %v1307, %v1145
    %v1309 = vadd.f32 %v1308, %v1147
    %v1310 = vadd.f32 %v1309, %v1149
    %v1311 = vadd.f32 %v1310, %v1151
    %v1312 = vadd.f32 %v1311, %v1153
    %v1313 = vadd.f32 %v1312, %v1155
    %v1314 = vadd.f32 %v1313, %v1157
    %v1315 = vadd.f32 %v1314, %v1159
    %v1316 = vadd.f32 %v1315, %v1161
    %v1317 = vadd.f32 %v1316, %v1163
    %v1318 = vadd.f32 %v1317, %v1165
    %v1319 = vadd.f32 %v1318, %v1167
    %v1320 = vadd.f32 %v1319, %v1169
    %v1321 = vadd.f32 %v1320, %v1171
    %v1322 = vadd.f32 %v1321, %v1173
    %v1323 = vadd.f32 %v1322, %v1175
    %v1324 = vadd.f32 %v1323, %v1177
    %v1325 = vadd.f32 %v1324, %v1179
    %v1326 = vadd.f32 %v1325, %v1181
    %v1327 = vadd.f32 %v1326, %v1183
    %v1328 = vadd.f32 %v1327, %v1185
    %v1329 = vadd.f32 %v1328, %v1187
    %v1330 = vadd.f32 %v1329, %v1189
    %v1331 = vadd.f32 %v1330, %v1191
    %v1332 = vadd.f32 %v1331, %v1193
    %v1333 = vadd.f32 %v1332, %v1195
    %v1334 = vadd.f32 %v1333, %v1197
    %v1335 = vadd.f32 %v1334, %v1199
    %v1336 = vadd.f32 %v1335, %v1201
    %v1337 = vadd.f32 %v1336, %v1203
    %v1338 = vadd.f32 %v1337, %v1205
    %v1339 = vadd.f32 %v1338, %v1207
    %v1340 = vrot.slane %v1339, 4
    %v1341 = vadd.f32 %v1339, %v1340
    %v1342 = vrot.slane %v1341, 2
    %v1343 = vadd.f32 %v1341, %v1342
    %v1344 = vrot.slane %v1343, 1
    %v1345 = vadd.f32 %v1343, %v1344
    %v1346 = vmul.f32 %v1276, 0.001953125
    %v1347 = vmul.f32 %v1345, 0.001953125
    %v1348 = vmul.f32 %v1078, %v1078
    %v1349 = vmul.f32 %v1079, %v1079
    %v1350 = vsub.f32 %v1346, %v1348
    %v1351 = vsub.f32 %v1347, %v1349
    %v1352 = vmax.f32 %v1350, 0.0
    %v1353 = vmax.f32 %v1351, 0.0
    %v1354 = vadd.f32 %v1352, 1e-05
    %v1355 = vadd.f32 %v1353, 1e-05
    %v1356 = vrsqrt.pop %v1354
    %v1357 = vrsqrt.pop %v1355
    %v1358 = vld [vmem:[%s3] sm:$0x3]
    %v1360 = vlaneseq
    %v1361 = vshrl.u32 %v1360, 7
    %v1362 = vsub.s32 0, %v1361
    %v1363 = vrot.slane %v1358, %v1362
    %v1364 = vlaneseq
    %v1365 = vshrl.u32 %v1364, 7
    %v1366 = vsub.s32 1, %v1365
    %v1367 = vrot.slane %v1358, %v1366
    %v1370 = vmul.f32 %v1356, %v1363
    %v1371 = vmul.f32 %v1357, %v1367
    %v1372 = vlaneseq
    %v1373 = vshrl.u32 %v1372, 7
    %v1374 = vsub.s32 0, %v1373
    %v1375 = vrot.slane %v1370, %v1374
    %v1376 = vlaneseq
    %v1377 = vshrl.u32 %v1376, 7
    %v1378 = vsub.s32 0, %v1377
    %v1379 = vrot.slane %v1371, %v1378
    %v1380 = vmul.f32 %v812, %v1375
    %v1381 = vmul.f32 %v813, %v1379
    %v1382 = vmul.f32 %v814, %v1375
    %v1383 = vmul.f32 %v815, %v1379
    %v1384 = vmul.f32 %v816, %v1375
    %v1385 = vmul.f32 %v817, %v1379
    %v1386 = vmul.f32 %v818, %v1375
    %v1387 = vmul.f32 %v819, %v1379
    %v1388 = vmul.f32 %v820, %v1375
    %v1389 = vmul.f32 %v821, %v1379
    %v1390 = vmul.f32 %v822, %v1375
    %v1391 = vmul.f32 %v823, %v1379
    %v1392 = vmul.f32 %v824, %v1375
    %v1393 = vmul.f32 %v825, %v1379
    %v1394 = vmul.f32 %v826, %v1375
    %v1395 = vmul.f32 %v827, %v1379
    %v1396 = vmul.f32 %v828, %v1375
    %v1397 = vmul.f32 %v829, %v1379
    %v1398 = vmul.f32 %v830, %v1375
    %v1399 = vmul.f32 %v831, %v1379
    %v1400 = vmul.f32 %v832, %v1375
    %v1401 = vmul.f32 %v833, %v1379
    %v1402 = vmul.f32 %v834, %v1375
    %v1403 = vmul.f32 %v835, %v1379
    %v1404 = vmul.f32 %v836, %v1375
    %v1405 = vmul.f32 %v837, %v1379
    %v1406 = vmul.f32 %v838, %v1375
    %v1407 = vmul.f32 %v839, %v1379
    %v1408 = vmul.f32 %v840, %v1375
    %v1409 = vmul.f32 %v841, %v1379
    %v1410 = vmul.f32 %v842, %v1375
    %v1411 = vmul.f32 %v843, %v1379
    %v1412 = vmul.f32 %v844, %v1375
    %v1413 = vmul.f32 %v845, %v1379
    %v1414 = vmul.f32 %v846, %v1375
    %v1415 = vmul.f32 %v847, %v1379
    %v1416 = vmul.f32 %v848, %v1375
    %v1417 = vmul.f32 %v849, %v1379
    %v1418 = vmul.f32 %v850, %v1375
    %v1419 = vmul.f32 %v851, %v1379
    %v1420 = vmul.f32 %v852, %v1375
    %v1421 = vmul.f32 %v853, %v1379
    %v1422 = vmul.f32 %v854, %v1375
    %v1423 = vmul.f32 %v855, %v1379
    %v1424 = vmul.f32 %v856, %v1375
    %v1425 = vmul.f32 %v857, %v1379
    %v1426 = vmul.f32 %v858, %v1375
    %v1427 = vmul.f32 %v859, %v1379
    %v1428 = vmul.f32 %v860, %v1375
    %v1429 = vmul.f32 %v861, %v1379
    %v1430 = vmul.f32 %v862, %v1375
    %v1431 = vmul.f32 %v863, %v1379
    %v1432 = vmul.f32 %v864, %v1375
    %v1433 = vmul.f32 %v865, %v1379
    %v1434 = vmul.f32 %v866, %v1375
    %v1435 = vmul.f32 %v867, %v1379
    %v1436 = vmul.f32 %v868, %v1375
    %v1437 = vmul.f32 %v869, %v1379
    %v1438 = vmul.f32 %v870, %v1375
    %v1439 = vmul.f32 %v871, %v1379
    %v1440 = vmul.f32 %v872, %v1375
    %v1441 = vmul.f32 %v873, %v1379
    %v1442 = vmul.f32 %v874, %v1375
    %v1443 = vmul.f32 %v875, %v1379
    %v1444 = vmul.f32 %v876, %v1375
    %v1445 = vmul.f32 %v877, %v1379
    %v1446 = vmul.f32 %v878, %v1375
    %v1447 = vmul.f32 %v879, %v1379
    %v1448 = vmul.f32 %v880, %v1375
    %v1449 = vmul.f32 %v881, %v1379
    %v1450 = vmul.f32 %v882, %v1375
    %v1451 = vmul.f32 %v883, %v1379
    %v1452 = vmul.f32 %v884, %v1375
    %v1453 = vmul.f32 %v885, %v1379
    %v1454 = vmul.f32 %v886, %v1375
    %v1455 = vmul.f32 %v887, %v1379
    %v1456 = vmul.f32 %v888, %v1375
    %v1457 = vmul.f32 %v889, %v1379
    %v1458 = vmul.f32 %v890, %v1375
    %v1459 = vmul.f32 %v891, %v1379
    %v1460 = vmul.f32 %v892, %v1375
    %v1461 = vmul.f32 %v893, %v1379
    %v1462 = vmul.f32 %v894, %v1375
    %v1463 = vmul.f32 %v895, %v1379
    %v1464 = vmul.f32 %v896, %v1375
    %v1465 = vmul.f32 %v897, %v1379
    %v1466 = vmul.f32 %v898, %v1375
    %v1467 = vmul.f32 %v899, %v1379
    %v1468 = vmul.f32 %v900, %v1375
    %v1469 = vmul.f32 %v901, %v1379
    %v1470 = vmul.f32 %v902, %v1375
    %v1471 = vmul.f32 %v903, %v1379
    %v1472 = vmul.f32 %v904, %v1375
    %v1473 = vmul.f32 %v905, %v1379
    %v1474 = vmul.f32 %v906, %v1375
    %v1475 = vmul.f32 %v907, %v1379
    %v1476 = vmul.f32 %v908, %v1375
    %v1477 = vmul.f32 %v909, %v1379
    %v1478 = vmul.f32 %v910, %v1375
    %v1479 = vmul.f32 %v911, %v1379
    %v1480 = vmul.f32 %v912, %v1375
    %v1481 = vmul.f32 %v913, %v1379
    %v1482 = vmul.f32 %v914, %v1375
    %v1483 = vmul.f32 %v915, %v1379
    %v1484 = vmul.f32 %v916, %v1375
    %v1485 = vmul.f32 %v917, %v1379
    %v1486 = vmul.f32 %v918, %v1375
    %v1487 = vmul.f32 %v919, %v1379
    %v1488 = vmul.f32 %v920, %v1375
    %v1489 = vmul.f32 %v921, %v1379
    %v1490 = vmul.f32 %v922, %v1375
    %v1491 = vmul.f32 %v923, %v1379
    %v1492 = vmul.f32 %v924, %v1375
    %v1493 = vmul.f32 %v925, %v1379
    %v1494 = vmul.f32 %v926, %v1375
    %v1495 = vmul.f32 %v927, %v1379
    %v1496 = vmul.f32 %v928, %v1375
    %v1497 = vmul.f32 %v929, %v1379
    %v1498 = vmul.f32 %v930, %v1375
    %v1499 = vmul.f32 %v931, %v1379
    %v1500 = vmul.f32 %v932, %v1375
    %v1501 = vmul.f32 %v933, %v1379
    %v1502 = vmul.f32 %v934, %v1375
    %v1503 = vmul.f32 %v935, %v1379
    %v1504 = vmul.f32 %v936, %v1375
    %v1505 = vmul.f32 %v937, %v1379
    %v1506 = vmul.f32 %v938, %v1375
    %v1507 = vmul.f32 %v939, %v1379
    %v1508 = vld [vmem:[%s4] sm:$0x3]
    %v1509 = vmul.f32 %v1078, %v1370
    %v1510 = vmul.f32 %v1079, %v1371
    %v1513 = vcombine.low %v1509, %v1510
    %v1515 = vunpack.c.l.s4 1966171168
    %v1516 = vunpack.c.0.s8 %v1515
    %v1517 = vlaneseq
    %v1518 = vshrl.u32 %v1517, 7
    %v1519 = vsub.s32 %v1516, %v1518
    %v1520 = vrot.slane %v1513, %v1519
    %v1522 = vunpack.c.l.s4 1966171168
    %v1523 = vunpack.c.0.s8 %v1522
    %v1524 = vlaneseq
    %v1525 = vshrl.u32 %v1524, 7
    %v1526 = vsub.s32 %v1523, %v1525
    %v1527 = vrot.slane %v1520, %v1526
    %v1529 = vsub.f32 %v1508, %v1527
    %v1531 = vlaneseq
    %v1532 = vshrl.u32 %v1531, 7
    %v1533 = vsub.s32 0, %v1532
    %v1534 = vrot.slane %v1529, %v1533
    %v1535 = vlaneseq
    %v1536 = vshrl.u32 %v1535, 7
    %v1537 = vsub.s32 1, %v1536
    %v1538 = vrot.slane %v1529, %v1537
    %v1541 = vadd.f32 %v1380, %v1534
    %v1542 = vadd.f32 %v1381, %v1538
    %v1543 = vadd.f32 %v1382, %v1534
    %v1544 = vadd.f32 %v1383, %v1538
    %v1545 = vadd.f32 %v1384, %v1534
    %v1546 = vadd.f32 %v1385, %v1538
    %v1547 = vadd.f32 %v1386, %v1534
    %v1548 = vadd.f32 %v1387, %v1538
    %v1549 = vadd.f32 %v1388, %v1534
    %v1550 = vadd.f32 %v1389, %v1538
    %v1551 = vadd.f32 %v1390, %v1534
    %v1552 = vadd.f32 %v1391, %v1538
    %v1553 = vadd.f32 %v1392, %v1534
    %v1554 = vadd.f32 %v1393, %v1538
    %v1555 = vadd.f32 %v1394, %v1534
    %v1556 = vadd.f32 %v1395, %v1538
    %v1557 = vadd.f32 %v1396, %v1534
    %v1558 = vadd.f32 %v1397, %v1538
    %v1559 = vadd.f32 %v1398, %v1534
    %v1560 = vadd.f32 %v1399, %v1538
    %v1561 = vadd.f32 %v1400, %v1534
    %v1562 = vadd.f32 %v1401, %v1538
    %v1563 = vadd.f32 %v1402, %v1534
    %v1564 = vadd.f32 %v1403, %v1538
    %v1565 = vadd.f32 %v1404, %v1534
    %v1566 = vadd.f32 %v1405, %v1538
    %v1567 = vadd.f32 %v1406, %v1534
    %v1568 = vadd.f32 %v1407, %v1538
    %v1569 = vadd.f32 %v1408, %v1534
    %v1570 = vadd.f32 %v1409, %v1538
    %v1571 = vadd.f32 %v1410, %v1534
    %v1572 = vadd.f32 %v1411, %v1538
    %v1573 = vadd.f32 %v1412, %v1534
    %v1574 = vadd.f32 %v1413, %v1538
    %v1575 = vadd.f32 %v1414, %v1534
    %v1576 = vadd.f32 %v1415, %v1538
    %v1577 = vadd.f32 %v1416, %v1534
    %v1578 = vadd.f32 %v1417, %v1538
    %v1579 = vadd.f32 %v1418, %v1534
    %v1580 = vadd.f32 %v1419, %v1538
    %v1581 = vadd.f32 %v1420, %v1534
    %v1582 = vadd.f32 %v1421, %v1538
    %v1583 = vadd.f32 %v1422, %v1534
    %v1584 = vadd.f32 %v1423, %v1538
    %v1585 = vadd.f32 %v1424, %v1534
    %v1586 = vadd.f32 %v1425, %v1538
    %v1587 = vadd.f32 %v1426, %v1534
    %v1588 = vadd.f32 %v1427, %v1538
    %v1589 = vadd.f32 %v1428, %v1534
    %v1590 = vadd.f32 %v1429, %v1538
    %v1591 = vadd.f32 %v1430, %v1534
    %v1592 = vadd.f32 %v1431, %v1538
    %v1593 = vadd.f32 %v1432, %v1534
    %v1594 = vadd.f32 %v1433, %v1538
    %v1595 = vadd.f32 %v1434, %v1534
    %v1596 = vadd.f32 %v1435, %v1538
    %v1597 = vadd.f32 %v1436, %v1534
    %v1598 = vadd.f32 %v1437, %v1538
    %v1599 = vadd.f32 %v1438, %v1534
    %v1600 = vadd.f32 %v1439, %v1538
    %v1601 = vadd.f32 %v1440, %v1534
    %v1602 = vadd.f32 %v1441, %v1538
    %v1603 = vadd.f32 %v1442, %v1534
    %v1604 = vadd.f32 %v1443, %v1538
    %v1605 = vadd.f32 %v1444, %v1534
    %v1606 = vadd.f32 %v1445, %v1538
    %v1607 = vadd.f32 %v1446, %v1534
    %v1608 = vadd.f32 %v1447, %v1538
    %v1609 = vadd.f32 %v1448, %v1534
    %v1610 = vadd.f32 %v1449, %v1538
    %v1611 = vadd.f32 %v1450, %v1534
    %v1612 = vadd.f32 %v1451, %v1538
    %v1613 = vadd.f32 %v1452, %v1534
    %v1614 = vadd.f32 %v1453, %v1538
    %v1615 = vadd.f32 %v1454, %v1534
    %v1616 = vadd.f32 %v1455, %v1538
    %v1617 = vadd.f32 %v1456, %v1534
    %v1618 = vadd.f32 %v1457, %v1538
    %v1619 = vadd.f32 %v1458, %v1534
    %v1620 = vadd.f32 %v1459, %v1538
    %v1621 = vadd.f32 %v1460, %v1534
    %v1622 = vadd.f32 %v1461, %v1538
    %v1623 = vadd.f32 %v1462, %v1534
    %v1624 = vadd.f32 %v1463, %v1538
    %v1625 = vadd.f32 %v1464, %v1534
    %v1626 = vadd.f32 %v1465, %v1538
    %v1627 = vadd.f32 %v1466, %v1534
    %v1628 = vadd.f32 %v1467, %v1538
    %v1629 = vadd.f32 %v1468, %v1534
    %v1630 = vadd.f32 %v1469, %v1538
    %v1631 = vadd.f32 %v1470, %v1534
    %v1632 = vadd.f32 %v1471, %v1538
    %v1633 = vadd.f32 %v1472, %v1534
    %v1634 = vadd.f32 %v1473, %v1538
    %v1635 = vadd.f32 %v1474, %v1534
    %v1636 = vadd.f32 %v1475, %v1538
    %v1637 = vadd.f32 %v1476, %v1534
    %v1638 = vadd.f32 %v1477, %v1538
    %v1639 = vadd.f32 %v1478, %v1534
    %v1640 = vadd.f32 %v1479, %v1538
    %v1641 = vadd.f32 %v1480, %v1534
    %v1642 = vadd.f32 %v1481, %v1538
    %v1643 = vadd.f32 %v1482, %v1534
    %v1644 = vadd.f32 %v1483, %v1538
    %v1645 = vadd.f32 %v1484, %v1534
    %v1646 = vadd.f32 %v1485, %v1538
    %v1647 = vadd.f32 %v1486, %v1534
    %v1648 = vadd.f32 %v1487, %v1538
    %v1649 = vadd.f32 %v1488, %v1534
    %v1650 = vadd.f32 %v1489, %v1538
    %v1651 = vadd.f32 %v1490, %v1534
    %v1652 = vadd.f32 %v1491, %v1538
    %v1653 = vadd.f32 %v1492, %v1534
    %v1654 = vadd.f32 %v1493, %v1538
    %v1655 = vadd.f32 %v1494, %v1534
    %v1656 = vadd.f32 %v1495, %v1538
    %v1657 = vadd.f32 %v1496, %v1534
    %v1658 = vadd.f32 %v1497, %v1538
    %v1659 = vadd.f32 %v1498, %v1534
    %v1660 = vadd.f32 %v1499, %v1538
    %v1661 = vadd.f32 %v1500, %v1534
    %v1662 = vadd.f32 %v1501, %v1538
    %v1663 = vadd.f32 %v1502, %v1534
    %v1664 = vadd.f32 %v1503, %v1538
    %v1665 = vadd.f32 %v1504, %v1534
    %v1666 = vadd.f32 %v1505, %v1538
    %v1667 = vadd.f32 %v1506, %v1534
    %v1668 = vadd.f32 %v1507, %v1538
    %v1669 = vpack.c.bf16 %v1543, %v1541
    %v1670 = vpack.c.bf16 %v1544, %v1542
    %v1671 = vpack.c.bf16 %v1547, %v1545
    %v1672 = vpack.c.bf16 %v1548, %v1546
    %v1673 = vpack.c.bf16 %v1551, %v1549
    %v1674 = vpack.c.bf16 %v1552, %v1550
    %v1675 = vpack.c.bf16 %v1555, %v1553
    %v1676 = vpack.c.bf16 %v1556, %v1554
    %v1677 = vpack.c.bf16 %v1559, %v1557
    %v1678 = vpack.c.bf16 %v1560, %v1558
    %v1679 = vpack.c.bf16 %v1563, %v1561
    %v1680 = vpack.c.bf16 %v1564, %v1562
    %v1681 = vpack.c.bf16 %v1567, %v1565
    %v1682 = vpack.c.bf16 %v1568, %v1566
    %v1683 = vpack.c.bf16 %v1571, %v1569
    %v1684 = vpack.c.bf16 %v1572, %v1570
    %v1685 = vpack.c.bf16 %v1575, %v1573
    %v1686 = vpack.c.bf16 %v1576, %v1574
    %v1687 = vpack.c.bf16 %v1579, %v1577
    %v1688 = vpack.c.bf16 %v1580, %v1578
    %v1689 = vpack.c.bf16 %v1583, %v1581
    %v1690 = vpack.c.bf16 %v1584, %v1582
    %v1691 = vpack.c.bf16 %v1587, %v1585
    %v1692 = vpack.c.bf16 %v1588, %v1586
    %v1693 = vpack.c.bf16 %v1591, %v1589
    %v1694 = vpack.c.bf16 %v1592, %v1590
    %v1695 = vpack.c.bf16 %v1595, %v1593
    %v1696 = vpack.c.bf16 %v1596, %v1594
    %v1697 = vpack.c.bf16 %v1599, %v1597
    %v1698 = vpack.c.bf16 %v1600, %v1598
    %v1699 = vpack.c.bf16 %v1603, %v1601
    %v1700 = vpack.c.bf16 %v1604, %v1602
    %v1701 = vpack.c.bf16 %v1607, %v1605
    %v1702 = vpack.c.bf16 %v1608, %v1606
    %v1703 = vpack.c.bf16 %v1611, %v1609
    %v1704 = vpack.c.bf16 %v1612, %v1610
    %v1705 = vpack.c.bf16 %v1615, %v1613
    %v1706 = vpack.c.bf16 %v1616, %v1614
    %v1707 = vpack.c.bf16 %v1619, %v1617
    %v1708 = vpack.c.bf16 %v1620, %v1618
    %v1709 = vpack.c.bf16 %v1623, %v1621
    %v1710 = vpack.c.bf16 %v1624, %v1622
    %v1711 = vpack.c.bf16 %v1627, %v1625
    %v1712 = vpack.c.bf16 %v1628, %v1626
    %v1713 = vpack.c.bf16 %v1631, %v1629
    %v1714 = vpack.c.bf16 %v1632, %v1630
    %v1715 = vpack.c.bf16 %v1635, %v1633
    %v1716 = vpack.c.bf16 %v1636, %v1634
    %v1717 = vpack.c.bf16 %v1639, %v1637
    %v1718 = vpack.c.bf16 %v1640, %v1638
    %v1719 = vpack.c.bf16 %v1643, %v1641
    %v1720 = vpack.c.bf16 %v1644, %v1642
    %v1721 = vpack.c.bf16 %v1647, %v1645
    %v1722 = vpack.c.bf16 %v1648, %v1646
    %v1723 = vpack.c.bf16 %v1651, %v1649
    %v1724 = vpack.c.bf16 %v1652, %v1650
    %v1725 = vpack.c.bf16 %v1655, %v1653
    %v1726 = vpack.c.bf16 %v1656, %v1654
    %v1727 = vpack.c.bf16 %v1659, %v1657
    %v1728 = vpack.c.bf16 %v1660, %v1658
    %v1729 = vpack.c.bf16 %v1663, %v1661
    %v1730 = vpack.c.bf16 %v1664, %v1662
    %v1731 = vpack.c.bf16 %v1667, %v1665
    %v1732 = vpack.c.bf16 %v1668, %v1666
    %v1733 = vld [vmem:[#allocation7] sm:$0xff]
    %v1734 = vld [vmem:[#allocation7 + $0x8] sm:$0xff]
    %v1735 = vld [vmem:[#allocation7 + $0x10] sm:$0xff]
    %v1736 = vld [vmem:[#allocation7 + $0x18] sm:$0xff]
    %v1737 = vld [vmem:[#allocation7 + $0x20] sm:$0xff]
    %v1738 = vld [vmem:[#allocation7 + $0x28] sm:$0xff]
    %v1739 = vld [vmem:[#allocation7 + $0x30] sm:$0xff]
    %v1740 = vld [vmem:[#allocation7 + $0x38] sm:$0xff]
    %v1741 = vld [vmem:[#allocation7 + $0x40] sm:$0xff]
    %v1742 = vld [vmem:[#allocation7 + $0x48] sm:$0xff]
    %v1743 = vld [vmem:[#allocation7 + $0x50] sm:$0xff]
    %v1744 = vld [vmem:[#allocation7 + $0x58] sm:$0xff]
    %v1745 = vld [vmem:[#allocation7 + $0x60] sm:$0xff]
    %v1746 = vld [vmem:[#allocation7 + $0x68] sm:$0xff]
    %v1747 = vld [vmem:[#allocation7 + $0x70] sm:$0xff]
    %v1748 = vld [vmem:[#allocation7 + $0x78] sm:$0xff]
    %v1749 = vld [vmem:[#allocation7 + $0x80] sm:$0xff]
    %v1750 = vld [vmem:[#allocation7 + $0x88] sm:$0xff]
    %v1751 = vld [vmem:[#allocation7 + $0x90] sm:$0xff]
    %v1752 = vld [vmem:[#allocation7 + $0x98] sm:$0xff]
    %v1753 = vld [vmem:[#allocation7 + $0xa0] sm:$0xff]
    %v1754 = vld [vmem:[#allocation7 + $0xa8] sm:$0xff]
    %v1755 = vld [vmem:[#allocation7 + $0xb0] sm:$0xff]
    %v1756 = vld [vmem:[#allocation7 + $0xb8] sm:$0xff]
    %v1757 = vld [vmem:[#allocation7 + $0xc0] sm:$0xff]
    %v1758 = vld [vmem:[#allocation7 + $0xc8] sm:$0xff]
    %v1759 = vld [vmem:[#allocation7 + $0xd0] sm:$0xff]
    %v1760 = vld [vmem:[#allocation7 + $0xd8] sm:$0xff]
    %v1761 = vld [vmem:[#allocation7 + $0xe0] sm:$0xff]
    %v1762 = vld [vmem:[#allocation7 + $0xe8] sm:$0xff]
    %v1763 = vld [vmem:[#allocation7 + $0xf0] sm:$0xff]
    %v1764 = vld [vmem:[#allocation7 + $0xf8] sm:$0xff]
    %v1765 = vld [vmem:[%s6] sm:$0x3]
    %v1767 = vlaneseq
    %v1768 = vshrl.u32 %v1767, 7
    %v1769 = vsub.s32 0, %v1768
    %v1770 = vrot.slane %v1765, %v1769
    %v1771 = vlaneseq
    %v1772 = vshrl.u32 %v1771, 7
    %v1773 = vsub.s32 1, %v1772
    %v1774 = vrot.slane %v1765, %v1773
    %v1809 = vunpack.c.l.b16 %v1733
    %v1810 = vunpack.c.h.b16 %v1733
    %v1811 = vunpack.c.l.b16 %v1734
    %v1812 = vunpack.c.h.b16 %v1734
    %v1813 = vunpack.c.l.b16 %v1735
    %v1814 = vunpack.c.h.b16 %v1735
    %v1815 = vunpack.c.l.b16 %v1736
    %v1816 = vunpack.c.h.b16 %v1736
    %v1817 = vunpack.c.l.b16 %v1737
    %v1818 = vunpack.c.h.b16 %v1737
    %v1819 = vunpack.c.l.b16 %v1738
    %v1820 = vunpack.c.h.b16 %v1738
    %v1821 = vunpack.c.l.b16 %v1739
    %v1822 = vunpack.c.h.b16 %v1739
    %v1823 = vunpack.c.l.b16 %v1740
    %v1824 = vunpack.c.h.b16 %v1740
    %v1825 = vunpack.c.l.b16 %v1741
    %v1826 = vunpack.c.h.b16 %v1741
    %v1827 = vunpack.c.l.b16 %v1742
    %v1828 = vunpack.c.h.b16 %v1742
    %v1829 = vunpack.c.l.b16 %v1743
    %v1830 = vunpack.c.h.b16 %v1743
    %v1831 = vunpack.c.l.b16 %v1744
    %v1832 = vunpack.c.h.b16 %v1744
    %v1833 = vunpack.c.l.b16 %v1745
    %v1834 = vunpack.c.h.b16 %v1745
    %v1835 = vunpack.c.l.b16 %v1746
    %v1836 = vunpack.c.h.b16 %v1746
    %v1837 = vunpack.c.l.b16 %v1747
    %v1838 = vunpack.c.h.b16 %v1747
    %v1839 = vunpack.c.l.b16 %v1748
    %v1840 = vunpack.c.h.b16 %v1748
    %v1841 = vunpack.c.l.b16 %v1749
    %v1842 = vunpack.c.h.b16 %v1749
    %v1843 = vunpack.c.l.b16 %v1750
    %v1844 = vunpack.c.h.b16 %v1750
    %v1845 = vunpack.c.l.b16 %v1751
    %v1846 = vunpack.c.h.b16 %v1751
    %v1847 = vunpack.c.l.b16 %v1752
    %v1848 = vunpack.c.h.b16 %v1752
    %v1849 = vunpack.c.l.b16 %v1753
    %v1850 = vunpack.c.h.b16 %v1753
    %v1851 = vunpack.c.l.b16 %v1754
    %v1852 = vunpack.c.h.b16 %v1754
    %v1853 = vunpack.c.l.b16 %v1755
    %v1854 = vunpack.c.h.b16 %v1755
    %v1855 = vunpack.c.l.b16 %v1756
    %v1856 = vunpack.c.h.b16 %v1756
    %v1857 = vunpack.c.l.b16 %v1757
    %v1858 = vunpack.c.h.b16 %v1757
    %v1859 = vunpack.c.l.b16 %v1758
    %v1860 = vunpack.c.h.b16 %v1758
    %v1861 = vunpack.c.l.b16 %v1759
    %v1862 = vunpack.c.h.b16 %v1759
    %v1863 = vunpack.c.l.b16 %v1760
    %v1864 = vunpack.c.h.b16 %v1760
    %v1865 = vunpack.c.l.b16 %v1761
    %v1866 = vunpack.c.h.b16 %v1761
    %v1867 = vunpack.c.l.b16 %v1762
    %v1868 = vunpack.c.h.b16 %v1762
    %v1869 = vunpack.c.l.b16 %v1763
    %v1870 = vunpack.c.h.b16 %v1763
    %v1871 = vunpack.c.l.b16 %v1764
    %v1872 = vunpack.c.h.b16 %v1764
    %v1873 = vpack.c.b16 %v1811, %v1809
    %v1874 = vpack.c.b16 %v1812, %v1810
    %v1875 = vpack.c.b16 %v1815, %v1813
    %v1876 = vpack.c.b16 %v1816, %v1814
    %v1877 = vpack.c.b16 %v1819, %v1817
    %v1878 = vpack.c.b16 %v1820, %v1818
    %v1879 = vpack.c.b16 %v1823, %v1821
    %v1880 = vpack.c.b16 %v1824, %v1822
    %v1881 = vpack.c.b16 %v1827, %v1825
    %v1882 = vpack.c.b16 %v1828, %v1826
    %v1883 = vpack.c.b16 %v1831, %v1829
    %v1884 = vpack.c.b16 %v1832, %v1830
    %v1885 = vpack.c.b16 %v1835, %v1833
    %v1886 = vpack.c.b16 %v1836, %v1834
    %v1887 = vpack.c.b16 %v1839, %v1837
    %v1888 = vpack.c.b16 %v1840, %v1838
    %v1889 = vpack.c.b16 %v1843, %v1841
    %v1890 = vpack.c.b16 %v1844, %v1842
    %v1891 = vpack.c.b16 %v1847, %v1845
    %v1892 = vpack.c.b16 %v1848, %v1846
    %v1893 = vpack.c.b16 %v1851, %v1849
    %v1894 = vpack.c.b16 %v1852, %v1850
    %v1895 = vpack.c.b16 %v1855, %v1853
    %v1896 = vpack.c.b16 %v1856, %v1854
    %v1897 = vpack.c.b16 %v1859, %v1857
    %v1898 = vpack.c.b16 %v1860, %v1858
    %v1899 = vpack.c.b16 %v1863, %v1861
    %v1900 = vpack.c.b16 %v1864, %v1862
    %v1901 = vpack.c.b16 %v1867, %v1865
    %v1902 = vpack.c.b16 %v1868, %v1866
    %v1903 = vpack.c.b16 %v1871, %v1869
    %v1904 = vpack.c.b16 %v1872, %v1870
    %1937 = vmatprep.subr.bf16.mxu0 %v1874
    %1938 = vmatpush1.bf16.msra.mxu0 %v1873
    %1939 = vmatprep.subr.bf16.mxu0 %v1876
    %1940 = vmatpush1.bf16.msra.mxu0 %v1875
    %1941 = vmatprep.subr.bf16.mxu0 %v1878
    %1942 = vmatpush1.bf16.msra.mxu0 %v1877
    %1943 = vmatprep.subr.bf16.mxu0 %v1880
    %1944 = vmatpush1.bf16.msra.mxu0 %v1879
    %1945 = vmatprep.subr.bf16.mxu0 %v1882
    %1946 = vmatpush1.bf16.msra.mxu0 %v1881
    %1947 = vmatprep.subr.bf16.mxu0 %v1884
    %1948 = vmatpush1.bf16.msra.mxu0 %v1883
    %1949 = vmatprep.subr.bf16.mxu0 %v1886
    %1950 = vmatpush1.bf16.msra.mxu0 %v1885
    %1951 = vmatprep.subr.bf16.mxu0 %v1888
    %1952 = vmatpush1.bf16.msra.mxu0 %v1887
    %1953 = vmatprep.subr.bf16.mxu0 %v1890
    %1954 = vmatpush1.bf16.msra.mxu0 %v1889
    %1955 = vmatprep.subr.bf16.mxu0 %v1892
    %1956 = vmatpush1.bf16.msra.mxu0 %v1891
    %1957 = vmatprep.subr.bf16.mxu0 %v1894
    %1958 = vmatpush1.bf16.msra.mxu0 %v1893
    %1959 = vmatprep.subr.bf16.mxu0 %v1896
    %1960 = vmatpush1.bf16.msra.mxu0 %v1895
    %1961 = vmatprep.subr.bf16.mxu0 %v1898
    %1962 = vmatpush1.bf16.msra.mxu0 %v1897
    %1963 = vmatprep.subr.bf16.mxu0 %v1900
    %1964 = vmatpush1.bf16.msra.mxu0 %v1899
    %1965 = vmatprep.subr.bf16.mxu0 %v1902
    %1966 = vmatpush1.bf16.msra.mxu0 %v1901
    %1967 = vmatprep.subr.bf16.mxu0 %v1904
    %1968 = vmatpush1.bf16.msra.mxu0 %v1903
    %1969 = vmatprep.mubr.bf16.mxu0 %v1670
    %1970 = vmatmul.mubr.bf16.gmra.mrb[0].mxu0 %v1669
    %v1971 = vpop.f32.mrb[0].mxu0
    %v1972 = vadd.f32 %v1770, %v1971
    %v1973 = vpop.f32.mrb[0].mxu0
    %v1974 = vadd.f32 %v1774, %v1973
    %v1975 = vpop.f32.mrb[0].mxu0
    %v1976 = vadd.f32 %v1770, %v1975
    %v1977 = vpop.f32.mrb[0].mxu0
    %v1978 = vadd.f32 %v1774, %v1977
    %1979 = vmatprep.mubr.bf16.mxu0 %v1672
    %1980 = vmatmul.mubr.bf16.gmra.mrb[0].mxu0 %v1671
    %v1981 = vpop.f32.mrb[0].mxu0
    %v1982 = vadd.f32 %v1770, %v1981
    %v1983 = vpop.f32.mrb[0].mxu0
    %v1984 = vadd.f32 %v1774, %v1983
    %v1985 = vpop.f32.mrb[0].mxu0
    %v1986 = vadd.f32 %v1770, %v1985
    %v1987 = vpop.f32.mrb[0].mxu0
    %v1988 = vadd.f32 %v1774, %v1987
    %1989 = vmatprep.mubr.bf16.mxu0 %v1674
    %1990 = vmatmul.mubr.bf16.gmra.mrb[0].mxu0 %v1673
    %v1991 = vpop.f32.mrb[0].mxu0
    %v1992 = vadd.f32 %v1770, %v1991
    %v1993 = vpop.f32.mrb[0].mxu0
    %v1994 = vadd.f32 %v1774, %v1993
    %v1995 = vpop.f32.mrb[0].mxu0
    %v1996 = vadd.f32 %v1770, %v1995
    %v1997 = vpop.f32.mrb[0].mxu0
    %v1998 = vadd.f32 %v1774, %v1997
    %1999 = vmatprep.mubr.bf16.mxu0 %v1676
    %2000 = vmatmul.mubr.bf16.gmra.mrb[0].mxu0 %v1675
    %v2001 = vpop.f32.mrb[0].mxu0
    %v2002 = vadd.f32 %v1770, %v2001
    %v2003 = vpop.f32.mrb[0].mxu0
    %v2004 = vadd.f32 %v1774, %v2003
    %v2005 = vpop.f32.mrb[0].mxu0
    %v2006 = vadd.f32 %v1770, %v2005
    %v2007 = vpop.f32.mrb[0].mxu0
    %v2008 = vadd.f32 %v1774, %v2007
    %2009 = vmatprep.mubr.bf16.mxu0 %v1678
    %2010 = vmatmul.mubr.bf16.gmra.mrb[0].mxu0 %v1677
    %v2011 = vpop.f32.mrb[0].mxu0
    %v2012 = vadd.f32 %v1770, %v2011
    %v2013 = vpop.f32.mrb[0].mxu0
    %v2014 = vadd.f32 %v1774, %v2013
    %v2015 = vpop.f32.mrb[0].mxu0
    %v2016 = vadd.f32 %v1770, %v2015
    %v2017 = vpop.f32.mrb[0].mxu0
    %v2018 = vadd.f32 %v1774, %v2017
    %2019 = vmatprep.mubr.bf16.mxu0 %v1680
    %2020 = vmatmul.mubr.bf16.gmra.mrb[0].mxu0 %v1679
    %v2021 = vpop.f32.mrb[0].mxu0
    %v2022 = vadd.f32 %v1770, %v2021
    %v2023 = vpop.f32.mrb[0].mxu0
    %v2024 = vadd.f32 %v1774, %v2023
    %v2025 = vpop.f32.mrb[0].mxu0
    %v2026 = vadd.f32 %v1770, %v2025
    %v2027 = vpop.f32.mrb[0].mxu0
    %v2028 = vadd.f32 %v1774, %v2027
    %2029 = vmatprep.mubr.bf16.mxu0 %v1682
    %2030 = vmatmul.mubr.bf16.gmra.mrb[0].mxu0 %v1681
    %v2031 = vpop.f32.mrb[0].mxu0
    %v2032 = vadd.f32 %v1770, %v2031
    %v2033 = vpop.f32.mrb[0].mxu0
    %v2034 = vadd.f32 %v1774, %v2033
    %v2035 = vpop.f32.mrb[0].mxu0
    %v2036 = vadd.f32 %v1770, %v2035
    %v2037 = vpop.f32.mrb[0].mxu0
    %v2038 = vadd.f32 %v1774, %v2037
    %2039 = vmatprep.mubr.bf16.mxu0 %v1684
    %2040 = vmatmul.mubr.bf16.gmra.mrb[0].mxu0 %v1683
    %v2041 = vpop.f32.mrb[0].mxu0
    %v2042 = vadd.f32 %v1770, %v2041
    %v2043 = vpop.f32.mrb[0].mxu0
    %v2044 = vadd.f32 %v1774, %v2043
    %v2045 = vpop.f32.mrb[0].mxu0
    %v2046 = vadd.f32 %v1770, %v2045
    %v2047 = vpop.f32.mrb[0].mxu0
    %v2048 = vadd.f32 %v1774, %v2047
    %2049 = vmatprep.mubr.bf16.mxu0 %v1686
    %2050 = vmatmul.mubr.bf16.gmra.mrb[0].mxu0 %v1685
    %v2051 = vpop.f32.mrb[0].mxu0
    %v2052 = vadd.f32 %v1770, %v2051
    %v2053 = vpop.f32.mrb[0].mxu0
    %v2054 = vadd.f32 %v1774, %v2053
    %v2055 = vpop.f32.mrb[0].mxu0
    %v2056 = vadd.f32 %v1770, %v2055
    %v2057 = vpop.f32.mrb[0].mxu0
    %v2058 = vadd.f32 %v1774, %v2057
    %2059 = vmatprep.mubr.bf16.mxu0 %v1688
    %2060 = vmatmul.mubr.bf16.gmra.mrb[0].mxu0 %v1687
    %v2061 = vpop.f32.mrb[0].mxu0
    %v2062 = vadd.f32 %v1770, %v2061
    %v2063 = vpop.f32.mrb[0].mxu0
    %v2064 = vadd.f32 %v1774, %v2063
    %v2065 = vpop.f32.mrb[0].mxu0
    %v2066 = vadd.f32 %v1770, %v2065
    %v2067 = vpop.f32.mrb[0].mxu0
    %v2068 = vadd.f32 %v1774, %v2067
    %2069 = vmatprep.mubr.bf16.mxu0 %v1690
    %2070 = vmatmul.mubr.bf16.gmra.mrb[0].mxu0 %v1689
    %v2071 = vpop.f32.mrb[0].mxu0
    %v2072 = vadd.f32 %v1770, %v2071
    %v2073 = vpop.f32.mrb[0].mxu0
    %v2074 = vadd.f32 %v1774, %v2073
    %v2075 = vpop.f32.mrb[0].mxu0
    %v2076 = vadd.f32 %v1770, %v2075
    %v2077 = vpop.f32.mrb[0].mxu0
    %v2078 = vadd.f32 %v1774, %v2077
    %2079 = vmatprep.mubr.bf16.mxu0 %v1692
    %2080 = vmatmul.mubr.bf16.gmra.mrb[0].mxu0 %v1691
    %v2081 = vpop.f32.mrb[0].mxu0
    %v2082 = vadd.f32 %v1770, %v2081
    %v2083 = vpop.f32.mrb[0].mxu0
    %v2084 = vadd.f32 %v1774, %v2083
    %v2085 = vpop.f32.mrb[0].mxu0
    %v2086 = vadd.f32 %v1770, %v2085
    %v2087 = vpop.f32.mrb[0].mxu0
    %v2088 = vadd.f32 %v1774, %v2087
    %2089 = vmatprep.mubr.bf16.mxu0 %v1694
    %2090 = vmatmul.mubr.bf16.gmra.mrb[0].mxu0 %v1693
    %v2091 = vpop.f32.mrb[0].mxu0
    %v2092 = vadd.f32 %v1770, %v2091
    %v2093 = vpop.f32.mrb[0].mxu0
    %v2094 = vadd.f32 %v1774, %v2093
    %v2095 = vpop.f32.mrb[0].mxu0
    %v2096 = vadd.f32 %v1770, %v2095
    %v2097 = vpop.f32.mrb[0].mxu0
    %v2098 = vadd.f32 %v1774, %v2097
    %2099 = vmatprep.mubr.bf16.mxu0 %v1696
    %2100 = vmatmul.mubr.bf16.gmra.mrb[0].mxu0 %v1695
    %v2101 = vpop.f32.mrb[0].mxu0
    %v2102 = vadd.f32 %v1770, %v2101
    %v2103 = vpop.f32.mrb[0].mxu0
    %v2104 = vadd.f32 %v1774, %v2103
    %v2105 = vpop.f32.mrb[0].mxu0
    %v2106 = vadd.f32 %v1770, %v2105
    %v2107 = vpop.f32.mrb[0].mxu0
    %v2108 = vadd.f32 %v1774, %v2107
    %2109 = vmatprep.mubr.bf16.mxu0 %v1698
    %2110 = vmatmul.mubr.bf16.gmra.mrb[0].mxu0 %v1697
    %v2111 = vpop.f32.mrb[0].mxu0
    %v2112 = vadd.f32 %v1770, %v2111
    %v2113 = vpop.f32.mrb[0].mxu0
    %v2114 = vadd.f32 %v1774, %v2113
    %v2115 = vpop.f32.mrb[0].mxu0
    %v2116 = vadd.f32 %v1770, %v2115
    %v2117 = vpop.f32.mrb[0].mxu0
    %v2118 = vadd.f32 %v1774, %v2117
    %2119 = vmatprep.mubr.bf16.mxu0 %v1700
    %2120 = vmatmul.mubr.bf16.gmra.mrb[0].mxu0 %v1699
    %v2121 = vpop.f32.mrb[0].mxu0
    %v2122 = vadd.f32 %v1770, %v2121
    %v2123 = vpop.f32.mrb[0].mxu0
    %v2124 = vadd.f32 %v1774, %v2123
    %v2125 = vpop.f32.mrb[0].mxu0
    %v2126 = vadd.f32 %v1770, %v2125
    %v2127 = vpop.f32.mrb[0].mxu0
    %v2128 = vadd.f32 %v1774, %v2127
    %2129 = vmatprep.mubr.bf16.mxu0 %v1702
    %2130 = vmatmul.mubr.bf16.gmra.mrb[0].mxu0 %v1701
    %v2131 = vpop.f32.mrb[0].mxu0
    %v2132 = vadd.f32 %v1770, %v2131
    %v2133 = vpop.f32.mrb[0].mxu0
    %v2134 = vadd.f32 %v1774, %v2133
    %v2135 = vpop.f32.mrb[0].mxu0
    %v2136 = vadd.f32 %v1770, %v2135
    %v2137 = vpop.f32.mrb[0].mxu0
    %v2138 = vadd.f32 %v1774, %v2137
    %2139 = vmatprep.mubr.bf16.mxu0 %v1704
    %2140 = vmatmul.mubr.bf16.gmra.mrb[0].mxu0 %v1703
    %v2141 = vpop.f32.mrb[0].mxu0
    %v2142 = vadd.f32 %v1770, %v2141
    %v2143 = vpop.f32.mrb[0].mxu0
    %v2144 = vadd.f32 %v1774, %v2143
    %v2145 = vpop.f32.mrb[0].mxu0
    %v2146 = vadd.f32 %v1770, %v2145
    %v2147 = vpop.f32.mrb[0].mxu0
    %v2148 = vadd.f32 %v1774, %v2147
    %2149 = vmatprep.mubr.bf16.mxu0 %v1706
    %2150 = vmatmul.mubr.bf16.gmra.mrb[0].mxu0 %v1705
    %v2151 = vpop.f32.mrb[0].mxu0
    %v2152 = vadd.f32 %v1770, %v2151
    %v2153 = vpop.f32.mrb[0].mxu0
    %v2154 = vadd.f32 %v1774, %v2153
    %v2155 = vpop.f32.mrb[0].mxu0
    %v2156 = vadd.f32 %v1770, %v2155
    %v2157 = vpop.f32.mrb[0].mxu0
    %v2158 = vadd.f32 %v1774, %v2157
    %2159 = vmatprep.mubr.bf16.mxu0 %v1708
    %2160 = vmatmul.mubr.bf16.gmra.mrb[0].mxu0 %v1707
    %v2161 = vpop.f32.mrb[0].mxu0
    %v2162 = vadd.f32 %v1770, %v2161
    %v2163 = vpop.f32.mrb[0].mxu0
    %v2164 = vadd.f32 %v1774, %v2163
    %v2165 = vpop.f32.mrb[0].mxu0
    %v2166 = vadd.f32 %v1770, %v2165
    %v2167 = vpop.f32.mrb[0].mxu0
    %v2168 = vadd.f32 %v1774, %v2167
    %2169 = vmatprep.mubr.bf16.mxu0 %v1710
    %2170 = vmatmul.mubr.bf16.gmra.mrb[0].mxu0 %v1709
    %v2171 = vpop.f32.mrb[0].mxu0
    %v2172 = vadd.f32 %v1770, %v2171
    %v2173 = vpop.f32.mrb[0].mxu0
    %v2174 = vadd.f32 %v1774, %v2173
    %v2175 = vpop.f32.mrb[0].mxu0
    %v2176 = vadd.f32 %v1770, %v2175
    %v2177 = vpop.f32.mrb[0].mxu0
    %v2178 = vadd.f32 %v1774, %v2177
    %2179 = vmatprep.mubr.bf16.mxu0 %v1712
    %2180 = vmatmul.mubr.bf16.gmra.mrb[0].mxu0 %v1711
    %v2181 = vpop.f32.mrb[0].mxu0
    %v2182 = vadd.f32 %v1770, %v2181
    %v2183 = vpop.f32.mrb[0].mxu0
    %v2184 = vadd.f32 %v1774, %v2183
    %v2185 = vpop.f32.mrb[0].mxu0
    %v2186 = vadd.f32 %v1770, %v2185
    %v2187 = vpop.f32.mrb[0].mxu0
    %v2188 = vadd.f32 %v1774, %v2187
    %2189 = vmatprep.mubr.bf16.mxu0 %v1714
    %2190 = vmatmul.mubr.bf16.gmra.mrb[0].mxu0 %v1713
    %v2191 = vpop.f32.mrb[0].mxu0
    %v2192 = vadd.f32 %v1770, %v2191
    %v2193 = vpop.f32.mrb[0].mxu0
    %v2194 = vadd.f32 %v1774, %v2193
    %v2195 = vpop.f32.mrb[0].mxu0
    %v2196 = vadd.f32 %v1770, %v2195
    %v2197 = vpop.f32.mrb[0].mxu0
    %v2198 = vadd.f32 %v1774, %v2197
    %2199 = vmatprep.mubr.bf16.mxu0 %v1716
    %2200 = vmatmul.mubr.bf16.gmra.mrb[0].mxu0 %v1715
    %v2201 = vpop.f32.mrb[0].mxu0
    %v2202 = vadd.f32 %v1770, %v2201
    %v2203 = vpop.f32.mrb[0].mxu0
    %v2204 = vadd.f32 %v1774, %v2203
    %v2205 = vpop.f32.mrb[0].mxu0
    %v2206 = vadd.f32 %v1770, %v2205
    %v2207 = vpop.f32.mrb[0].mxu0
    %v2208 = vadd.f32 %v1774, %v2207
    %2209 = vmatprep.mubr.bf16.mxu0 %v1718
    %2210 = vmatmul.mubr.bf16.gmra.mrb[0].mxu0 %v1717
    %v2211 = vpop.f32.mrb[0].mxu0
    %v2212 = vadd.f32 %v1770, %v2211
    %v2213 = vpop.f32.mrb[0].mxu0
    %v2214 = vadd.f32 %v1774, %v2213
    %v2215 = vpop.f32.mrb[0].mxu0
    %v2216 = vadd.f32 %v1770, %v2215
    %v2217 = vpop.f32.mrb[0].mxu0
    %v2218 = vadd.f32 %v1774, %v2217
    %2219 = vmatprep.mubr.bf16.mxu0 %v1720
    %2220 = vmatmul.mubr.bf16.gmra.mrb[0].mxu0 %v1719
    %v2221 = vpop.f32.mrb[0].mxu0
    %v2222 = vadd.f32 %v1770, %v2221
    %v2223 = vpop.f32.mrb[0].mxu0
    %v2224 = vadd.f32 %v1774, %v2223
    %v2225 = vpop.f32.mrb[0].mxu0
    %v2226 = vadd.f32 %v1770, %v2225
    %v2227 = vpop.f32.mrb[0].mxu0
    %v2228 = vadd.f32 %v1774, %v2227
    %2229 = vmatprep.mubr.bf16.mxu0 %v1722
    %2230 = vmatmul.mubr.bf16.gmra.mrb[0].mxu0 %v1721
    %v2231 = vpop.f32.mrb[0].mxu0
    %v2232 = vadd.f32 %v1770, %v2231
    %v2233 = vpop.f32.mrb[0].mxu0
    %v2234 = vadd.f32 %v1774, %v2233
    %v2235 = vpop.f32.mrb[0].mxu0
    %v2236 = vadd.f32 %v1770, %v2235
    %v2237 = vpop.f32.mrb[0].mxu0
    %v2238 = vadd.f32 %v1774, %v2237
    %2239 = vmatprep.mubr.bf16.mxu0 %v1724
    %2240 = vmatmul.mubr.bf16.gmra.mrb[0].mxu0 %v1723
    %v2241 = vpop.f32.mrb[0].mxu0
    %v2242 = vadd.f32 %v1770, %v2241
    %v2243 = vpop.f32.mrb[0].mxu0
    %v2244 = vadd.f32 %v1774, %v2243
    %v2245 = vpop.f32.mrb[0].mxu0
    %v2246 = vadd.f32 %v1770, %v2245
    %v2247 = vpop.f32.mrb[0].mxu0
    %v2248 = vadd.f32 %v1774, %v2247
    %2249 = vmatprep.mubr.bf16.mxu0 %v1726
    %2250 = vmatmul.mubr.bf16.gmra.mrb[0].mxu0 %v1725
    %v2251 = vpop.f32.mrb[0].mxu0
    %v2252 = vadd.f32 %v1770, %v2251
    %v2253 = vpop.f32.mrb[0].mxu0
    %v2254 = vadd.f32 %v1774, %v2253
    %v2255 = vpop.f32.mrb[0].mxu0
    %v2256 = vadd.f32 %v1770, %v2255
    %v2257 = vpop.f32.mrb[0].mxu0
    %v2258 = vadd.f32 %v1774, %v2257
    %2259 = vmatprep.mubr.bf16.mxu0 %v1728
    %2260 = vmatmul.mubr.bf16.gmra.mrb[0].mxu0 %v1727
    %v2261 = vpop.f32.mrb[0].mxu0
    %v2262 = vadd.f32 %v1770, %v2261
    %v2263 = vpop.f32.mrb[0].mxu0
    %v2264 = vadd.f32 %v1774, %v2263
    %v2265 = vpop.f32.mrb[0].mxu0
    %v2266 = vadd.f32 %v1770, %v2265
    %v2267 = vpop.f32.mrb[0].mxu0
    %v2268 = vadd.f32 %v1774, %v2267
    %2269 = vmatprep.mubr.bf16.mxu0 %v1730
    %2270 = vmatmul.mubr.bf16.gmra.mrb[0].mxu0 %v1729
    %v2271 = vpop.f32.mrb[0].mxu0
    %v2272 = vadd.f32 %v1770, %v2271
    %v2273 = vpop.f32.mrb[0].mxu0
    %v2274 = vadd.f32 %v1774, %v2273
    %v2275 = vpop.f32.mrb[0].mxu0
    %v2276 = vadd.f32 %v1770, %v2275
    %v2277 = vpop.f32.mrb[0].mxu0
    %v2278 = vadd.f32 %v1774, %v2277
    %2279 = vmatprep.mubr.bf16.mxu0 %v1732
    %2280 = vmatmul.mubr.bf16.gmra.mrb[0].mxu0 %v1731
    %v2281 = vpop.f32.mrb[0].mxu0
    %v2282 = vadd.f32 %v1770, %v2281
    %v2283 = vpop.f32.mrb[0].mxu0
    %v2284 = vadd.f32 %v1774, %v2283
    %v2285 = vpop.f32.mrb[0].mxu0
    %v2286 = vadd.f32 %v1770, %v2285
    %v2287 = vpop.f32.mrb[0].mxu0
    %v2288 = vadd.f32 %v1774, %v2287
    %2289 = vdwg.mxu0
    %v2290 = vmax.f32 %v1972, 0.0
    %v2291 = vmax.f32 %v1974, 0.0
    %v2292 = vmax.f32 %v1976, 0.0
    %v2293 = vmax.f32 %v1978, 0.0
    %v2294 = vmax.f32 %v1982, 0.0
    %v2295 = vmax.f32 %v1984, 0.0
    %v2296 = vmax.f32 %v1986, 0.0
    %v2297 = vmax.f32 %v1988, 0.0
    %v2298 = vmax.f32 %v1992, 0.0
    %v2299 = vmax.f32 %v1994, 0.0
    %v2300 = vmax.f32 %v1996, 0.0
    %v2301 = vmax.f32 %v1998, 0.0
    %v2302 = vmax.f32 %v2002, 0.0
    %v2303 = vmax.f32 %v2004, 0.0
    %v2304 = vmax.f32 %v2006, 0.0
    %v2305 = vmax.f32 %v2008, 0.0
    %v2306 = vmax.f32 %v2012, 0.0
    %v2307 = vmax.f32 %v2014, 0.0
    %v2308 = vmax.f32 %v2016, 0.0
    %v2309 = vmax.f32 %v2018, 0.0
    %v2310 = vmax.f32 %v2022, 0.0
    %v2311 = vmax.f32 %v2024, 0.0
    %v2312 = vmax.f32 %v2026, 0.0
    %v2313 = vmax.f32 %v2028, 0.0
    %v2314 = vmax.f32 %v2032, 0.0
    %v2315 = vmax.f32 %v2034, 0.0
    %v2316 = vmax.f32 %v2036, 0.0
    %v2317 = vmax.f32 %v2038, 0.0
    %v2318 = vmax.f32 %v2042, 0.0
    %v2319 = vmax.f32 %v2044, 0.0
    %v2320 = vmax.f32 %v2046, 0.0
    %v2321 = vmax.f32 %v2048, 0.0
    %v2322 = vmax.f32 %v2052, 0.0
    %v2323 = vmax.f32 %v2054, 0.0
    %v2324 = vmax.f32 %v2056, 0.0
    %v2325 = vmax.f32 %v2058, 0.0
    %v2326 = vmax.f32 %v2062, 0.0
    %v2327 = vmax.f32 %v2064, 0.0
    %v2328 = vmax.f32 %v2066, 0.0
    %v2329 = vmax.f32 %v2068, 0.0
    %v2330 = vmax.f32 %v2072, 0.0
    %v2331 = vmax.f32 %v2074, 0.0
    %v2332 = vmax.f32 %v2076, 0.0
    %v2333 = vmax.f32 %v2078, 0.0
    %v2334 = vmax.f32 %v2082, 0.0
    %v2335 = vmax.f32 %v2084, 0.0
    %v2336 = vmax.f32 %v2086, 0.0
    %v2337 = vmax.f32 %v2088, 0.0
    %v2338 = vmax.f32 %v2092, 0.0
    %v2339 = vmax.f32 %v2094, 0.0
    %v2340 = vmax.f32 %v2096, 0.0
    %v2341 = vmax.f32 %v2098, 0.0
    %v2342 = vmax.f32 %v2102, 0.0
    %v2343 = vmax.f32 %v2104, 0.0
    %v2344 = vmax.f32 %v2106, 0.0
    %v2345 = vmax.f32 %v2108, 0.0
    %v2346 = vmax.f32 %v2112, 0.0
    %v2347 = vmax.f32 %v2114, 0.0
    %v2348 = vmax.f32 %v2116, 0.0
    %v2349 = vmax.f32 %v2118, 0.0
    %v2350 = vmax.f32 %v2122, 0.0
    %v2351 = vmax.f32 %v2124, 0.0
    %v2352 = vmax.f32 %v2126, 0.0
    %v2353 = vmax.f32 %v2128, 0.0
    %v2354 = vmax.f32 %v2132, 0.0
    %v2355 = vmax.f32 %v2134, 0.0
    %v2356 = vmax.f32 %v2136, 0.0
    %v2357 = vmax.f32 %v2138, 0.0
    %v2358 = vmax.f32 %v2142, 0.0
    %v2359 = vmax.f32 %v2144, 0.0
    %v2360 = vmax.f32 %v2146, 0.0
    %v2361 = vmax.f32 %v2148, 0.0
    %v2362 = vmax.f32 %v2152, 0.0
    %v2363 = vmax.f32 %v2154, 0.0
    %v2364 = vmax.f32 %v2156, 0.0
    %v2365 = vmax.f32 %v2158, 0.0
    %v2366 = vmax.f32 %v2162, 0.0
    %v2367 = vmax.f32 %v2164, 0.0
    %v2368 = vmax.f32 %v2166, 0.0
    %v2369 = vmax.f32 %v2168, 0.0
    %v2370 = vmax.f32 %v2172, 0.0
    %v2371 = vmax.f32 %v2174, 0.0
    %v2372 = vmax.f32 %v2176, 0.0
    %v2373 = vmax.f32 %v2178, 0.0
    %v2374 = vmax.f32 %v2182, 0.0
    %v2375 = vmax.f32 %v2184, 0.0
    %v2376 = vmax.f32 %v2186, 0.0
    %v2377 = vmax.f32 %v2188, 0.0
    %v2378 = vmax.f32 %v2192, 0.0
    %v2379 = vmax.f32 %v2194, 0.0
    %v2380 = vmax.f32 %v2196, 0.0
    %v2381 = vmax.f32 %v2198, 0.0
    %v2382 = vmax.f32 %v2202, 0.0
    %v2383 = vmax.f32 %v2204, 0.0
    %v2384 = vmax.f32 %v2206, 0.0
    %v2385 = vmax.f32 %v2208, 0.0
    %v2386 = vmax.f32 %v2212, 0.0
    %v2387 = vmax.f32 %v2214, 0.0
    %v2388 = vmax.f32 %v2216, 0.0
    %v2389 = vmax.f32 %v2218, 0.0
    %v2390 = vmax.f32 %v2222, 0.0
    %v2391 = vmax.f32 %v2224, 0.0
    %v2392 = vmax.f32 %v2226, 0.0
    %v2393 = vmax.f32 %v2228, 0.0
    %v2394 = vmax.f32 %v2232, 0.0
    %v2395 = vmax.f32 %v2234, 0.0
    %v2396 = vmax.f32 %v2236, 0.0
    %v2397 = vmax.f32 %v2238, 0.0
    %v2398 = vmax.f32 %v2242, 0.0
    %v2399 = vmax.f32 %v2244, 0.0
    %v2400 = vmax.f32 %v2246, 0.0
    %v2401 = vmax.f32 %v2248, 0.0
    %v2402 = vmax.f32 %v2252, 0.0
    %v2403 = vmax.f32 %v2254, 0.0
    %v2404 = vmax.f32 %v2256, 0.0
    %v2405 = vmax.f32 %v2258, 0.0
    %v2406 = vmax.f32 %v2262, 0.0
    %v2407 = vmax.f32 %v2264, 0.0
    %v2408 = vmax.f32 %v2266, 0.0
    %v2409 = vmax.f32 %v2268, 0.0
    %v2410 = vmax.f32 %v2272, 0.0
    %v2411 = vmax.f32 %v2274, 0.0
    %v2412 = vmax.f32 %v2276, 0.0
    %v2413 = vmax.f32 %v2278, 0.0
    %v2414 = vmax.f32 %v2282, 0.0
    %v2415 = vmax.f32 %v2284, 0.0
    %v2416 = vmax.f32 %v2286, 0.0
    %v2417 = vmax.f32 %v2288, 0.0
    %v2418 = vadd.f32 %v2290, %v2292
    %v2419 = vadd.f32 %v2418, %v2294
    %v2420 = vadd.f32 %v2419, %v2296
    %v2421 = vadd.f32 %v2420, %v2298
    %v2422 = vadd.f32 %v2421, %v2300
    %v2423 = vadd.f32 %v2422, %v2302
    %v2424 = vadd.f32 %v2423, %v2304
    %v2425 = vadd.f32 %v2424, %v2306
    %v2426 = vadd.f32 %v2425, %v2308
    %v2427 = vadd.f32 %v2426, %v2310
    %v2428 = vadd.f32 %v2427, %v2312
    %v2429 = vadd.f32 %v2428, %v2314
    %v2430 = vadd.f32 %v2429, %v2316
    %v2431 = vadd.f32 %v2430, %v2318
    %v2432 = vadd.f32 %v2431, %v2320
    %v2433 = vadd.f32 %v2432, %v2322
    %v2434 = vadd.f32 %v2433, %v2324
    %v2435 = vadd.f32 %v2434, %v2326
    %v2436 = vadd.f32 %v2435, %v2328
    %v2437 = vadd.f32 %v2436, %v2330
    %v2438 = vadd.f32 %v2437, %v2332
    %v2439 = vadd.f32 %v2438, %v2334
    %v2440 = vadd.f32 %v2439, %v2336
    %v2441 = vadd.f32 %v2440, %v2338
    %v2442 = vadd.f32 %v2441, %v2340
    %v2443 = vadd.f32 %v2442, %v2342
    %v2444 = vadd.f32 %v2443, %v2344
    %v2445 = vadd.f32 %v2444, %v2346
    %v2446 = vadd.f32 %v2445, %v2348
    %v2447 = vadd.f32 %v2446, %v2350
    %v2448 = vadd.f32 %v2447, %v2352
    %v2449 = vadd.f32 %v2448, %v2354
    %v2450 = vadd.f32 %v2449, %v2356
    %v2451 = vadd.f32 %v2450, %v2358
    %v2452 = vadd.f32 %v2451, %v2360
    %v2453 = vadd.f32 %v2452, %v2362
    %v2454 = vadd.f32 %v2453, %v2364
    %v2455 = vadd.f32 %v2454, %v2366
    %v2456 = vadd.f32 %v2455, %v2368
    %v2457 = vadd.f32 %v2456, %v2370
    %v2458 = vadd.f32 %v2457, %v2372
    %v2459 = vadd.f32 %v2458, %v2374
    %v2460 = vadd.f32 %v2459, %v2376
    %v2461 = vadd.f32 %v2460, %v2378
    %v2462 = vadd.f32 %v2461, %v2380
    %v2463 = vadd.f32 %v2462, %v2382
    %v2464 = vadd.f32 %v2463, %v2384
    %v2465 = vadd.f32 %v2464, %v2386
    %v2466 = vadd.f32 %v2465, %v2388
    %v2467 = vadd.f32 %v2466, %v2390
    %v2468 = vadd.f32 %v2467, %v2392
    %v2469 = vadd.f32 %v2468, %v2394
    %v2470 = vadd.f32 %v2469, %v2396
    %v2471 = vadd.f32 %v2470, %v2398
    %v2472 = vadd.f32 %v2471, %v2400
    %v2473 = vadd.f32 %v2472, %v2402
    %v2474 = vadd.f32 %v2473, %v2404
    %v2475 = vadd.f32 %v2474, %v2406
    %v2476 = vadd.f32 %v2475, %v2408
    %v2477 = vadd.f32 %v2476, %v2410
    %v2478 = vadd.f32 %v2477, %v2412
    %v2479 = vadd.f32 %v2478, %v2414
    %v2480 = vadd.f32 %v2479, %v2416
    %v2481 = vrot.slane %v2480, 4
    %v2482 = vadd.f32 %v2480, %v2481
    %v2483 = vrot.slane %v2482, 2
    %v2484 = vadd.f32 %v2482, %v2483
    %v2485 = vrot.slane %v2484, 1
    %v2486 = vadd.f32 %v2484, %v2485
    %v2487 = vadd.f32 %v2291, %v2293
    %v2488 = vadd.f32 %v2487, %v2295
    %v2489 = vadd.f32 %v2488, %v2297
    %v2490 = vadd.f32 %v2489, %v2299
    %v2491 = vadd.f32 %v2490, %v2301
    %v2492 = vadd.f32 %v2491, %v2303
    %v2493 = vadd.f32 %v2492, %v2305
    %v2494 = vadd.f32 %v2493, %v2307
    %v2495 = vadd.f32 %v2494, %v2309
    %v2496 = vadd.f32 %v2495, %v2311
    %v2497 = vadd.f32 %v2496, %v2313
    %v2498 = vadd.f32 %v2497, %v2315
    %v2499 = vadd.f32 %v2498, %v2317
    %v2500 = vadd.f32 %v2499, %v2319
    %v2501 = vadd.f32 %v2500, %v2321
    %v2502 = vadd.f32 %v2501, %v2323
    %v2503 = vadd.f32 %v2502, %v2325
    %v2504 = vadd.f32 %v2503, %v2327
    %v2505 = vadd.f32 %v2504, %v2329
    %v2506 = vadd.f32 %v2505, %v2331
    %v2507 = vadd.f32 %v2506, %v2333
    %v2508 = vadd.f32 %v2507, %v2335
    %v2509 = vadd.f32 %v2508, %v2337
    %v2510 = vadd.f32 %v2509, %v2339
    %v2511 = vadd.f32 %v2510, %v2341
    %v2512 = vadd.f32 %v2511, %v2343
    %v2513 = vadd.f32 %v2512, %v2345
    %v2514 = vadd.f32 %v2513, %v2347
    %v2515 = vadd.f32 %v2514, %v2349
    %v2516 = vadd.f32 %v2515, %v2351
    %v2517 = vadd.f32 %v2516, %v2353
    %v2518 = vadd.f32 %v2517, %v2355
    %v2519 = vadd.f32 %v2518, %v2357
    %v2520 = vadd.f32 %v2519, %v2359
    %v2521 = vadd.f32 %v2520, %v2361
    %v2522 = vadd.f32 %v2521, %v2363
    %v2523 = vadd.f32 %v2522, %v2365
    %v2524 = vadd.f32 %v2523, %v2367
    %v2525 = vadd.f32 %v2524, %v2369
    %v2526 = vadd.f32 %v2525, %v2371
    %v2527 = vadd.f32 %v2526, %v2373
    %v2528 = vadd.f32 %v2527, %v2375
    %v2529 = vadd.f32 %v2528, %v2377
    %v2530 = vadd.f32 %v2529, %v2379
    %v2531 = vadd.f32 %v2530, %v2381
    %v2532 = vadd.f32 %v2531, %v2383
    %v2533 = vadd.f32 %v2532, %v2385
    %v2534 = vadd.f32 %v2533, %v2387
    %v2535 = vadd.f32 %v2534, %v2389
    %v2536 = vadd.f32 %v2535, %v2391
    %v2537 = vadd.f32 %v2536, %v2393
    %v2538 = vadd.f32 %v2537, %v2395
    %v2539 = vadd.f32 %v2538, %v2397
    %v2540 = vadd.f32 %v2539, %v2399
    %v2541 = vadd.f32 %v2540, %v2401
    %v2542 = vadd.f32 %v2541, %v2403
    %v2543 = vadd.f32 %v2542, %v2405
    %v2544 = vadd.f32 %v2543, %v2407
    %v2545 = vadd.f32 %v2544, %v2409
    %v2546 = vadd.f32 %v2545, %v2411
    %v2547 = vadd.f32 %v2546, %v2413
    %v2548 = vadd.f32 %v2547, %v2415
    %v2549 = vadd.f32 %v2548, %v2417
    %v2550 = vrot.slane %v2549, 4
    %v2551 = vadd.f32 %v2549, %v2550
    %v2552 = vrot.slane %v2551, 2
    %v2553 = vadd.f32 %v2551, %v2552
    %v2554 = vrot.slane %v2553, 1
    %v2555 = vadd.f32 %v2553, %v2554
    %v2556 = vmul.f32 %v2486, 0.001953125
    %v2557 = vmul.f32 %v2555, 0.001953125
    %v2558 = vmul.f32 %v2290, %v2290
    %v2559 = vmul.f32 %v2291, %v2291
    %v2560 = vmul.f32 %v2292, %v2292
    %v2561 = vmul.f32 %v2293, %v2293
    %v2562 = vmul.f32 %v2294, %v2294
    %v2563 = vmul.f32 %v2295, %v2295
    %v2564 = vmul.f32 %v2296, %v2296
    %v2565 = vmul.f32 %v2297, %v2297
    %v2566 = vmul.f32 %v2298, %v2298
    %v2567 = vmul.f32 %v2299, %v2299
    %v2568 = vmul.f32 %v2300, %v2300
    %v2569 = vmul.f32 %v2301, %v2301
    %v2570 = vmul.f32 %v2302, %v2302
    %v2571 = vmul.f32 %v2303, %v2303
    %v2572 = vmul.f32 %v2304, %v2304
    %v2573 = vmul.f32 %v2305, %v2305
    %v2574 = vmul.f32 %v2306, %v2306
    %v2575 = vmul.f32 %v2307, %v2307
    %v2576 = vmul.f32 %v2308, %v2308
    %v2577 = vmul.f32 %v2309, %v2309
    %v2578 = vmul.f32 %v2310, %v2310
    %v2579 = vmul.f32 %v2311, %v2311
    %v2580 = vmul.f32 %v2312, %v2312
    %v2581 = vmul.f32 %v2313, %v2313
    %v2582 = vmul.f32 %v2314, %v2314
    %v2583 = vmul.f32 %v2315, %v2315
    %v2584 = vmul.f32 %v2316, %v2316
    %v2585 = vmul.f32 %v2317, %v2317
    %v2586 = vmul.f32 %v2318, %v2318
    %v2587 = vmul.f32 %v2319, %v2319
    %v2588 = vmul.f32 %v2320, %v2320
    %v2589 = vmul.f32 %v2321, %v2321
    %v2590 = vmul.f32 %v2322, %v2322
    %v2591 = vmul.f32 %v2323, %v2323
    %v2592 = vmul.f32 %v2324, %v2324
    %v2593 = vmul.f32 %v2325, %v2325
    %v2594 = vmul.f32 %v2326, %v2326
    %v2595 = vmul.f32 %v2327, %v2327
    %v2596 = vmul.f32 %v2328, %v2328
    %v2597 = vmul.f32 %v2329, %v2329
    %v2598 = vmul.f32 %v2330, %v2330
    %v2599 = vmul.f32 %v2331, %v2331
    %v2600 = vmul.f32 %v2332, %v2332
    %v2601 = vmul.f32 %v2333, %v2333
    %v2602 = vmul.f32 %v2334, %v2334
    %v2603 = vmul.f32 %v2335, %v2335
    %v2604 = vmul.f32 %v2336, %v2336
    %v2605 = vmul.f32 %v2337, %v2337
    %v2606 = vmul.f32 %v2338, %v2338
    %v2607 = vmul.f32 %v2339, %v2339
    %v2608 = vmul.f32 %v2340, %v2340
    %v2609 = vmul.f32 %v2341, %v2341
    %v2610 = vmul.f32 %v2342, %v2342
    %v2611 = vmul.f32 %v2343, %v2343
    %v2612 = vmul.f32 %v2344, %v2344
    %v2613 = vmul.f32 %v2345, %v2345
    %v2614 = vmul.f32 %v2346, %v2346
    %v2615 = vmul.f32 %v2347, %v2347
    %v2616 = vmul.f32 %v2348, %v2348
    %v2617 = vmul.f32 %v2349, %v2349
    %v2618 = vmul.f32 %v2350, %v2350
    %v2619 = vmul.f32 %v2351, %v2351
    %v2620 = vmul.f32 %v2352, %v2352
    %v2621 = vmul.f32 %v2353, %v2353
    %v2622 = vmul.f32 %v2354, %v2354
    %v2623 = vmul.f32 %v2355, %v2355
    %v2624 = vmul.f32 %v2356, %v2356
    %v2625 = vmul.f32 %v2357, %v2357
    %v2626 = vmul.f32 %v2358, %v2358
    %v2627 = vmul.f32 %v2359, %v2359
    %v2628 = vmul.f32 %v2360, %v2360
    %v2629 = vmul.f32 %v2361, %v2361
    %v2630 = vmul.f32 %v2362, %v2362
    %v2631 = vmul.f32 %v2363, %v2363
    %v2632 = vmul.f32 %v2364, %v2364
    %v2633 = vmul.f32 %v2365, %v2365
    %v2634 = vmul.f32 %v2366, %v2366
    %v2635 = vmul.f32 %v2367, %v2367
    %v2636 = vmul.f32 %v2368, %v2368
    %v2637 = vmul.f32 %v2369, %v2369
    %v2638 = vmul.f32 %v2370, %v2370
    %v2639 = vmul.f32 %v2371, %v2371
    %v2640 = vmul.f32 %v2372, %v2372
    %v2641 = vmul.f32 %v2373, %v2373
    %v2642 = vmul.f32 %v2374, %v2374
    %v2643 = vmul.f32 %v2375, %v2375
    %v2644 = vmul.f32 %v2376, %v2376
    %v2645 = vmul.f32 %v2377, %v2377
    %v2646 = vmul.f32 %v2378, %v2378
    %v2647 = vmul.f32 %v2379, %v2379
    %v2648 = vmul.f32 %v2380, %v2380
    %v2649 = vmul.f32 %v2381, %v2381
    %v2650 = vmul.f32 %v2382, %v2382
    %v2651 = vmul.f32 %v2383, %v2383
    %v2652 = vmul.f32 %v2384, %v2384
    %v2653 = vmul.f32 %v2385, %v2385
    %v2654 = vmul.f32 %v2386, %v2386
    %v2655 = vmul.f32 %v2387, %v2387
    %v2656 = vmul.f32 %v2388, %v2388
    %v2657 = vmul.f32 %v2389, %v2389
    %v2658 = vmul.f32 %v2390, %v2390
    %v2659 = vmul.f32 %v2391, %v2391
    %v2660 = vmul.f32 %v2392, %v2392
    %v2661 = vmul.f32 %v2393, %v2393
    %v2662 = vmul.f32 %v2394, %v2394
    %v2663 = vmul.f32 %v2395, %v2395
    %v2664 = vmul.f32 %v2396, %v2396
    %v2665 = vmul.f32 %v2397, %v2397
    %v2666 = vmul.f32 %v2398, %v2398
    %v2667 = vmul.f32 %v2399, %v2399
    %v2668 = vmul.f32 %v2400, %v2400
    %v2669 = vmul.f32 %v2401, %v2401
    %v2670 = vmul.f32 %v2402, %v2402
    %v2671 = vmul.f32 %v2403, %v2403
    %v2672 = vmul.f32 %v2404, %v2404
    %v2673 = vmul.f32 %v2405, %v2405
    %v2674 = vmul.f32 %v2406, %v2406
    %v2675 = vmul.f32 %v2407, %v2407
    %v2676 = vmul.f32 %v2408, %v2408
    %v2677 = vmul.f32 %v2409, %v2409
    %v2678 = vmul.f32 %v2410, %v2410
    %v2679 = vmul.f32 %v2411, %v2411
    %v2680 = vmul.f32 %v2412, %v2412
    %v2681 = vmul.f32 %v2413, %v2413
    %v2682 = vmul.f32 %v2414, %v2414
    %v2683 = vmul.f32 %v2415, %v2415
    %v2684 = vmul.f32 %v2416, %v2416
    %v2685 = vmul.f32 %v2417, %v2417
    %v2686 = vadd.f32 %v2558, %v2560
    %v2687 = vadd.f32 %v2686, %v2562
    %v2688 = vadd.f32 %v2687, %v2564
    %v2689 = vadd.f32 %v2688, %v2566
    %v2690 = vadd.f32 %v2689, %v2568
    %v2691 = vadd.f32 %v2690, %v2570
    %v2692 = vadd.f32 %v2691, %v2572
    %v2693 = vadd.f32 %v2692, %v2574
    %v2694 = vadd.f32 %v2693, %v2576
    %v2695 = vadd.f32 %v2694, %v2578
    %v2696 = vadd.f32 %v2695, %v2580
    %v2697 = vadd.f32 %v2696, %v2582
    %v2698 = vadd.f32 %v2697, %v2584
    %v2699 = vadd.f32 %v2698, %v2586
    %v2700 = vadd.f32 %v2699, %v2588
    %v2701 = vadd.f32 %v2700, %v2590
    %v2702 = vadd.f32 %v2701, %v2592
    %v2703 = vadd.f32 %v2702, %v2594
    %v2704 = vadd.f32 %v2703, %v2596
    %v2705 = vadd.f32 %v2704, %v2598
    %v2706 = vadd.f32 %v2705, %v2600
    %v2707 = vadd.f32 %v2706, %v2602
    %v2708 = vadd.f32 %v2707, %v2604
    %v2709 = vadd.f32 %v2708, %v2606
    %v2710 = vadd.f32 %v2709, %v2608
    %v2711 = vadd.f32 %v2710, %v2610
    %v2712 = vadd.f32 %v2711, %v2612
    %v2713 = vadd.f32 %v2712, %v2614
    %v2714 = vadd.f32 %v2713, %v2616
    %v2715 = vadd.f32 %v2714, %v2618
    %v2716 = vadd.f32 %v2715, %v2620
    %v2717 = vadd.f32 %v2716, %v2622
    %v2718 = vadd.f32 %v2717, %v2624
    %v2719 = vadd.f32 %v2718, %v2626
    %v2720 = vadd.f32 %v2719, %v2628
    %v2721 = vadd.f32 %v2720, %v2630
    %v2722 = vadd.f32 %v2721, %v2632
    %v2723 = vadd.f32 %v2722, %v2634
    %v2724 = vadd.f32 %v2723, %v2636
    %v2725 = vadd.f32 %v2724, %v2638
    %v2726 = vadd.f32 %v2725, %v2640
    %v2727 = vadd.f32 %v2726, %v2642
    %v2728 = vadd.f32 %v2727, %v2644
    %v2729 = vadd.f32 %v2728, %v2646
    %v2730 = vadd.f32 %v2729, %v2648
    %v2731 = vadd.f32 %v2730, %v2650
    %v2732 = vadd.f32 %v2731, %v2652
    %v2733 = vadd.f32 %v2732, %v2654
    %v2734 = vadd.f32 %v2733, %v2656
    %v2735 = vadd.f32 %v2734, %v2658
    %v2736 = vadd.f32 %v2735, %v2660
    %v2737 = vadd.f32 %v2736, %v2662
    %v2738 = vadd.f32 %v2737, %v2664
    %v2739 = vadd.f32 %v2738, %v2666
    %v2740 = vadd.f32 %v2739, %v2668
    %v2741 = vadd.f32 %v2740, %v2670
    %v2742 = vadd.f32 %v2741, %v2672
    %v2743 = vadd.f32 %v2742, %v2674
    %v2744 = vadd.f32 %v2743, %v2676
    %v2745 = vadd.f32 %v2744, %v2678
    %v2746 = vadd.f32 %v2745, %v2680
    %v2747 = vadd.f32 %v2746, %v2682
    %v2748 = vadd.f32 %v2747, %v2684
    %v2749 = vrot.slane %v2748, 4
    %v2750 = vadd.f32 %v2748, %v2749
    %v2751 = vrot.slane %v2750, 2
    %v2752 = vadd.f32 %v2750, %v2751
    %v2753 = vrot.slane %v2752, 1
    %v2754 = vadd.f32 %v2752, %v2753
    %v2755 = vadd.f32 %v2559, %v2561
    %v2756 = vadd.f32 %v2755, %v2563
    %v2757 = vadd.f32 %v2756, %v2565
    %v2758 = vadd.f32 %v2757, %v2567
    %v2759 = vadd.f32 %v2758, %v2569
    %v2760 = vadd.f32 %v2759, %v2571
    %v2761 = vadd.f32 %v2760, %v2573
    %v2762 = vadd.f32 %v2761, %v2575
    %v2763 = vadd.f32 %v2762, %v2577
    %v2764 = vadd.f32 %v2763, %v2579
    %v2765 = vadd.f32 %v2764, %v2581
    %v2766 = vadd.f32 %v2765, %v2583
    %v2767 = vadd.f32 %v2766, %v2585
    %v2768 = vadd.f32 %v2767, %v2587
    %v2769 = vadd.f32 %v2768, %v2589
    %v2770 = vadd.f32 %v2769, %v2591
    %v2771 = vadd.f32 %v2770, %v2593
    %v2772 = vadd.f32 %v2771, %v2595
    %v2773 = vadd.f32 %v2772, %v2597
    %v2774 = vadd.f32 %v2773, %v2599
    %v2775 = vadd.f32 %v2774, %v2601
    %v2776 = vadd.f32 %v2775, %v2603
    %v2777 = vadd.f32 %v2776, %v2605
    %v2778 = vadd.f32 %v2777, %v2607
    %v2779 = vadd.f32 %v2778, %v2609
    %v2780 = vadd.f32 %v2779, %v2611
    %v2781 = vadd.f32 %v2780, %v2613
    %v2782 = vadd.f32 %v2781, %v2615
    %v2783 = vadd.f32 %v2782, %v2617
    %v2784 = vadd.f32 %v2783, %v2619
    %v2785 = vadd.f32 %v2784, %v2621
    %v2786 = vadd.f32 %v2785, %v2623
    %v2787 = vadd.f32 %v2786, %v2625
    %v2788 = vadd.f32 %v2787, %v2627
    %v2789 = vadd.f32 %v2788, %v2629
    %v2790 = vadd.f32 %v2789, %v2631
    %v2791 = vadd.f32 %v2790, %v2633
    %v2792 = vadd.f32 %v2791, %v2635
    %v2793 = vadd.f32 %v2792, %v2637
    %v2794 = vadd.f32 %v2793, %v2639
    %v2795 = vadd.f32 %v2794, %v2641
    %v2796 = vadd.f32 %v2795, %v2643
    %v2797 = vadd.f32 %v2796, %v2645
    %v2798 = vadd.f32 %v2797, %v2647
    %v2799 = vadd.f32 %v2798, %v2649
    %v2800 = vadd.f32 %v2799, %v2651
    %v2801 = vadd.f32 %v2800, %v2653
    %v2802 = vadd.f32 %v2801, %v2655
    %v2803 = vadd.f32 %v2802, %v2657
    %v2804 = vadd.f32 %v2803, %v2659
    %v2805 = vadd.f32 %v2804, %v2661
    %v2806 = vadd.f32 %v2805, %v2663
    %v2807 = vadd.f32 %v2806, %v2665
    %v2808 = vadd.f32 %v2807, %v2667
    %v2809 = vadd.f32 %v2808, %v2669
    %v2810 = vadd.f32 %v2809, %v2671
    %v2811 = vadd.f32 %v2810, %v2673
    %v2812 = vadd.f32 %v2811, %v2675
    %v2813 = vadd.f32 %v2812, %v2677
    %v2814 = vadd.f32 %v2813, %v2679
    %v2815 = vadd.f32 %v2814, %v2681
    %v2816 = vadd.f32 %v2815, %v2683
    %v2817 = vadd.f32 %v2816, %v2685
    %v2818 = vrot.slane %v2817, 4
    %v2819 = vadd.f32 %v2817, %v2818
    %v2820 = vrot.slane %v2819, 2
    %v2821 = vadd.f32 %v2819, %v2820
    %v2822 = vrot.slane %v2821, 1
    %v2823 = vadd.f32 %v2821, %v2822
    %v2824 = vmul.f32 %v2754, 0.001953125
    %v2825 = vmul.f32 %v2823, 0.001953125
    %v2826 = vmul.f32 %v2556, %v2556
    %v2827 = vmul.f32 %v2557, %v2557
    %v2828 = vsub.f32 %v2824, %v2826
    %v2829 = vsub.f32 %v2825, %v2827
    %v2830 = vmax.f32 %v2828, 0.0
    %v2831 = vmax.f32 %v2829, 0.0
    %v2832 = vadd.f32 %v2830, 1e-05
    %v2833 = vadd.f32 %v2831, 1e-05
    %v2834 = vrsqrt.pop %v2832
    %v2835 = vrsqrt.pop %v2833
    %v2836 = vld [vmem:[%s7] sm:$0x3]
    %v2838 = vlaneseq
    %v2839 = vshrl.u32 %v2838, 7
    %v2840 = vsub.s32 0, %v2839
    %v2841 = vrot.slane %v2836, %v2840
    %v2842 = vlaneseq
    %v2843 = vshrl.u32 %v2842, 7
    %v2844 = vsub.s32 1, %v2843
    %v2845 = vrot.slane %v2836, %v2844
    %v2848 = vmul.f32 %v2834, %v2841
    %v2849 = vmul.f32 %v2835, %v2845
    %v2850 = vlaneseq
    %v2851 = vshrl.u32 %v2850, 7
    %v2852 = vsub.s32 0, %v2851
    %v2853 = vrot.slane %v2848, %v2852
    %v2854 = vlaneseq
    %v2855 = vshrl.u32 %v2854, 7
    %v2856 = vsub.s32 0, %v2855
    %v2857 = vrot.slane %v2849, %v2856
    %v2858 = vmul.f32 %v2290, %v2853
    %v2859 = vmul.f32 %v2291, %v2857
    %v2860 = vmul.f32 %v2292, %v2853
    %v2861 = vmul.f32 %v2293, %v2857
    %v2862 = vmul.f32 %v2294, %v2853
    %v2863 = vmul.f32 %v2295, %v2857
    %v2864 = vmul.f32 %v2296, %v2853
    %v2865 = vmul.f32 %v2297, %v2857
    %v2866 = vmul.f32 %v2298, %v2853
    %v2867 = vmul.f32 %v2299, %v2857
    %v2868 = vmul.f32 %v2300, %v2853
    %v2869 = vmul.f32 %v2301, %v2857
    %v2870 = vmul.f32 %v2302, %v2853
    %v2871 = vmul.f32 %v2303, %v2857
    %v2872 = vmul.f32 %v2304, %v2853
    %v2873 = vmul.f32 %v2305, %v2857
    %v2874 = vmul.f32 %v2306, %v2853
    %v2875 = vmul.f32 %v2307, %v2857
    %v2876 = vmul.f32 %v2308, %v2853
    %v2877 = vmul.f32 %v2309, %v2857
    %v2878 = vmul.f32 %v2310, %v2853
    %v2879 = vmul.f32 %v2311, %v2857
    %v2880 = vmul.f32 %v2312, %v2853
    %v2881 = vmul.f32 %v2313, %v2857
    %v2882 = vmul.f32 %v2314, %v2853
    %v2883 = vmul.f32 %v2315, %v2857
    %v2884 = vmul.f32 %v2316, %v2853
    %v2885 = vmul.f32 %v2317, %v2857
    %v2886 = vmul.f32 %v2318, %v2853
    %v2887 = vmul.f32 %v2319, %v2857
    %v2888 = vmul.f32 %v2320, %v2853
    %v2889 = vmul.f32 %v2321, %v2857
    %v2890 = vmul.f32 %v2322, %v2853
    %v2891 = vmul.f32 %v2323, %v2857
    %v2892 = vmul.f32 %v2324, %v2853
    %v2893 = vmul.f32 %v2325, %v2857
    %v2894 = vmul.f32 %v2326, %v2853
    %v2895 = vmul.f32 %v2327, %v2857
    %v2896 = vmul.f32 %v2328, %v2853
    %v2897 = vmul.f32 %v2329, %v2857
    %v2898 = vmul.f32 %v2330, %v2853
    %v2899 = vmul.f32 %v2331, %v2857
    %v2900 = vmul.f32 %v2332, %v2853
    %v2901 = vmul.f32 %v2333, %v2857
    %v2902 = vmul.f32 %v2334, %v2853
    %v2903 = vmul.f32 %v2335, %v2857
    %v2904 = vmul.f32 %v2336, %v2853
    %v2905 = vmul.f32 %v2337, %v2857
    %v2906 = vmul.f32 %v2338, %v2853
    %v2907 = vmul.f32 %v2339, %v2857
    %v2908 = vmul.f32 %v2340, %v2853
    %v2909 = vmul.f32 %v2341, %v2857
    %v2910 = vmul.f32 %v2342, %v2853
    %v2911 = vmul.f32 %v2343, %v2857
    %v2912 = vmul.f32 %v2344, %v2853
    %v2913 = vmul.f32 %v2345, %v2857
    %v2914 = vmul.f32 %v2346, %v2853
    %v2915 = vmul.f32 %v2347, %v2857
    %v2916 = vmul.f32 %v2348, %v2853
    %v2917 = vmul.f32 %v2349, %v2857
    %v2918 = vmul.f32 %v2350, %v2853
    %v2919 = vmul.f32 %v2351, %v2857
    %v2920 = vmul.f32 %v2352, %v2853
    %v2921 = vmul.f32 %v2353, %v2857
    %v2922 = vmul.f32 %v2354, %v2853
    %v2923 = vmul.f32 %v2355, %v2857
    %v2924 = vmul.f32 %v2356, %v2853
    %v2925 = vmul.f32 %v2357, %v2857
    %v2926 = vmul.f32 %v2358, %v2853
    %v2927 = vmul.f32 %v2359, %v2857
    %v2928 = vmul.f32 %v2360, %v2853
    %v2929 = vmul.f32 %v2361, %v2857
    %v2930 = vmul.f32 %v2362, %v2853
    %v2931 = vmul.f32 %v2363, %v2857
    %v2932 = vmul.f32 %v2364, %v2853
    %v2933 = vmul.f32 %v2365, %v2857
    %v2934 = vmul.f32 %v2366, %v2853
    %v2935 = vmul.f32 %v2367, %v2857
    %v2936 = vmul.f32 %v2368, %v2853
    %v2937 = vmul.f32 %v2369, %v2857
    %v2938 = vmul.f32 %v2370, %v2853
    %v2939 = vmul.f32 %v2371, %v2857
    %v2940 = vmul.f32 %v2372, %v2853
    %v2941 = vmul.f32 %v2373, %v2857
    %v2942 = vmul.f32 %v2374, %v2853
    %v2943 = vmul.f32 %v2375, %v2857
    %v2944 = vmul.f32 %v2376, %v2853
    %v2945 = vmul.f32 %v2377, %v2857
    %v2946 = vmul.f32 %v2378, %v2853
    %v2947 = vmul.f32 %v2379, %v2857
    %v2948 = vmul.f32 %v2380, %v2853
    %v2949 = vmul.f32 %v2381, %v2857
    %v2950 = vmul.f32 %v2382, %v2853
    %v2951 = vmul.f32 %v2383, %v2857
    %v2952 = vmul.f32 %v2384, %v2853
    %v2953 = vmul.f32 %v2385, %v2857
    %v2954 = vmul.f32 %v2386, %v2853
    %v2955 = vmul.f32 %v2387, %v2857
    %v2956 = vmul.f32 %v2388, %v2853
    %v2957 = vmul.f32 %v2389, %v2857
    %v2958 = vmul.f32 %v2390, %v2853
    %v2959 = vmul.f32 %v2391, %v2857
    %v2960 = vmul.f32 %v2392, %v2853
    %v2961 = vmul.f32 %v2393, %v2857
    %v2962 = vmul.f32 %v2394, %v2853
    %v2963 = vmul.f32 %v2395, %v2857
    %v2964 = vmul.f32 %v2396, %v2853
    %v2965 = vmul.f32 %v2397, %v2857
    %v2966 = vmul.f32 %v2398, %v2853
    %v2967 = vmul.f32 %v2399, %v2857
    %v2968 = vmul.f32 %v2400, %v2853
    %v2969 = vmul.f32 %v2401, %v2857
    %v2970 = vmul.f32 %v2402, %v2853
    %v2971 = vmul.f32 %v2403, %v2857
    %v2972 = vmul.f32 %v2404, %v2853
    %v2973 = vmul.f32 %v2405, %v2857
    %v2974 = vmul.f32 %v2406, %v2853
    %v2975 = vmul.f32 %v2407, %v2857
    %v2976 = vmul.f32 %v2408, %v2853
    %v2977 = vmul.f32 %v2409, %v2857
    %v2978 = vmul.f32 %v2410, %v2853
    %v2979 = vmul.f32 %v2411, %v2857
    %v2980 = vmul.f32 %v2412, %v2853
    %v2981 = vmul.f32 %v2413, %v2857
    %v2982 = vmul.f32 %v2414, %v2853
    %v2983 = vmul.f32 %v2415, %v2857
    %v2984 = vmul.f32 %v2416, %v2853
    %v2985 = vmul.f32 %v2417, %v2857
    %v2986 = vld [vmem:[%s8] sm:$0x3]
    %v2987 = vmul.f32 %v2556, %v2848
    %v2988 = vmul.f32 %v2557, %v2849
    %v2991 = vcombine.low %v2987, %v2988
    %v2993 = vunpack.c.l.s4 1966171168
    %v2994 = vunpack.c.0.s8 %v2993
    %v2995 = vlaneseq
    %v2996 = vshrl.u32 %v2995, 7
    %v2997 = vsub.s32 %v2994, %v2996
    %v2998 = vrot.slane %v2991, %v2997
    %v3000 = vunpack.c.l.s4 1966171168
    %v3001 = vunpack.c.0.s8 %v3000
    %v3002 = vlaneseq
    %v3003 = vshrl.u32 %v3002, 7
    %v3004 = vsub.s32 %v3001, %v3003
    %v3005 = vrot.slane %v2998, %v3004
    %v3007 = vsub.f32 %v2986, %v3005
    %v3009 = vlaneseq
    %v3010 = vshrl.u32 %v3009, 7
    %v3011 = vsub.s32 0, %v3010
    %v3012 = vrot.slane %v3007, %v3011
    %v3013 = vlaneseq
    %v3014 = vshrl.u32 %v3013, 7
    %v3015 = vsub.s32 1, %v3014
    %v3016 = vrot.slane %v3007, %v3015
    %v3019 = vadd.f32 %v2858, %v3012
    %v3020 = vadd.f32 %v2859, %v3016
    %v3021 = vadd.f32 %v2860, %v3012
    %v3022 = vadd.f32 %v2861, %v3016
    %v3023 = vadd.f32 %v2862, %v3012
    %v3024 = vadd.f32 %v2863, %v3016
    %v3025 = vadd.f32 %v2864, %v3012
    %v3026 = vadd.f32 %v2865, %v3016
    %v3027 = vadd.f32 %v2866, %v3012
    %v3028 = vadd.f32 %v2867, %v3016
    %v3029 = vadd.f32 %v2868, %v3012
    %v3030 = vadd.f32 %v2869, %v3016
    %v3031 = vadd.f32 %v2870, %v3012
    %v3032 = vadd.f32 %v2871, %v3016
    %v3033 = vadd.f32 %v2872, %v3012
    %v3034 = vadd.f32 %v2873, %v3016
    %v3035 = vadd.f32 %v2874, %v3012
    %v3036 = vadd.f32 %v2875, %v3016
    %v3037 = vadd.f32 %v2876, %v3012
    %v3038 = vadd.f32 %v2877, %v3016
    %v3039 = vadd.f32 %v2878, %v3012
    %v3040 = vadd.f32 %v2879, %v3016
    %v3041 = vadd.f32 %v2880, %v3012
    %v3042 = vadd.f32 %v2881, %v3016
    %v3043 = vadd.f32 %v2882, %v3012
    %v3044 = vadd.f32 %v2883, %v3016
    %v3045 = vadd.f32 %v2884, %v3012
    %v3046 = vadd.f32 %v2885, %v3016
    %v3047 = vadd.f32 %v2886, %v3012
    %v3048 = vadd.f32 %v2887, %v3016
    %v3049 = vadd.f32 %v2888, %v3012
    %v3050 = vadd.f32 %v2889, %v3016
    %v3051 = vadd.f32 %v2890, %v3012
    %v3052 = vadd.f32 %v2891, %v3016
    %v3053 = vadd.f32 %v2892, %v3012
    %v3054 = vadd.f32 %v2893, %v3016
    %v3055 = vadd.f32 %v2894, %v3012
    %v3056 = vadd.f32 %v2895, %v3016
    %v3057 = vadd.f32 %v2896, %v3012
    %v3058 = vadd.f32 %v2897, %v3016
    %v3059 = vadd.f32 %v2898, %v3012
    %v3060 = vadd.f32 %v2899, %v3016
    %v3061 = vadd.f32 %v2900, %v3012
    %v3062 = vadd.f32 %v2901, %v3016
    %v3063 = vadd.f32 %v2902, %v3012
    %v3064 = vadd.f32 %v2903, %v3016
    %v3065 = vadd.f32 %v2904, %v3012
    %v3066 = vadd.f32 %v2905, %v3016
    %v3067 = vadd.f32 %v2906, %v3012
    %v3068 = vadd.f32 %v2907, %v3016
    %v3069 = vadd.f32 %v2908, %v3012
    %v3070 = vadd.f32 %v2909, %v3016
    %v3071 = vadd.f32 %v2910, %v3012
    %v3072 = vadd.f32 %v2911, %v3016
    %v3073 = vadd.f32 %v2912, %v3012
    %v3074 = vadd.f32 %v2913, %v3016
    %v3075 = vadd.f32 %v2914, %v3012
    %v3076 = vadd.f32 %v2915, %v3016
    %v3077 = vadd.f32 %v2916, %v3012
    %v3078 = vadd.f32 %v2917, %v3016
    %v3079 = vadd.f32 %v2918, %v3012
    %v3080 = vadd.f32 %v2919, %v3016
    %v3081 = vadd.f32 %v2920, %v3012
    %v3082 = vadd.f32 %v2921, %v3016
    %v3083 = vadd.f32 %v2922, %v3012
    %v3084 = vadd.f32 %v2923, %v3016
    %v3085 = vadd.f32 %v2924, %v3012
    %v3086 = vadd.f32 %v2925, %v3016
    %v3087 = vadd.f32 %v2926, %v3012
    %v3088 = vadd.f32 %v2927, %v3016
    %v3089 = vadd.f32 %v2928, %v3012
    %v3090 = vadd.f32 %v2929, %v3016
    %v3091 = vadd.f32 %v2930, %v3012
    %v3092 = vadd.f32 %v2931, %v3016
    %v3093 = vadd.f32 %v2932, %v3012
    %v3094 = vadd.f32 %v2933, %v3016
    %v3095 = vadd.f32 %v2934, %v3012
    %v3096 = vadd.f32 %v2935, %v3016
    %v3097 = vadd.f32 %v2936, %v3012
    %v3098 = vadd.f32 %v2937, %v3016
    %v3099 = vadd.f32 %v2938, %v3012
    %v3100 = vadd.f32 %v2939, %v3016
    %v3101 = vadd.f32 %v2940, %v3012
    %v3102 = vadd.f32 %v2941, %v3016
    %v3103 = vadd.f32 %v2942, %v3012
    %v3104 = vadd.f32 %v2943, %v3016
    %v3105 = vadd.f32 %v2944, %v3012
    %v3106 = vadd.f32 %v2945, %v3016
    %v3107 = vadd.f32 %v2946, %v3012
    %v3108 = vadd.f32 %v2947, %v3016
    %v3109 = vadd.f32 %v2948, %v3012
    %v3110 = vadd.f32 %v2949, %v3016
    %v3111 = vadd.f32 %v2950, %v3012
    %v3112 = vadd.f32 %v2951, %v3016
    %v3113 = vadd.f32 %v2952, %v3012
    %v3114 = vadd.f32 %v2953, %v3016
    %v3115 = vadd.f32 %v2954, %v3012
    %v3116 = vadd.f32 %v2955, %v3016
    %v3117 = vadd.f32 %v2956, %v3012
    %v3118 = vadd.f32 %v2957, %v3016
    %v3119 = vadd.f32 %v2958, %v3012
    %v3120 = vadd.f32 %v2959, %v3016
    %v3121 = vadd.f32 %v2960, %v3012
    %v3122 = vadd.f32 %v2961, %v3016
    %v3123 = vadd.f32 %v2962, %v3012
    %v3124 = vadd.f32 %v2963, %v3016
    %v3125 = vadd.f32 %v2964, %v3012
    %v3126 = vadd.f32 %v2965, %v3016
    %v3127 = vadd.f32 %v2966, %v3012
    %v3128 = vadd.f32 %v2967, %v3016
    %v3129 = vadd.f32 %v2968, %v3012
    %v3130 = vadd.f32 %v2969, %v3016
    %v3131 = vadd.f32 %v2970, %v3012
    %v3132 = vadd.f32 %v2971, %v3016
    %v3133 = vadd.f32 %v2972, %v3012
    %v3134 = vadd.f32 %v2973, %v3016
    %v3135 = vadd.f32 %v2974, %v3012
    %v3136 = vadd.f32 %v2975, %v3016
    %v3137 = vadd.f32 %v2976, %v3012
    %v3138 = vadd.f32 %v2977, %v3016
    %v3139 = vadd.f32 %v2978, %v3012
    %v3140 = vadd.f32 %v2979, %v3016
    %v3141 = vadd.f32 %v2980, %v3012
    %v3142 = vadd.f32 %v2981, %v3016
    %v3143 = vadd.f32 %v2982, %v3012
    %v3144 = vadd.f32 %v2983, %v3016
    %v3145 = vadd.f32 %v2984, %v3012
    %v3146 = vadd.f32 %v2985, %v3016
    %v3147 = vpack.c.bf16 %v3021, %v3019
    %v3148 = vpack.c.bf16 %v3022, %v3020
    %v3149 = vpack.c.bf16 %v3025, %v3023
    %v3150 = vpack.c.bf16 %v3026, %v3024
    %v3151 = vpack.c.bf16 %v3029, %v3027
    %v3152 = vpack.c.bf16 %v3030, %v3028
    %v3153 = vpack.c.bf16 %v3033, %v3031
    %v3154 = vpack.c.bf16 %v3034, %v3032
    %v3155 = vpack.c.bf16 %v3037, %v3035
    %v3156 = vpack.c.bf16 %v3038, %v3036
    %v3157 = vpack.c.bf16 %v3041, %v3039
    %v3158 = vpack.c.bf16 %v3042, %v3040
    %v3159 = vpack.c.bf16 %v3045, %v3043
    %v3160 = vpack.c.bf16 %v3046, %v3044
    %v3161 = vpack.c.bf16 %v3049, %v3047
    %v3162 = vpack.c.bf16 %v3050, %v3048
    %v3163 = vpack.c.bf16 %v3053, %v3051
    %v3164 = vpack.c.bf16 %v3054, %v3052
    %v3165 = vpack.c.bf16 %v3057, %v3055
    %v3166 = vpack.c.bf16 %v3058, %v3056
    %v3167 = vpack.c.bf16 %v3061, %v3059
    %v3168 = vpack.c.bf16 %v3062, %v3060
    %v3169 = vpack.c.bf16 %v3065, %v3063
    %v3170 = vpack.c.bf16 %v3066, %v3064
    %v3171 = vpack.c.bf16 %v3069, %v3067
    %v3172 = vpack.c.bf16 %v3070, %v3068
    %v3173 = vpack.c.bf16 %v3073, %v3071
    %v3174 = vpack.c.bf16 %v3074, %v3072
    %v3175 = vpack.c.bf16 %v3077, %v3075
    %v3176 = vpack.c.bf16 %v3078, %v3076
    %v3177 = vpack.c.bf16 %v3081, %v3079
    %v3178 = vpack.c.bf16 %v3082, %v3080
    %v3179 = vpack.c.bf16 %v3085, %v3083
    %v3180 = vpack.c.bf16 %v3086, %v3084
    %v3181 = vpack.c.bf16 %v3089, %v3087
    %v3182 = vpack.c.bf16 %v3090, %v3088
    %v3183 = vpack.c.bf16 %v3093, %v3091
    %v3184 = vpack.c.bf16 %v3094, %v3092
    %v3185 = vpack.c.bf16 %v3097, %v3095
    %v3186 = vpack.c.bf16 %v3098, %v3096
    %v3187 = vpack.c.bf16 %v3101, %v3099
    %v3188 = vpack.c.bf16 %v3102, %v3100
    %v3189 = vpack.c.bf16 %v3105, %v3103
    %v3190 = vpack.c.bf16 %v3106, %v3104
    %v3191 = vpack.c.bf16 %v3109, %v3107
    %v3192 = vpack.c.bf16 %v3110, %v3108
    %v3193 = vpack.c.bf16 %v3113, %v3111
    %v3194 = vpack.c.bf16 %v3114, %v3112
    %v3195 = vpack.c.bf16 %v3117, %v3115
    %v3196 = vpack.c.bf16 %v3118, %v3116
    %v3197 = vpack.c.bf16 %v3121, %v3119
    %v3198 = vpack.c.bf16 %v3122, %v3120
    %v3199 = vpack.c.bf16 %v3125, %v3123
    %v3200 = vpack.c.bf16 %v3126, %v3124
    %v3201 = vpack.c.bf16 %v3129, %v3127
    %v3202 = vpack.c.bf16 %v3130, %v3128
    %v3203 = vpack.c.bf16 %v3133, %v3131
    %v3204 = vpack.c.bf16 %v3134, %v3132
    %v3205 = vpack.c.bf16 %v3137, %v3135
    %v3206 = vpack.c.bf16 %v3138, %v3136
    %v3207 = vpack.c.bf16 %v3141, %v3139
    %v3208 = vpack.c.bf16 %v3142, %v3140
    %v3209 = vpack.c.bf16 %v3145, %v3143
    %v3210 = vpack.c.bf16 %v3146, %v3144
    %v3211 = vld [vmem:[#allocation8] sm:$0xff]
    %v3212 = vld [vmem:[#allocation8 + $0x8] sm:$0xff]
    %v3213 = vld [vmem:[#allocation8 + $0x10] sm:$0xff]
    %v3214 = vld [vmem:[#allocation8 + $0x18] sm:$0xff]
    %v3215 = vld [vmem:[#allocation8 + $0x20] sm:$0xff]
    %v3216 = vld [vmem:[#allocation8 + $0x28] sm:$0xff]
    %v3217 = vld [vmem:[#allocation8 + $0x30] sm:$0xff]
    %v3218 = vld [vmem:[#allocation8 + $0x38] sm:$0xff]
    %v3219 = vld [vmem:[#allocation8 + $0x40] sm:$0xff]
    %v3220 = vld [vmem:[#allocation8 + $0x48] sm:$0xff]
    %v3221 = vld [vmem:[#allocation8 + $0x50] sm:$0xff]
    %v3222 = vld [vmem:[#allocation8 + $0x58] sm:$0xff]
    %v3223 = vld [vmem:[#allocation8 + $0x60] sm:$0xff]
    %v3224 = vld [vmem:[#allocation8 + $0x68] sm:$0xff]
    %v3225 = vld [vmem:[#allocation8 + $0x70] sm:$0xff]
    %v3226 = vld [vmem:[#allocation8 + $0x78] sm:$0xff]
    %v3227 = vld [vmem:[#allocation8 + $0x80] sm:$0xff]
    %v3228 = vld [vmem:[#allocation8 + $0x88] sm:$0xff]
    %v3229 = vld [vmem:[#allocation8 + $0x90] sm:$0xff]
    %v3230 = vld [vmem:[#allocation8 + $0x98] sm:$0xff]
    %v3231 = vld [vmem:[#allocation8 + $0xa0] sm:$0xff]
    %v3232 = vld [vmem:[#allocation8 + $0xa8] sm:$0xff]
    %v3233 = vld [vmem:[#allocation8 + $0xb0] sm:$0xff]
    %v3234 = vld [vmem:[#allocation8 + $0xb8] sm:$0xff]
    %v3235 = vld [vmem:[#allocation8 + $0xc0] sm:$0xff]
    %v3236 = vld [vmem:[#allocation8 + $0xc8] sm:$0xff]
    %v3237 = vld [vmem:[#allocation8 + $0xd0] sm:$0xff]
    %v3238 = vld [vmem:[#allocation8 + $0xd8] sm:$0xff]
    %v3239 = vld [vmem:[#allocation8 + $0xe0] sm:$0xff]
    %v3240 = vld [vmem:[#allocation8 + $0xe8] sm:$0xff]
    %v3241 = vld [vmem:[#allocation8 + $0xf0] sm:$0xff]
    %v3242 = vld [vmem:[#allocation8 + $0xf8] sm:$0xff]
    %v3243 = vld [vmem:[%s10] sm:$0x3]
    %v3245 = vlaneseq
    %v3246 = vshrl.u32 %v3245, 7
    %v3247 = vsub.s32 0, %v3246
    %v3248 = vrot.slane %v3243, %v3247
    %v3249 = vlaneseq
    %v3250 = vshrl.u32 %v3249, 7
    %v3251 = vsub.s32 1, %v3250
    %v3252 = vrot.slane %v3243, %v3251
    %v3287 = vunpack.c.l.b16 %v3211
    %v3288 = vunpack.c.h.b16 %v3211
    %v3289 = vunpack.c.l.b16 %v3212
    %v3290 = vunpack.c.h.b16 %v3212
    %v3291 = vunpack.c.l.b16 %v3213
    %v3292 = vunpack.c.h.b16 %v3213
    %v3293 = vunpack.c.l.b16 %v3214
    %v3294 = vunpack.c.h.b16 %v3214
    %v3295 = vunpack.c.l.b16 %v3215
    %v3296 = vunpack.c.h.b16 %v3215
    %v3297 = vunpack.c.l.b16 %v3216
    %v3298 = vunpack.c.h.b16 %v3216
    %v3299 = vunpack.c.l.b16 %v3217
    %v3300 = vunpack.c.h.b16 %v3217
    %v3301 = vunpack.c.l.b16 %v3218
    %v3302 = vunpack.c.h.b16 %v3218
    %v3303 = vunpack.c.l.b16 %v3219
    %v3304 = vunpack.c.h.b16 %v3219
    %v3305 = vunpack.c.l.b16 %v3220
    %v3306 = vunpack.c.h.b16 %v3220
    %v3307 = vunpack.c.l.b16 %v3221
    %v3308 = vunpack.c.h.b16 %v3221
    %v3309 = vunpack.c.l.b16 %v3222
    %v3310 = vunpack.c.h.b16 %v3222
    %v3311 = vunpack.c.l.b16 %v3223
    %v3312 = vunpack.c.h.b16 %v3223
    %v3313 = vunpack.c.l.b16 %v3224
    %v3314 = vunpack.c.h.b16 %v3224
    %v3315 = vunpack.c.l.b16 %v3225
    %v3316 = vunpack.c.h.b16 %v3225
    %v3317 = vunpack.c.l.b16 %v3226
    %v3318 = vunpack.c.h.b16 %v3226
    %v3319 = vunpack.c.l.b16 %v3227
    %v3320 = vunpack.c.h.b16 %v3227
    %v3321 = vunpack.c.l.b16 %v3228
    %v3322 = vunpack.c.h.b16 %v3228
    %v3323 = vunpack.c.l.b16 %v3229
    %v3324 = vunpack.c.h.b16 %v3229
    %v3325 = vunpack.c.l.b16 %v3230
    %v3326 = vunpack.c.h.b16 %v3230
    %v3327 = vunpack.c.l.b16 %v3231
    %v3328 = vunpack.c.h.b16 %v3231
    %v3329 = vunpack.c.l.b16 %v3232
    %v3330 = vunpack.c.h.b16 %v3232
    %v3331 = vunpack.c.l.b16 %v3233
    %v3332 = vunpack.c.h.b16 %v3233
    %v3333 = vunpack.c.l.b16 %v3234
    %v3334 = vunpack.c.h.b16 %v3234
    %v3335 = vunpack.c.l.b16 %v3235
    %v3336 = vunpack.c.h.b16 %v3235
    %v3337 = vunpack.c.l.b16 %v3236
    %v3338 = vunpack.c.h.b16 %v3236
    %v3339 = vunpack.c.l.b16 %v3237
    %v3340 = vunpack.c.h.b16 %v3237
    %v3341 = vunpack.c.l.b16 %v3238
    %v3342 = vunpack.c.h.b16 %v3238
    %v3343 = vunpack.c.l.b16 %v3239
    %v3344 = vunpack.c.h.b16 %v3239
    %v3345 = vunpack.c.l.b16 %v3240
    %v3346 = vunpack.c.h.b16 %v3240
    %v3347 = vunpack.c.l.b16 %v3241
    %v3348 = vunpack.c.h.b16 %v3241
    %v3349 = vunpack.c.l.b16 %v3242
    %v3350 = vunpack.c.h.b16 %v3242
    %v3351 = vpack.c.b16 %v3289, %v3287
    %v3352 = vpack.c.b16 %v3290, %v3288
    %v3353 = vpack.c.b16 %v3293, %v3291
    %v3354 = vpack.c.b16 %v3294, %v3292
    %v3355 = vpack.c.b16 %v3297, %v3295
    %v3356 = vpack.c.b16 %v3298, %v3296
    %v3357 = vpack.c.b16 %v3301, %v3299
    %v3358 = vpack.c.b16 %v3302, %v3300
    %v3359 = vpack.c.b16 %v3305, %v3303
    %v3360 = vpack.c.b16 %v3306, %v3304
    %v3361 = vpack.c.b16 %v3309, %v3307
    %v3362 = vpack.c.b16 %v3310, %v3308
    %v3363 = vpack.c.b16 %v3313, %v3311
    %v3364 = vpack.c.b16 %v3314, %v3312
    %v3365 = vpack.c.b16 %v3317, %v3315
    %v3366 = vpack.c.b16 %v3318, %v3316
    %v3367 = vpack.c.b16 %v3321, %v3319
    %v3368 = vpack.c.b16 %v3322, %v3320
    %v3369 = vpack.c.b16 %v3325, %v3323
    %v3370 = vpack.c.b16 %v3326, %v3324
    %v3371 = vpack.c.b16 %v3329, %v3327
    %v3372 = vpack.c.b16 %v3330, %v3328
    %v3373 = vpack.c.b16 %v3333, %v3331
    %v3374 = vpack.c.b16 %v3334, %v3332
    %v3375 = vpack.c.b16 %v3337, %v3335
    %v3376 = vpack.c.b16 %v3338, %v3336
    %v3377 = vpack.c.b16 %v3341, %v3339
    %v3378 = vpack.c.b16 %v3342, %v3340
    %v3379 = vpack.c.b16 %v3345, %v3343
    %v3380 = vpack.c.b16 %v3346, %v3344
    %v3381 = vpack.c.b16 %v3349, %v3347
    %v3382 = vpack.c.b16 %v3350, %v3348
    %3415 = vmatprep.subr.bf16.mxu0 %v3352
    %3416 = vmatpush1.bf16.msra.mxu0 %v3351
    %3417 = vmatprep.subr.bf16.mxu0 %v3354
    %3418 = vmatpush1.bf16.msra.mxu0 %v3353
    %3419 = vmatprep.subr.bf16.mxu0 %v3356
    %3420 = vmatpush1.bf16.msra.mxu0 %v3355
    %3421 = vmatprep.subr.bf16.mxu0 %v3358
    %3422 = vmatpush1.bf16.msra.mxu0 %v3357
    %3423 = vmatprep.subr.bf16.mxu0 %v3360
    %3424 = vmatpush1.bf16.msra.mxu0 %v3359
    %3425 = vmatprep.subr.bf16.mxu0 %v3362
    %3426 = vmatpush1.bf16.msra.mxu0 %v3361
    %3427 = vmatprep.subr.bf16.mxu0 %v3364
    %3428 = vmatpush1.bf16.msra.mxu0 %v3363
    %3429 = vmatprep.subr.bf16.mxu0 %v3366
    %3430 = vmatpush1.bf16.msra.mxu0 %v3365
    %3431 = vmatprep.subr.bf16.mxu0 %v3368
    %3432 = vmatpush1.bf16.msra.mxu0 %v3367
    %3433 = vmatprep.subr.bf16.mxu0 %v3370
    %3434 = vmatpush1.bf16.msra.mxu0 %v3369
    %3435 = vmatprep.subr.bf16.mxu0 %v3372
    %3436 = vmatpush1.bf16.msra.mxu0 %v3371
    %3437 = vmatprep.subr.bf16.mxu0 %v3374
    %3438 = vmatpush1.bf16.msra.mxu0 %v3373
    %3439 = vmatprep.subr.bf16.mxu0 %v3376
    %3440 = vmatpush1.bf16.msra.mxu0 %v3375
    %3441 = vmatprep.subr.bf16.mxu0 %v3378
    %3442 = vmatpush1.bf16.msra.mxu0 %v3377
    %3443 = vmatprep.subr.bf16.mxu0 %v3380
    %3444 = vmatpush1.bf16.msra.mxu0 %v3379
    %3445 = vmatprep.subr.bf16.mxu0 %v3382
    %3446 = vmatpush1.bf16.msra.mxu0 %v3381
    %3447 = vmatprep.mubr.bf16.mxu0 %v3148
    %3448 = vmatmul.mubr.bf16.gmra.mrb[0].mxu0 %v3147
    %v3449 = vpop.f32.mrb[0].mxu0
    %v3450 = vadd.f32 %v3248, %v3449
    %v3451 = vpop.f32.mrb[0].mxu0
    %v3452 = vadd.f32 %v3252, %v3451
    %v3453 = vpop.f32.mrb[0].mxu0
    %v3454 = vadd.f32 %v3248, %v3453
    %v3455 = vpop.f32.mrb[0].mxu0
    %v3456 = vadd.f32 %v3252, %v3455
    %3457 = vmatprep.mubr.bf16.mxu0 %v3150
    %3458 = vmatmul.mubr.bf16.gmra.mrb[0].mxu0 %v3149
    %v3459 = vpop.f32.mrb[0].mxu0
    %v3460 = vadd.f32 %v3248, %v3459
    %v3461 = vpop.f32.mrb[0].mxu0
    %v3462 = vadd.f32 %v3252, %v3461
    %v3463 = vpop.f32.mrb[0].mxu0
    %v3464 = vadd.f32 %v3248, %v3463
    %v3465 = vpop.f32.mrb[0].mxu0
    %v3466 = vadd.f32 %v3252, %v3465
    %3467 = vmatprep.mubr.bf16.mxu0 %v3152
    %3468 = vmatmul.mubr.bf16.gmra.mrb[0].mxu0 %v3151
    %v3469 = vpop.f32.mrb[0].mxu0
    %v3470 = vadd.f32 %v3248, %v3469
    %v3471 = vpop.f32.mrb[0].mxu0
    %v3472 = vadd.f32 %v3252, %v3471
    %v3473 = vpop.f32.mrb[0].mxu0
    %v3474 = vadd.f32 %v3248, %v3473
    %v3475 = vpop.f32.mrb[0].mxu0
    %v3476 = vadd.f32 %v3252, %v3475
    %3477 = vmatprep.mubr.bf16.mxu0 %v3154
    %3478 = vmatmul.mubr.bf16.gmra.mrb[0].mxu0 %v3153
    %v3479 = vpop.f32.mrb[0].mxu0
    %v3480 = vadd.f32 %v3248, %v3479
    %v3481 = vpop.f32.mrb[0].mxu0
    %v3482 = vadd.f32 %v3252, %v3481
    %v3483 = vpop.f32.mrb[0].mxu0
    %v3484 = vadd.f32 %v3248, %v3483
    %v3485 = vpop.f32.mrb[0].mxu0
    %v3486 = vadd.f32 %v3252, %v3485
    %3487 = vmatprep.mubr.bf16.mxu0 %v3156
    %3488 = vmatmul.mubr.bf16.gmra.mrb[0].mxu0 %v3155
    %v3489 = vpop.f32.mrb[0].mxu0
    %v3490 = vadd.f32 %v3248, %v3489
    %v3491 = vpop.f32.mrb[0].mxu0
    %v3492 = vadd.f32 %v3252, %v3491
    %v3493 = vpop.f32.mrb[0].mxu0
    %v3494 = vadd.f32 %v3248, %v3493
    %v3495 = vpop.f32.mrb[0].mxu0
    %v3496 = vadd.f32 %v3252, %v3495
    %3497 = vmatprep.mubr.bf16.mxu0 %v3158
    %3498 = vmatmul.mubr.bf16.gmra.mrb[0].mxu0 %v3157
    %v3499 = vpop.f32.mrb[0].mxu0
    %v3500 = vadd.f32 %v3248, %v3499
    %v3501 = vpop.f32.mrb[0].mxu0
    %v3502 = vadd.f32 %v3252, %v3501
    %v3503 = vpop.f32.mrb[0].mxu0
    %v3504 = vadd.f32 %v3248, %v3503
    %v3505 = vpop.f32.mrb[0].mxu0
    %v3506 = vadd.f32 %v3252, %v3505
    %3507 = vmatprep.mubr.bf16.mxu0 %v3160
    %3508 = vmatmul.mubr.bf16.gmra.mrb[0].mxu0 %v3159
    %v3509 = vpop.f32.mrb[0].mxu0
    %v3510 = vadd.f32 %v3248, %v3509
    %v3511 = vpop.f32.mrb[0].mxu0
    %v3512 = vadd.f32 %v3252, %v3511
    %v3513 = vpop.f32.mrb[0].mxu0
    %v3514 = vadd.f32 %v3248, %v3513
    %v3515 = vpop.f32.mrb[0].mxu0
    %v3516 = vadd.f32 %v3252, %v3515
    %3517 = vmatprep.mubr.bf16.mxu0 %v3162
    %3518 = vmatmul.mubr.bf16.gmra.mrb[0].mxu0 %v3161
    %v3519 = vpop.f32.mrb[0].mxu0
    %v3520 = vadd.f32 %v3248, %v3519
    %v3521 = vpop.f32.mrb[0].mxu0
    %v3522 = vadd.f32 %v3252, %v3521
    %v3523 = vpop.f32.mrb[0].mxu0
    %v3524 = vadd.f32 %v3248, %v3523
    %v3525 = vpop.f32.mrb[0].mxu0
    %v3526 = vadd.f32 %v3252, %v3525
    %3527 = vmatprep.mubr.bf16.mxu0 %v3164
    %3528 = vmatmul.mubr.bf16.gmra.mrb[0].mxu0 %v3163
    %v3529 = vpop.f32.mrb[0].mxu0
    %v3530 = vadd.f32 %v3248, %v3529
    %v3531 = vpop.f32.mrb[0].mxu0
    %v3532 = vadd.f32 %v3252, %v3531
    %v3533 = vpop.f32.mrb[0].mxu0
    %v3534 = vadd.f32 %v3248, %v3533
    %v3535 = vpop.f32.mrb[0].mxu0
    %v3536 = vadd.f32 %v3252, %v3535
    %3537 = vmatprep.mubr.bf16.mxu0 %v3166
    %3538 = vmatmul.mubr.bf16.gmra.mrb[0].mxu0 %v3165
    %v3539 = vpop.f32.mrb[0].mxu0
    %v3540 = vadd.f32 %v3248, %v3539
    %v3541 = vpop.f32.mrb[0].mxu0
    %v3542 = vadd.f32 %v3252, %v3541
    %v3543 = vpop.f32.mrb[0].mxu0
    %v3544 = vadd.f32 %v3248, %v3543
    %v3545 = vpop.f32.mrb[0].mxu0
    %v3546 = vadd.f32 %v3252, %v3545
    %3547 = vmatprep.mubr.bf16.mxu0 %v3168
    %3548 = vmatmul.mubr.bf16.gmra.mrb[0].mxu0 %v3167
    %v3549 = vpop.f32.mrb[0].mxu0
    %v3550 = vadd.f32 %v3248, %v3549
    %v3551 = vpop.f32.mrb[0].mxu0
    %v3552 = vadd.f32 %v3252, %v3551
    %v3553 = vpop.f32.mrb[0].mxu0
    %v3554 = vadd.f32 %v3248, %v3553
    %v3555 = vpop.f32.mrb[0].mxu0
    %v3556 = vadd.f32 %v3252, %v3555
    %3557 = vmatprep.mubr.bf16.mxu0 %v3170
    %3558 = vmatmul.mubr.bf16.gmra.mrb[0].mxu0 %v3169
    %v3559 = vpop.f32.mrb[0].mxu0
    %v3560 = vadd.f32 %v3248, %v3559
    %v3561 = vpop.f32.mrb[0].mxu0
    %v3562 = vadd.f32 %v3252, %v3561
    %v3563 = vpop.f32.mrb[0].mxu0
    %v3564 = vadd.f32 %v3248, %v3563
    %v3565 = vpop.f32.mrb[0].mxu0
    %v3566 = vadd.f32 %v3252, %v3565
    %3567 = vmatprep.mubr.bf16.mxu0 %v3172
    %3568 = vmatmul.mubr.bf16.gmra.mrb[0].mxu0 %v3171
    %v3569 = vpop.f32.mrb[0].mxu0
    %v3570 = vadd.f32 %v3248, %v3569
    %v3571 = vpop.f32.mrb[0].mxu0
    %v3572 = vadd.f32 %v3252, %v3571
    %v3573 = vpop.f32.mrb[0].mxu0
    %v3574 = vadd.f32 %v3248, %v3573
    %v3575 = vpop.f32.mrb[0].mxu0
    %v3576 = vadd.f32 %v3252, %v3575
    %3577 = vmatprep.mubr.bf16.mxu0 %v3174
    %3578 = vmatmul.mubr.bf16.gmra.mrb[0].mxu0 %v3173
    %v3579 = vpop.f32.mrb[0].mxu0
    %v3580 = vadd.f32 %v3248, %v3579
    %v3581 = vpop.f32.mrb[0].mxu0
    %v3582 = vadd.f32 %v3252, %v3581
    %v3583 = vpop.f32.mrb[0].mxu0
    %v3584 = vadd.f32 %v3248, %v3583
    %v3585 = vpop.f32.mrb[0].mxu0
    %v3586 = vadd.f32 %v3252, %v3585
    %3587 = vmatprep.mubr.bf16.mxu0 %v3176
    %3588 = vmatmul.mubr.bf16.gmra.mrb[0].mxu0 %v3175
    %v3589 = vpop.f32.mrb[0].mxu0
    %v3590 = vadd.f32 %v3248, %v3589
    %v3591 = vpop.f32.mrb[0].mxu0
    %v3592 = vadd.f32 %v3252, %v3591
    %v3593 = vpop.f32.mrb[0].mxu0
    %v3594 = vadd.f32 %v3248, %v3593
    %v3595 = vpop.f32.mrb[0].mxu0
    %v3596 = vadd.f32 %v3252, %v3595
    %3597 = vmatprep.mubr.bf16.mxu0 %v3178
    %3598 = vmatmul.mubr.bf16.gmra.mrb[0].mxu0 %v3177
    %v3599 = vpop.f32.mrb[0].mxu0
    %v3600 = vadd.f32 %v3248, %v3599
    %v3601 = vpop.f32.mrb[0].mxu0
    %v3602 = vadd.f32 %v3252, %v3601
    %v3603 = vpop.f32.mrb[0].mxu0
    %v3604 = vadd.f32 %v3248, %v3603
    %v3605 = vpop.f32.mrb[0].mxu0
    %v3606 = vadd.f32 %v3252, %v3605
    %3607 = vmatprep.mubr.bf16.mxu0 %v3180
    %3608 = vmatmul.mubr.bf16.gmra.mrb[0].mxu0 %v3179
    %v3609 = vpop.f32.mrb[0].mxu0
    %v3610 = vadd.f32 %v3248, %v3609
    %v3611 = vpop.f32.mrb[0].mxu0
    %v3612 = vadd.f32 %v3252, %v3611
    %v3613 = vpop.f32.mrb[0].mxu0
    %v3614 = vadd.f32 %v3248, %v3613
    %v3615 = vpop.f32.mrb[0].mxu0
    %v3616 = vadd.f32 %v3252, %v3615
    %3617 = vmatprep.mubr.bf16.mxu0 %v3182
    %3618 = vmatmul.mubr.bf16.gmra.mrb[0].mxu0 %v3181
    %v3619 = vpop.f32.mrb[0].mxu0
    %v3620 = vadd.f32 %v3248, %v3619
    %v3621 = vpop.f32.mrb[0].mxu0
    %v3622 = vadd.f32 %v3252, %v3621
    %v3623 = vpop.f32.mrb[0].mxu0
    %v3624 = vadd.f32 %v3248, %v3623
    %v3625 = vpop.f32.mrb[0].mxu0
    %v3626 = vadd.f32 %v3252, %v3625
    %3627 = vmatprep.mubr.bf16.mxu0 %v3184
    %3628 = vmatmul.mubr.bf16.gmra.mrb[0].mxu0 %v3183
    %v3629 = vpop.f32.mrb[0].mxu0
    %v3630 = vadd.f32 %v3248, %v3629
    %v3631 = vpop.f32.mrb[0].mxu0
    %v3632 = vadd.f32 %v3252, %v3631
    %v3633 = vpop.f32.mrb[0].mxu0
    %v3634 = vadd.f32 %v3248, %v3633
    %v3635 = vpop.f32.mrb[0].mxu0
    %v3636 = vadd.f32 %v3252, %v3635
    %3637 = vmatprep.mubr.bf16.mxu0 %v3186
    %3638 = vmatmul.mubr.bf16.gmra.mrb[0].mxu0 %v3185
    %v3639 = vpop.f32.mrb[0].mxu0
    %v3640 = vadd.f32 %v3248, %v3639
    %v3641 = vpop.f32.mrb[0].mxu0
    %v3642 = vadd.f32 %v3252, %v3641
    %v3643 = vpop.f32.mrb[0].mxu0
    %v3644 = vadd.f32 %v3248, %v3643
    %v3645 = vpop.f32.mrb[0].mxu0
    %v3646 = vadd.f32 %v3252, %v3645
    %3647 = vmatprep.mubr.bf16.mxu0 %v3188
    %3648 = vmatmul.mubr.bf16.gmra.mrb[0].mxu0 %v3187
    %v3649 = vpop.f32.mrb[0].mxu0
    %v3650 = vadd.f32 %v3248, %v3649
    %v3651 = vpop.f32.mrb[0].mxu0
    %v3652 = vadd.f32 %v3252, %v3651
    %v3653 = vpop.f32.mrb[0].mxu0
    %v3654 = vadd.f32 %v3248, %v3653
    %v3655 = vpop.f32.mrb[0].mxu0
    %v3656 = vadd.f32 %v3252, %v3655
    %3657 = vmatprep.mubr.bf16.mxu0 %v3190
    %3658 = vmatmul.mubr.bf16.gmra.mrb[0].mxu0 %v3189
    %v3659 = vpop.f32.mrb[0].mxu0
    %v3660 = vadd.f32 %v3248, %v3659
    %v3661 = vpop.f32.mrb[0].mxu0
    %v3662 = vadd.f32 %v3252, %v3661
    %v3663 = vpop.f32.mrb[0].mxu0
    %v3664 = vadd.f32 %v3248, %v3663
    %v3665 = vpop.f32.mrb[0].mxu0
    %v3666 = vadd.f32 %v3252, %v3665
    %3667 = vmatprep.mubr.bf16.mxu0 %v3192
    %3668 = vmatmul.mubr.bf16.gmra.mrb[0].mxu0 %v3191
    %v3669 = vpop.f32.mrb[0].mxu0
    %v3670 = vadd.f32 %v3248, %v3669
    %v3671 = vpop.f32.mrb[0].mxu0
    %v3672 = vadd.f32 %v3252, %v3671
    %v3673 = vpop.f32.mrb[0].mxu0
    %v3674 = vadd.f32 %v3248, %v3673
    %v3675 = vpop.f32.mrb[0].mxu0
    %v3676 = vadd.f32 %v3252, %v3675
    %3677 = vmatprep.mubr.bf16.mxu0 %v3194
    %3678 = vmatmul.mubr.bf16.gmra.mrb[0].mxu0 %v3193
    %v3679 = vpop.f32.mrb[0].mxu0
    %v3680 = vadd.f32 %v3248, %v3679
    %v3681 = vpop.f32.mrb[0].mxu0
    %v3682 = vadd.f32 %v3252, %v3681
    %v3683 = vpop.f32.mrb[0].mxu0
    %v3684 = vadd.f32 %v3248, %v3683
    %v3685 = vpop.f32.mrb[0].mxu0
    %v3686 = vadd.f32 %v3252, %v3685
    %3687 = vmatprep.mubr.bf16.mxu0 %v3196
    %3688 = vmatmul.mubr.bf16.gmra.mrb[0].mxu0 %v3195
    %v3689 = vpop.f32.mrb[0].mxu0
    %v3690 = vadd.f32 %v3248, %v3689
    %v3691 = vpop.f32.mrb[0].mxu0
    %v3692 = vadd.f32 %v3252, %v3691
    %v3693 = vpop.f32.mrb[0].mxu0
    %v3694 = vadd.f32 %v3248, %v3693
    %v3695 = vpop.f32.mrb[0].mxu0
    %v3696 = vadd.f32 %v3252, %v3695
    %3697 = vmatprep.mubr.bf16.mxu0 %v3198
    %3698 = vmatmul.mubr.bf16.gmra.mrb[0].mxu0 %v3197
    %v3699 = vpop.f32.mrb[0].mxu0
    %v3700 = vadd.f32 %v3248, %v3699
    %v3701 = vpop.f32.mrb[0].mxu0
    %v3702 = vadd.f32 %v3252, %v3701
    %v3703 = vpop.f32.mrb[0].mxu0
    %v3704 = vadd.f32 %v3248, %v3703
    %v3705 = vpop.f32.mrb[0].mxu0
    %v3706 = vadd.f32 %v3252, %v3705
    %3707 = vmatprep.mubr.bf16.mxu0 %v3200
    %3708 = vmatmul.mubr.bf16.gmra.mrb[0].mxu0 %v3199
    %v3709 = vpop.f32.mrb[0].mxu0
    %v3710 = vadd.f32 %v3248, %v3709
    %v3711 = vpop.f32.mrb[0].mxu0
    %v3712 = vadd.f32 %v3252, %v3711
    %v3713 = vpop.f32.mrb[0].mxu0
    %v3714 = vadd.f32 %v3248, %v3713
    %v3715 = vpop.f32.mrb[0].mxu0
    %v3716 = vadd.f32 %v3252, %v3715
    %3717 = vmatprep.mubr.bf16.mxu0 %v3202
    %3718 = vmatmul.mubr.bf16.gmra.mrb[0].mxu0 %v3201
    %v3719 = vpop.f32.mrb[0].mxu0
    %v3720 = vadd.f32 %v3248, %v3719
    %v3721 = vpop.f32.mrb[0].mxu0
    %v3722 = vadd.f32 %v3252, %v3721
    %v3723 = vpop.f32.mrb[0].mxu0
    %v3724 = vadd.f32 %v3248, %v3723
    %v3725 = vpop.f32.mrb[0].mxu0
    %v3726 = vadd.f32 %v3252, %v3725
    %3727 = vmatprep.mubr.bf16.mxu0 %v3204
    %3728 = vmatmul.mubr.bf16.gmra.mrb[0].mxu0 %v3203
    %v3729 = vpop.f32.mrb[0].mxu0
    %v3730 = vadd.f32 %v3248, %v3729
    %v3731 = vpop.f32.mrb[0].mxu0
    %v3732 = vadd.f32 %v3252, %v3731
    %v3733 = vpop.f32.mrb[0].mxu0
    %v3734 = vadd.f32 %v3248, %v3733
    %v3735 = vpop.f32.mrb[0].mxu0
    %v3736 = vadd.f32 %v3252, %v3735
    %3737 = vmatprep.mubr.bf16.mxu0 %v3206
    %3738 = vmatmul.mubr.bf16.gmra.mrb[0].mxu0 %v3205
    %v3739 = vpop.f32.mrb[0].mxu0
    %v3740 = vadd.f32 %v3248, %v3739
    %v3741 = vpop.f32.mrb[0].mxu0
    %v3742 = vadd.f32 %v3252, %v3741
    %v3743 = vpop.f32.mrb[0].mxu0
    %v3744 = vadd.f32 %v3248, %v3743
    %v3745 = vpop.f32.mrb[0].mxu0
    %v3746 = vadd.f32 %v3252, %v3745
    %3747 = vmatprep.mubr.bf16.mxu0 %v3208
    %3748 = vmatmul.mubr.bf16.gmra.mrb[0].mxu0 %v3207
    %v3749 = vpop.f32.mrb[0].mxu0
    %v3750 = vadd.f32 %v3248, %v3749
    %v3751 = vpop.f32.mrb[0].mxu0
    %v3752 = vadd.f32 %v3252, %v3751
    %v3753 = vpop.f32.mrb[0].mxu0
    %v3754 = vadd.f32 %v3248, %v3753
    %v3755 = vpop.f32.mrb[0].mxu0
    %v3756 = vadd.f32 %v3252, %v3755
    %3757 = vmatprep.mubr.bf16.mxu0 %v3210
    %3758 = vmatmul.mubr.bf16.gmra.mrb[0].mxu0 %v3209
    %v3759 = vpop.f32.mrb[0].mxu0
    %v3760 = vadd.f32 %v3248, %v3759
    %v3761 = vpop.f32.mrb[0].mxu0
    %v3762 = vadd.f32 %v3252, %v3761
    %v3763 = vpop.f32.mrb[0].mxu0
    %v3764 = vadd.f32 %v3248, %v3763
    %v3765 = vpop.f32.mrb[0].mxu0
    %v3766 = vadd.f32 %v3252, %v3765
    %3767 = vdwg.mxu0
    %v3768 = vtanh.pop %v3450
    %v3769 = vtanh.pop %v3452
    %v3770 = vtanh.pop %v3454
    %v3771 = vtanh.pop %v3456
    %v3772 = vtanh.pop %v3460
    %v3773 = vtanh.pop %v3462
    %v3774 = vtanh.pop %v3464
    %v3775 = vtanh.pop %v3466
    %v3776 = vtanh.pop %v3470
    %v3777 = vtanh.pop %v3472
    %v3778 = vtanh.pop %v3474
    %v3779 = vtanh.pop %v3476
    %v3780 = vtanh.pop %v3480
    %v3781 = vtanh.pop %v3482
    %v3782 = vtanh.pop %v3484
    %v3783 = vtanh.pop %v3486
    %v3784 = vtanh.pop %v3490
    %v3785 = vtanh.pop %v3492
    %v3786 = vtanh.pop %v3494
    %v3787 = vtanh.pop %v3496
    %v3788 = vtanh.pop %v3500
    %v3789 = vtanh.pop %v3502
    %v3790 = vtanh.pop %v3504
    %v3791 = vtanh.pop %v3506
    %v3792 = vtanh.pop %v3510
    %v3793 = vtanh.pop %v3512
    %v3794 = vtanh.pop %v3514
    %v3795 = vtanh.pop %v3516
    %v3796 = vtanh.pop %v3520
    %v3797 = vtanh.pop %v3522
    %v3798 = vtanh.pop %v3524
    %v3799 = vtanh.pop %v3526
    %v3800 = vtanh.pop %v3530
    %v3801 = vtanh.pop %v3532
    %v3802 = vtanh.pop %v3534
    %v3803 = vtanh.pop %v3536
    %v3804 = vtanh.pop %v3540
    %v3805 = vtanh.pop %v3542
    %v3806 = vtanh.pop %v3544
    %v3807 = vtanh.pop %v3546
    %v3808 = vtanh.pop %v3550
    %v3809 = vtanh.pop %v3552
    %v3810 = vtanh.pop %v3554
    %v3811 = vtanh.pop %v3556
    %v3812 = vtanh.pop %v3560
    %v3813 = vtanh.pop %v3562
    %v3814 = vtanh.pop %v3564
    %v3815 = vtanh.pop %v3566
    %v3816 = vtanh.pop %v3570
    %v3817 = vtanh.pop %v3572
    %v3818 = vtanh.pop %v3574
    %v3819 = vtanh.pop %v3576
    %v3820 = vtanh.pop %v3580
    %v3821 = vtanh.pop %v3582
    %v3822 = vtanh.pop %v3584
    %v3823 = vtanh.pop %v3586
    %v3824 = vtanh.pop %v3590
    %v3825 = vtanh.pop %v3592
    %v3826 = vtanh.pop %v3594
    %v3827 = vtanh.pop %v3596
    %v3828 = vtanh.pop %v3600
    %v3829 = vtanh.pop %v3602
    %v3830 = vtanh.pop %v3604
    %v3831 = vtanh.pop %v3606
    %v3832 = vtanh.pop %v3610
    %v3833 = vtanh.pop %v3612
    %v3834 = vtanh.pop %v3614
    %v3835 = vtanh.pop %v3616
    %v3836 = vtanh.pop %v3620
    %v3837 = vtanh.pop %v3622
    %v3838 = vtanh.pop %v3624
    %v3839 = vtanh.pop %v3626
    %v3840 = vtanh.pop %v3630
    %v3841 = vtanh.pop %v3632
    %v3842 = vtanh.pop %v3634
    %v3843 = vtanh.pop %v3636
    %v3844 = vtanh.pop %v3640
    %v3845 = vtanh.pop %v3642
    %v3846 = vtanh.pop %v3644
    %v3847 = vtanh.pop %v3646
    %v3848 = vtanh.pop %v3650
    %v3849 = vtanh.pop %v3652
    %v3850 = vtanh.pop %v3654
    %v3851 = vtanh.pop %v3656
    %v3852 = vtanh.pop %v3660
    %v3853 = vtanh.pop %v3662
    %v3854 = vtanh.pop %v3664
    %v3855 = vtanh.pop %v3666
    %v3856 = vtanh.pop %v3670
    %v3857 = vtanh.pop %v3672
    %v3858 = vtanh.pop %v3674
    %v3859 = vtanh.pop %v3676
    %v3860 = vtanh.pop %v3680
    %v3861 = vtanh.pop %v3682
    %v3862 = vtanh.pop %v3684
    %v3863 = vtanh.pop %v3686
    %v3864 = vtanh.pop %v3690
    %v3865 = vtanh.pop %v3692
    %v3866 = vtanh.pop %v3694
    %v3867 = vtanh.pop %v3696
    %v3868 = vtanh.pop %v3700
    %v3869 = vtanh.pop %v3702
    %v3870 = vtanh.pop %v3704
    %v3871 = vtanh.pop %v3706
    %v3872 = vtanh.pop %v3710
    %v3873 = vtanh.pop %v3712
    %v3874 = vtanh.pop %v3714
    %v3875 = vtanh.pop %v3716
    %v3876 = vtanh.pop %v3720
    %v3877 = vtanh.pop %v3722
    %v3878 = vtanh.pop %v3724
    %v3879 = vtanh.pop %v3726
    %v3880 = vtanh.pop %v3730
    %v3881 = vtanh.pop %v3732
    %v3882 = vtanh.pop %v3734
    %v3883 = vtanh.pop %v3736
    %v3884 = vtanh.pop %v3740
    %v3885 = vtanh.pop %v3742
    %v3886 = vtanh.pop %v3744
    %v3887 = vtanh.pop %v3746
    %v3888 = vtanh.pop %v3750
    %v3889 = vtanh.pop %v3752
    %v3890 = vtanh.pop %v3754
    %v3891 = vtanh.pop %v3756
    %v3892 = vtanh.pop %v3760
    %v3893 = vtanh.pop %v3762
    %v3894 = vtanh.pop %v3764
    %v3895 = vtanh.pop %v3766
    %3896 = vst [vmem:[#allocation10] sm:$0xff] %v3768
    %3897 = vst [vmem:[#allocation10 + $0x8] sm:$0xff] %v3769
    %3898 = vst [vmem:[#allocation10 + $0x10] sm:$0xff] %v3770
    %3899 = vst [vmem:[#allocation10 + $0x18] sm:$0xff] %v3771
    %3900 = vst [vmem:[#allocation10 + $0x20] sm:$0xff] %v3772
    %3901 = vst [vmem:[#allocation10 + $0x28] sm:$0xff] %v3773
    %3902 = vst [vmem:[#allocation10 + $0x30] sm:$0xff] %v3774
    %3903 = vst [vmem:[#allocation10 + $0x38] sm:$0xff] %v3775
    %3904 = vst [vmem:[#allocation10 + $0x40] sm:$0xff] %v3776
    %3905 = vst [vmem:[#allocation10 + $0x48] sm:$0xff] %v3777
    %3906 = vst [vmem:[#allocation10 + $0x50] sm:$0xff] %v3778
    %3907 = vst [vmem:[#allocation10 + $0x58] sm:$0xff] %v3779
    %3908 = vst [vmem:[#allocation10 + $0x60] sm:$0xff] %v3780
    %3909 = vst [vmem:[#allocation10 + $0x68] sm:$0xff] %v3781
    %3910 = vst [vmem:[#allocation10 + $0x70] sm:$0xff] %v3782
    %3911 = vst [vmem:[#allocation10 + $0x78] sm:$0xff] %v3783
    %3912 = vst [vmem:[#allocation10 + $0x80] sm:$0xff] %v3784
    %3913 = vst [vmem:[#allocation10 + $0x88] sm:$0xff] %v3785
    %3914 = vst [vmem:[#allocation10 + $0x90] sm:$0xff] %v3786
    %3915 = vst [vmem:[#allocation10 + $0x98] sm:$0xff] %v3787
    %3916 = vst [vmem:[#allocation10 + $0xa0] sm:$0xff] %v3788
    %3917 = vst [vmem:[#allocation10 + $0xa8] sm:$0xff] %v3789
    %3918 = vst [vmem:[#allocation10 + $0xb0] sm:$0xff] %v3790
    %3919 = vst [vmem:[#allocation10 + $0xb8] sm:$0xff] %v3791
    %3920 = vst [vmem:[#allocation10 + $0xc0] sm:$0xff] %v3792
    %3921 = vst [vmem:[#allocation10 + $0xc8] sm:$0xff] %v3793
    %3922 = vst [vmem:[#allocation10 + $0xd0] sm:$0xff] %v3794
    %3923 = vst [vmem:[#allocation10 + $0xd8] sm:$0xff] %v3795
    %3924 = vst [vmem:[#allocation10 + $0xe0] sm:$0xff] %v3796
    %3925 = vst [vmem:[#allocation10 + $0xe8] sm:$0xff] %v3797
    %3926 = vst [vmem:[#allocation10 + $0xf0] sm:$0xff] %v3798
    %3927 = vst [vmem:[#allocation10 + $0xf8] sm:$0xff] %v3799
    %3928 = vst [vmem:[#allocation10 + $0x100] sm:$0xff] %v3800
    %3929 = vst [vmem:[#allocation10 + $0x108] sm:$0xff] %v3801
    %3930 = vst [vmem:[#allocation10 + $0x110] sm:$0xff] %v3802
    %3931 = vst [vmem:[#allocation10 + $0x118] sm:$0xff] %v3803
    %3932 = vst [vmem:[#allocation10 + $0x120] sm:$0xff] %v3804
    %3933 = vst [vmem:[#allocation10 + $0x128] sm:$0xff] %v3805
    %3934 = vst [vmem:[#allocation10 + $0x130] sm:$0xff] %v3806
    %3935 = vst [vmem:[#allocation10 + $0x138] sm:$0xff] %v3807
    %3936 = vst [vmem:[#allocation10 + $0x140] sm:$0xff] %v3808
    %3937 = vst [vmem:[#allocation10 + $0x148] sm:$0xff] %v3809
    %3938 = vst [vmem:[#allocation10 + $0x150] sm:$0xff] %v3810
    %3939 = vst [vmem:[#allocation10 + $0x158] sm:$0xff] %v3811
    %3940 = vst [vmem:[#allocation10 + $0x160] sm:$0xff] %v3812
    %3941 = vst [vmem:[#allocation10 + $0x168] sm:$0xff] %v3813
    %3942 = vst [vmem:[#allocation10 + $0x170] sm:$0xff] %v3814
    %3943 = vst [vmem:[#allocation10 + $0x178] sm:$0xff] %v3815
    %3944 = vst [vmem:[#allocation10 + $0x180] sm:$0xff] %v3816
    %3945 = vst [vmem:[#allocation10 + $0x188] sm:$0xff] %v3817
    %3946 = vst [vmem:[#allocation10 + $0x190] sm:$0xff] %v3818
    %3947 = vst [vmem:[#allocation10 + $0x198] sm:$0xff] %v3819
    %3948 = vst [vmem:[#allocation10 + $0x1a0] sm:$0xff] %v3820
    %3949 = vst [vmem:[#allocation10 + $0x1a8] sm:$0xff] %v3821
    %3950 = vst [vmem:[#allocation10 + $0x1b0] sm:$0xff] %v3822
    %3951 = vst [vmem:[#allocation10 + $0x1b8] sm:$0xff] %v3823
    %3952 = vst [vmem:[#allocation10 + $0x1c0] sm:$0xff] %v3824
    %3953 = vst [vmem:[#allocation10 + $0x1c8] sm:$0xff] %v3825
    %3954 = vst [vmem:[#allocation10 + $0x1d0] sm:$0xff] %v3826
    %3955 = vst [vmem:[#allocation10 + $0x1d8] sm:$0xff] %v3827
    %3956 = vst [vmem:[#allocation10 + $0x1e0] sm:$0xff] %v3828
    %3957 = vst [vmem:[#allocation10 + $0x1e8] sm:$0xff] %v3829
    %3958 = vst [vmem:[#allocation10 + $0x1f0] sm:$0xff] %v3830
    %3959 = vst [vmem:[#allocation10 + $0x1f8] sm:$0xff] %v3831
    %3960 = vst [vmem:[#allocation10 + $0x200] sm:$0xff] %v3832
    %3961 = vst [vmem:[#allocation10 + $0x208] sm:$0xff] %v3833
    %3962 = vst [vmem:[#allocation10 + $0x210] sm:$0xff] %v3834
    %3963 = vst [vmem:[#allocation10 + $0x218] sm:$0xff] %v3835
    %3964 = vst [vmem:[#allocation10 + $0x220] sm:$0xff] %v3836
    %3965 = vst [vmem:[#allocation10 + $0x228] sm:$0xff] %v3837
    %3966 = vst [vmem:[#allocation10 + $0x230] sm:$0xff] %v3838
    %3967 = vst [vmem:[#allocation10 + $0x238] sm:$0xff] %v3839
    %3968 = vst [vmem:[#allocation10 + $0x240] sm:$0xff] %v3840
    %3969 = vst [vmem:[#allocation10 + $0x248] sm:$0xff] %v3841
    %3970 = vst [vmem:[#allocation10 + $0x250] sm:$0xff] %v3842
    %3971 = vst [vmem:[#allocation10 + $0x258] sm:$0xff] %v3843
    %3972 = vst [vmem:[#allocation10 + $0x260] sm:$0xff] %v3844
    %3973 = vst [vmem:[#allocation10 + $0x268] sm:$0xff] %v3845
    %3974 = vst [vmem:[#allocation10 + $0x270] sm:$0xff] %v3846
    %3975 = vst [vmem:[#allocation10 + $0x278] sm:$0xff] %v3847
    %3976 = vst [vmem:[#allocation10 + $0x280] sm:$0xff] %v3848
    %3977 = vst [vmem:[#allocation10 + $0x288] sm:$0xff] %v3849
    %3978 = vst [vmem:[#allocation10 + $0x290] sm:$0xff] %v3850
    %3979 = vst [vmem:[#allocation10 + $0x298] sm:$0xff] %v3851
    %3980 = vst [vmem:[#allocation10 + $0x2a0] sm:$0xff] %v3852
    %3981 = vst [vmem:[#allocation10 + $0x2a8] sm:$0xff] %v3853
    %3982 = vst [vmem:[#allocation10 + $0x2b0] sm:$0xff] %v3854
    %3983 = vst [vmem:[#allocation10 + $0x2b8] sm:$0xff] %v3855
    %3984 = vst [vmem:[#allocation10 + $0x2c0] sm:$0xff] %v3856
    %3985 = vst [vmem:[#allocation10 + $0x2c8] sm:$0xff] %v3857
    %3986 = vst [vmem:[#allocation10 + $0x2d0] sm:$0xff] %v3858
    %3987 = vst [vmem:[#allocation10 + $0x2d8] sm:$0xff] %v3859
    %3988 = vst [vmem:[#allocation10 + $0x2e0] sm:$0xff] %v3860
    %3989 = vst [vmem:[#allocation10 + $0x2e8] sm:$0xff] %v3861
    %3990 = vst [vmem:[#allocation10 + $0x2f0] sm:$0xff] %v3862
    %3991 = vst [vmem:[#allocation10 + $0x2f8] sm:$0xff] %v3863
    %3992 = vst [vmem:[#allocation10 + $0x300] sm:$0xff] %v3864
    %3993 = vst [vmem:[#allocation10 + $0x308] sm:$0xff] %v3865
    %3994 = vst [vmem:[#allocation10 + $0x310] sm:$0xff] %v3866
    %3995 = vst [vmem:[#allocation10 + $0x318] sm:$0xff] %v3867
    %3996 = vst [vmem:[#allocation10 + $0x320] sm:$0xff] %v3868
    %3997 = vst [vmem:[#allocation10 + $0x328] sm:$0xff] %v3869
    %3998 = vst [vmem:[#allocation10 + $0x330] sm:$0xff] %v3870
    %3999 = vst [vmem:[#allocation10 + $0x338] sm:$0xff] %v3871
    %4000 = vst [vmem:[#allocation10 + $0x340] sm:$0xff] %v3872
    %4001 = vst [vmem:[#allocation10 + $0x348] sm:$0xff] %v3873
    %4002 = vst [vmem:[#allocation10 + $0x350] sm:$0xff] %v3874
    %4003 = vst [vmem:[#allocation10 + $0x358] sm:$0xff] %v3875
    %4004 = vst [vmem:[#allocation10 + $0x360] sm:$0xff] %v3876
    %4005 = vst [vmem:[#allocation10 + $0x368] sm:$0xff] %v3877
    %4006 = vst [vmem:[#allocation10 + $0x370] sm:$0xff] %v3878
    %4007 = vst [vmem:[#allocation10 + $0x378] sm:$0xff] %v3879
    %4008 = vst [vmem:[#allocation10 + $0x380] sm:$0xff] %v3880
    %4009 = vst [vmem:[#allocation10 + $0x388] sm:$0xff] %v3881
    %4010 = vst [vmem:[#allocation10 + $0x390] sm:$0xff] %v3882
    %4011 = vst [vmem:[#allocation10 + $0x398] sm:$0xff] %v3883
    %4012 = vst [vmem:[#allocation10 + $0x3a0] sm:$0xff] %v3884
    %4013 = vst [vmem:[#allocation10 + $0x3a8] sm:$0xff] %v3885
    %4014 = vst [vmem:[#allocation10 + $0x3b0] sm:$0xff] %v3886
    %4015 = vst [vmem:[#allocation10 + $0x3b8] sm:$0xff] %v3887
    %4016 = vst [vmem:[#allocation10 + $0x3c0] sm:$0xff] %v3888
    %4017 = vst [vmem:[#allocation10 + $0x3c8] sm:$0xff] %v3889
    %4018 = vst [vmem:[#allocation10 + $0x3d0] sm:$0xff] %v3890
    %4019 = vst [vmem:[#allocation10 + $0x3d8] sm:$0xff] %v3891
    %4020 = vst [vmem:[#allocation10 + $0x3e0] sm:$0xff] %v3892
    %4021 = vst [vmem:[#allocation10 + $0x3e8] sm:$0xff] %v3893
    %4022 = vst [vmem:[#allocation10 + $0x3f0] sm:$0xff] %v3894
    %4023 = vst [vmem:[#allocation10 + $0x3f8] sm:$0xff] %v3895
    // Predicated region
    $region62: #{tpu_custom_call.1} parent=1 // pred_check
      _
    $region63: #{tpu_custom_call.1} parent=1 // pred_check_branch
      %4025 = sbr.rel (0) target = $region65
    $region64: #{tpu_custom_call.1} parent=1 // pred_region
      %s4027 = ssub.s32 16384, 16384
      %4028 = vsyncadd [#allocation4], %s4027
      %s4029 = sshll.u32 [#allocation10], 4
      %s4030 = int_to_ptr.vmem [resolvable:$true] %s4029
      %4035 = dma.vmem_to_hbm [thread:$0]  %s4030, 16384, %s11, [#allocation4], 256, 256, 16
    $region65: #{tpu_custom_call.1} parent=1 // pred_fallthru
      _
    // Predicated region
    $region66: #{tpu_custom_call.1} parent=1 // pred_check
      _
    $region67: #{tpu_custom_call.1} parent=1 // pred_check_branch
      %4037 = sbr.rel (0) target = $region69
    $region68: #{tpu_custom_call.1} parent=1 // pred_region
      %4038 = dma.done [#allocation4], 16384
    $region69: #{tpu_custom_call.1} parent=1 // pred_fallthru
      _
    %4039 = vsyncpa [#allocation3], 1
    %4040 = vsyncpa [#allocation6], 1
    %4041 = vsyncpa [#allocation9], 1
    %4042 = vsyncpa [#allocation4], 1

</llo_original>
